<compile_context>
chip_gen: v7x
topology: tpu7x:2x2x1
jax: 0.10.0
libtpu: 0.0.40
codegen_flags: <defaults>
</compile_context>

<pallas_src>
import functools

import jax
import jax.numpy as jnp
from jax.experimental import pallas as pl
from jax.experimental.pallas import tpu as pltpu

LANE = 128


def _round_up(x, m):
    return (x + m - 1) // m * m


def _pooled_linear_kernel(x_ref, w_ref, b_ref, o_ref, acc_ref, *, d_real):
    """Masked running-max over the points axis + lane-dense linear layer.

    x_ref  : (TB, TN, DP) f32  zero-padded points tile
    w_ref  : (DP, CP)     f32  zero-padded W^T
    b_ref  : (1, CP)      f32  zero-padded bias
    o_ref  : (TB, CP)     f32
    acc_ref: (TB, DP)     f32  running-max accumulator (VMEM scratch)
    """
    k = pl.program_id(1)

    @pl.when(k == 0)
    def _():
        acc_ref[...] = jnp.full(acc_ref.shape, -jnp.inf, dtype=acc_ref.dtype)

    x = x_ref[...]                                            # (TB, TN, DP)
    # compute_masked_max(points, dims=-2, t_mask=True):
    # TODO(synk): `compute_masked_max` source not provided; assuming padding rows
    #             are identified by being all-zero along the feature axis.
    row_valid = jnp.any(x != 0.0, axis=-1, keepdims=True)     # (TB, TN, 1)
    x_masked = jnp.where(row_valid, x, -jnp.inf)
    acc_ref[...] = jnp.maximum(acc_ref[...], jnp.max(x_masked, axis=1))

    @pl.when(k == pl.num_programs(1) - 1)
    def _():
        pooled = acc_ref[...]                                 # (TB, DP)
        # Zero padded feature lanes (they hold 0 or -inf) so the zero-padded
        # rows of W never yield -inf * 0 = NaN in the contraction.
        lane = jax.lax.broadcasted_iota(jnp.int32, pooled.shape, 1)
        pooled = jnp.where(lane < d_real, pooled, 0.0)
        y = jnp.dot(pooled, w_ref[...], preferred_element_type=jnp.float32)
        o_ref[...] = y + b_ref[...]


def _linear_kernel(x_ref, w_ref, b_ref, o_ref):
    """2-D path: plain lane-dense linear layer (no pooling, no masking)."""
    o_ref[...] = (
        jnp.dot(x_ref[...], w_ref[...], preferred_element_type=jnp.float32)
        + b_ref[...]
    )


def _pad_params(weight, bias, dp, cp):
    n_classes, d = weight.shape
    w_pad = jnp.zeros((dp, cp), jnp.float32).at[:d, :n_classes].set(
        weight.T.astype(jnp.float32))
    b_pad = jnp.zeros((1, cp), jnp.float32).at[:, :n_classes].set(
        bias.astype(jnp.float32))
    return w_pad, b_pad


def max_classifier_forward(points, weight, bias):
    """points: (B, N, d) or (B, d); weight: (n_classes, d); bias: (n_classes,)."""
    n_classes, d = weight.shape
    dp = _round_up(d, LANE)           # lane-dense feature width
    cp = _round_up(n_classes, LANE)   # lane-dense class width
    w_pad, b_pad = _pad_params(weight, bias, dp, cp)
    compiler_kwargs = dict(vmem_limit_bytes=32 * 1024 * 1024)

    if points.ndim == 2:
        B = points.shape[0]
        tb = min(256, _round_up(B, 8))
        b_padded = _round_up(B, tb)
        x_pad = jnp.zeros((b_padded, dp), jnp.float32)
        x_pad = x_pad.at[:B, :d].set(points.astype(jnp.float32))

        out = pl.pallas_call(
            _linear_kernel,
            out_shape=jax.ShapeDtypeStruct((b_padded, cp), jnp.float32),
            grid=(b_padded // tb,),
            in_specs=[
                pl.BlockSpec((tb, dp), lambda b: (b, 0)),
                pl.BlockSpec((dp, cp), lambda b: (0, 0)),
                pl.BlockSpec((1, cp), lambda b: (0, 0)),
            ],
            out_specs=pl.BlockSpec((tb, cp), lambda b: (b, 0)),
            compiler_params=pltpu.CompilerParams(
                dimension_semantics=("parallel",), **compiler_kwargs),
        )(x_pad, w_pad, b_pad)
        return out[:B, :n_classes]

    B, N, _ = points.shape
    tb = min(128, _round_up(B, 8))
    # Cap the f32 x-tile at ~8 MiB so double-buffering fits v7x's smaller VMEM.
    max_tile_elems = (8 * 1024 * 1024) // 4
    tn_cap = max(8, (max_tile_elems // (tb * dp)) // 8 * 8)
    tn = min(_round_up(N, 8), min(256, tn_cap))
    b_padded = _round_up(B, tb)
    n_padded = _round_up(N, tn)

    x_pad = jnp.zeros((b_padded, n_padded, dp), jnp.float32)
    x_pad = x_pad.at[:B, :N, :d].set(points.astype(jnp.float32))

    kernel = functools.partial(_pooled_linear_kernel, d_real=d)
    out = pl.pallas_call(
        kernel,
        out_shape=jax.ShapeDtypeStruct((b_padded, cp), jnp.float32),
        grid=(b_padded // tb, n_padded // tn),
        in_specs=[
            pl.BlockSpec((tb, tn, dp), lambda b, k: (b, k, 0)),
            pl.BlockSpec((dp, cp), lambda b, k: (0, 0)),
            pl.BlockSpec((1, cp), lambda b, k: (0, 0)),
        ],
        out_specs=pl.BlockSpec((tb, cp), lambda b, k: (b, 0)),
        scratch_shapes=[pltpu.VMEM((tb, dp), jnp.float32)],
        compiler_params=pltpu.CompilerParams(
            dimension_semantics=("parallel", "arbitrary"), **compiler_kwargs),
    )(x_pad, w_pad, b_pad)
    return out[:B, :n_classes]


if __name__ == "__main__":
    # Module config: MaxClassifier(n_classes=10, d=2)
    n_classes, d = 10, 2
    B, N = 5, 300   # intentionally not tile-aligned to exercise padding paths

    key = jax.random.PRNGKey(0)
    k_x, k_w, k_b, k_x2 = jax.random.split(key, 4)

    points = jax.random.normal(k_x, (B, N, d), dtype=jnp.float32)
    # Zero out trailing points per set (padding rows) to exercise the mask.
    n_valid = jnp.arange(B) * 37 + 100                # per-set valid lengths < N
    valid_mask = (jnp.arange(N)[None, :] < n_valid[:, None])[..., None]
    points = jnp.where(valid_mask, points, 0.0)

    # Deterministic init matching nn.Linear(d, n_classes) shapes.
    bound = 1.0 / (d ** 0.5)
    weight = jax.random.uniform(k_w, (n_classes, d), jnp.float32, -bound, bound)
    bias = jax.random.uniform(k_b, (n_classes,), jnp.float32, -bound, bound)

    out = jax.block_until_ready(max_classifier_forward(points, weight, bias))

    # Reference (masked max over axis -2, then linear) in plain JAX.
    row_valid = jnp.any(points != 0.0, axis=-1, keepdims=True)
    pooled_ref = jnp.max(jnp.where(row_valid, points, -jnp.inf), axis=1)
    ref = pooled_ref @ weight.T + bias
    assert out.shape == (B, n_classes)
    assert jnp.allclose(out, ref, atol=1e-5, rtol=1e-5)

    # 2-D path (no pooling in the module): plain linear.
    points2d = jax.random.normal(k_x2, (3, d), dtype=jnp.float32)
    out2d = jax.block_until_ready(max_classifier_forward(points2d, weight, bias))
    ref2d = points2d @ weight.T + bias
    assert out2d.shape == (3, n_classes)
    assert jnp.allclose(out2d, ref2d, atol=1e-5, rtol=1e-5)

    print("KERNEL_OK")
</pallas_src>

<mosaic_0001>
module attributes {stable_mosaic.version = 11 : i64} {
  func.func @_pooled_linear_kernel(%arg0: i32, %arg1: i32, %arg2: memref<8x256x128xf32, #tpu.memory_space<vmem>>, %arg3: memref<128x128xf32, #tpu.memory_space<vmem>>, %arg4: memref<1x128xf32, #tpu.memory_space<vmem>>, %arg5: memref<8x128xf32, #tpu.memory_space<vmem>>, %arg6: memref<8x128xf32, #tpu.memory_space<vmem>>) attributes {dimension_semantics = [#tpu.dimension_semantics<parallel>, #tpu.dimension_semantics<arbitrary>], iteration_bounds = array<i64: 1, 2>, scalar_prefetch = 0 : i64, scratch_operands = 1 : i64, tpu.core_type = #tpu.core_type<tc>, window_params = [{transform_indices = @transform_0, window_bounds = array<i64: 8, 256, 128>}, {pipeline_mode = #tpu.pipeline_mode<synchronous>, transform_indices = @transform_1, window_bounds = array<i64: 128, 128>}, {pipeline_mode = #tpu.pipeline_mode<synchronous>, transform_indices = @transform_2, window_bounds = array<i64: 1, 128>}, {transform_indices = @transform_3, window_bounds = array<i64: 8, 128>}]} {
    %c0_i32 = arith.constant 0 : i32
    %0 = arith.cmpi eq, %arg1, %c0_i32 : i32
    %1 = arith.extui %0 : i1 to i32
    %c0_i32_0 = arith.constant 0 : i32
    %2 = arith.cmpi ne, %1, %c0_i32_0 : i32
    scf.if %2 {
      %cst_14 = arith.constant 0xFF800000 : f32
      %24 = vector.broadcast %cst_14 : f32 to vector<8x128xf32>
      %c0_15 = arith.constant 0 : index
      %c0_16 = arith.constant 0 : index
      %25 = vector.load %arg6[%c0_15, %c0_16] : memref<8x128xf32, #tpu.memory_space<vmem>>, vector<8x128xf32>
      tpu.vector_store %arg6[%c0_15, %c0_16], %24 {strides = array<i32>} : memref<8x128xf32, #tpu.memory_space<vmem>>, vector<8x128xf32>,
    } else {
    }
    %c0 = arith.constant 0 : index
    %c0_1 = arith.constant 0 : index
    %c0_2 = arith.constant 0 : index
    %3 = vector.load %arg2[%c0, %c0_1, %c0_2] : memref<8x256x128xf32, #tpu.memory_space<vmem>>, vector<8x256x128xf32>
    %cst = arith.constant 0.000000e+00 : f32
    %4 = vector.broadcast %cst : f32 to vector<8x256x128xf32>
    %5 = arith.cmpf one, %3, %4 : vector<8x256x128xf32>
    %cst_3 = arith.constant 1.000000e+00 : f32
    %cst_4 = arith.constant 0.000000e+00 : f32
    %6 = vector.broadcast %cst_3 : f32 to vector<8x256x128xf32>
    %7 = vector.broadcast %cst_4 : f32 to vector<8x256x128xf32>
    %8 = arith.select %5, %6, %7 : vector<8x256x128xi1>, vector<8x256x128xf32>
    %cst_5 = arith.constant dense<0xFF800000> : vector<8x256xf32>
    %9 = vector.multi_reduction <maximumf>, %8, %cst_5 [2] : vector<8x256x128xf32> to vector<8x256xf32>
    %cst_6 = arith.constant 0.000000e+00 : f32
    %10 = vector.broadcast %cst_6 : f32 to vector<8x256xf32>
    %11 = arith.cmpf ogt, %9, %10 : vector<8x256xf32>
    %12 = vector.shape_cast %11 : vector<8x256xi1> to vector<8x256x1xi1>
    %cst_7 = arith.constant 0xFF800000 : f32
    %13 = vector.shape_cast %12 : vector<8x256x1xi1> to vector<8x256x1xi1>
    %14 = vector.broadcast %13 : vector<8x256x1xi1> to vector<8x256x128xi1>
    %15 = vector.broadcast %cst_7 : f32 to vector<8x256x128xf32>
    %16 = arith.select %14, %3, %15 : vector<8x256x128xi1>, vector<8x256x128xf32>
    %c0_8 = arith.constant 0 : index
    %c0_9 = arith.constant 0 : index
    %17 = vector.load %arg6[%c0_8, %c0_9] : memref<8x128xf32, #tpu.memory_space<vmem>>, vector<8x128xf32>
    %cst_10 = arith.constant dense<0xFF800000> : vector<8x128xf32>
    %18 = vector.multi_reduction <maximumf>, %16, %cst_10 [1] : vector<8x256x128xf32> to vector<8x128xf32>
    %19 = arith.maximumf %17, %18 : vector<8x128xf32>
    %c0_11 = arith.constant 0 : index
    %c0_12 = arith.constant 0 : index
    %20 = vector.load %arg6[%c0_11, %c0_12] : memref<8x128xf32, #tpu.memory_space<vmem>>, vector<8x128xf32>
    tpu.vector_store %arg6[%c0_11, %c0_12], %19 {strides = array<i32>} : memref<8x128xf32, #tpu.memory_space<vmem>>, vector<8x128xf32>,
    %c1_i32 = arith.constant 1 : i32
    %21 = arith.cmpi eq, %arg1, %c1_i32 : i32
    %22 = arith.extui %21 : i1 to i32
    %c0_i32_13 = arith.constant 0 : i32
    %23 = arith.cmpi ne, %22, %c0_i32_13 : i32
    scf.if %23 {
      %c0_14 = arith.constant 0 : index
      %c0_15 = arith.constant 0 : index
      %24 = vector.load %arg6[%c0_14, %c0_15] : memref<8x128xf32, #tpu.memory_space<vmem>>, vector<8x128xf32>
      %25 = tpu.iota {dimensions = array<i32: 1>} : vector<8x128xi32>
      %c2_i32 = arith.constant 2 : i32
      %26 = vector.broadcast %c2_i32 : i32 to vector<8x128xi32>
      %27 = arith.cmpi slt, %25, %26 : vector<8x128xi32>
      %cst_16 = arith.constant 0.000000e+00 : f32
      %28 = vector.broadcast %cst_16 : f32 to vector<8x128xf32>
      %29 = arith.select %27, %24, %28 : vector<8x128xi1>, vector<8x128xf32>
      %c0_17 = arith.constant 0 : index
      %c0_18 = arith.constant 0 : index
      %30 = vector.load %arg3[%c0_17, %c0_18] : memref<128x128xf32, #tpu.memory_space<vmem>>, vector<128x128xf32>
      %cst_19 = arith.constant dense<0.000000e+00> : vector<8x128xf32>
      %31 = tpu.matmul %29, %30, %cst_19 {dimension_numbers = #tpu.dot_dimension_numbers<[1], [0], [0], [1], [0, 0, 1, 1], [], []>} : vector<8x128xf32>, vector<128x128xf32>, vector<8x128xf32> -> vector<8x128xf32>
      %c0_20 = arith.constant 0 : index
      %c0_21 = arith.constant 0 : index
      %32 = vector.load %arg4[%c0_20, %c0_21] : memref<1x128xf32, #tpu.memory_space<vmem>>, vector<1x128xf32>
      %33 = vector.broadcast %32 : vector<1x128xf32> to vector<8x128xf32>
      %34 = arith.addf %31, %33 : vector<8x128xf32>
      %c0_22 = arith.constant 0 : index
      %c0_23 = arith.constant 0 : index
      %35 = vector.load %arg5[%c0_22, %c0_23] : memref<8x128xf32, #tpu.memory_space<vmem>>, vector<8x128xf32>
      tpu.vector_store %arg5[%c0_22, %c0_23], %34 {strides = array<i32>} : memref<8x128xf32, #tpu.memory_space<vmem>>, vector<8x128xf32>,
    } else {
    }
    return
  }
  func.func @transform_0(%arg0: i32, %arg1: i32) -> (i32, i32, i32) {
    %c0_i32 = arith.constant 0 : i32
    %c0_i32_0 = arith.constant 0 : i32
    return %arg0, %arg1, %c0_i32 : i32, i32, i32
  }
  func.func @transform_1(%arg0: i32, %arg1: i32) -> (i32, i32) {
    %c0_i32 = arith.constant 0 : i32
    %c0_i32_0 = arith.constant 0 : i32
    %c0_i32_1 = arith.constant 0 : i32
    return %c0_i32, %c0_i32_0 : i32, i32
  }
  func.func @transform_2(%arg0: i32, %arg1: i32) -> (i32, i32) {
    %c0_i32 = arith.constant 0 : i32
    %c0_i32_0 = arith.constant 0 : i32
    %c0_i32_1 = arith.constant 0 : i32
    return %c0_i32, %c0_i32_0 : i32, i32
  }
  func.func @transform_3(%arg0: i32, %arg1: i32) -> (i32, i32) {
    %c0_i32 = arith.constant 0 : i32
    %c0_i32_0 = arith.constant 0 : i32
    return %arg0, %c0_i32 : i32, i32
  }
}

</mosaic_0001>

<llo_original>
// kernel: tpu_custom_call.1
$region0: #{tpu_custom_call.1}
  #allocation0 [shape = 'u32[]', space=smem, size = 0x4, offset = 0x4, fixed_abs, tag = 'smem constant byte address 0x4 - core index']
  #allocation1 [shape = 'u32[144,128]{1,0:T(1,128)}', space=vmem, size = 0x12000, scoped, tag = 'internal scratch']
  #allocation2 [shape = 'f32[8,128]{1,0:T(8,128)}', space=vmem, size = 0x1000, scoped, tag = 'scratch operand']
  #allocation10 [shape = 's32[]', space=sflag, size = 0x4, offset = 0, fixed_abs, tag = 'sflag constant byte address 0x0 - dummy sync flag']
  %s0 = inlined_call_operand.hbm [shape: f32[8,512,128], index: 0, kind: input, shape index: {}]
  %s1 = inlined_call_operand.hbm [shape: f32[128,128], index: 1, kind: input, shape index: {}]
  %s2 = inlined_call_operand.hbm [shape: f32[1,128], index: 2, kind: input, shape index: {}]
  %s3 = inlined_call_operand.hbm [shape: f32[8,128], index: 3, kind: output, shape index: {}]
  %s4 = sld [smem:[#allocation0]]
  $region65: #{tpu_custom_call.1} parent=0
    _
  %s6 = ssub.s32 1, %s4
  %s7 = scalar_select 0, %s6, %s4
  $region1: #{tpu_custom_call.1} parent=0
    #allocation3 [shape = 'u8[2097152]{0}', space=vmem, size = 0x200000, scoped, tag = 'input window, operand 0']
    #allocation4 [shape = 's32[2]{0}', space=sflag, size = 0x8, scoped, tag = 'scoped memory for tpu_custom_call.1']
    #allocation5 [shape = 's32[2]{0}', space=sflag, size = 0x8, scoped, tag = 'scoped memory for tpu_custom_call.1']
    #allocation6 [shape = 'u8[65536]{0}', space=vmem, size = 0x10000, scoped, tag = 'input window, operand 1, single buffered']
    #allocation7 [shape = 's32[1]{0}', space=sflag, size = 0x4, scoped, tag = 'scoped memory for tpu_custom_call.1']
    #allocation8 [shape = 'u8[512]{0}', space=vmem, size = 0x400, scoped, tag = 'input window, operand 2, single buffered']
    #allocation9 [shape = 'u8[4096]{0}', space=vmem, size = 0x1000, scoped, tag = 'output window, operand 0, single buffered']
    %8 = vsyncpa [#allocation4], 0
    %s9 = scalar_lea.sflag [#allocation4], 1
    %10 = vsyncpa %s9, 0
    %11 = vsyncpa [#allocation7], 0
    %12 = vsyncpa [#allocation5], 0
    loop: start=0, step=1, limit=4
    $region2: #{tpu_custom_call.1} parent=1 // loop_pre_header
      _
    $region3: #{tpu_custom_call.1} parent=1 // loop_header
      %s14 = sphi 0, %s18
      %p15 = scmp.ge.s32.totalorder %s14, 4
      %s21 = sphi 0, %s33
      %s22 = sphi 0, %s29
      %s23 = sphi 0, %s21
      %s24 = sphi 0, %s22
      %s25 = sphi 0, %s23
      %s26 = sphi 0, %s24
      %s38 = sphi 0, %s40
      %s41 = sphi 0, %s38
      %s42 = sphi 0, %s41
      %s58 = sphi 0, %s42
      %s62 = sphi 0, %s62
      %s64 = sphi 0, %s62
      %s65 = sphi 0, %s64
      %s79 = sphi 0, %s65
      %s83 = sphi 0, %s83
      %s85 = sphi 0, %s83
      %s86 = sphi 0, %s85
      %s100 = sphi 0, %s86
      %s106 = sphi 0, %s108
      %s109 = sphi 0, %s106
      %s110 = sphi 0, %s109
      %s126 = sphi 0, %s110
    $region4: #{tpu_custom_call.1} parent=1 // loop_header_branch
      %17 = sbr.rel (%p15) target = $region8
    $region5: #{tpu_custom_call.1} parent=1 // loop_body
      %s19 = ssub.s32 %s14, 1
      %s20 = ssub.s32 %s14, 2
      %s27 = sadd.s32 1, %s22
      %p28 = scmp.ge.s32.totalorder %s27, 2
      %s29 = scalar_select %p28, 0, %s27
      %s30 = sadd.s32 1, %s21
      %s31 = scalar_select %p28, %s30, %s21
      %p32 = scmp.ge.s32.totalorder %s31, 1
      %s33 = scalar_select %p32, 0, %s31
      %s34 = ssub.s32 %s21, %s33
      %s35 = ssub.s32 %s22, %s29
      %s36 = sor.u32 %s34, %s35
      %p37 = scmp.eq.s32.totalorder %s36, 0
      %s39 = sadd.s32 %s38, 1
      %s40 = scalar_select %p37, %s38, %s39
      %p43 = pneg %p37
      %p44 = scmp.eq.s32.totalorder %s14, 1
      %p45 = por %p43, %p44
      %p46 = scmp.ne.s32.totalorder %s38, %s41
      %p47 = scmp.eq.s32.totalorder %s14, 0
      %p48 = por %p46, %p47
      %p49 = scmp.ne.s32.totalorder %s38, %s41
      %p50 = scmp.eq.s32.totalorder %s19, 1
      %p51 = por %p49, %p50
      %p52 = scmp.ne.s32.totalorder %s41, %s42
      %p53 = scmp.eq.s32.totalorder %s19, 0
      %p54 = por %p52, %p53
      %p55 = scmp.ne.s32.totalorder %s41, %s42
      %p56 = scmp.eq.s32.totalorder %s20, 1
      %p57 = por %p55, %p56
      %p59 = scmp.ne.s32.totalorder %s42, %s58
      %p60 = scmp.eq.s32.totalorder %s20, 0
      %p61 = por %p59, %p60
      %s63 = sadd.s32 %s62, 1
      %p66 = scmp.eq.s32.totalorder %s14, 1
      %p67 = scmp.ne.s32.totalorder %s62, %s64
      %p68 = scmp.eq.s32.totalorder %s14, 0
      %p69 = por %p67, %p68
      %p70 = scmp.ne.s32.totalorder %s62, %s64
      %p71 = scmp.eq.s32.totalorder %s19, 1
      %p72 = por %p70, %p71
      %p73 = scmp.ne.s32.totalorder %s64, %s65
      %p74 = scmp.eq.s32.totalorder %s19, 0
      %p75 = por %p73, %p74
      %p76 = scmp.ne.s32.totalorder %s64, %s65
      %p77 = scmp.eq.s32.totalorder %s20, 1
      %p78 = por %p76, %p77
      %p80 = scmp.ne.s32.totalorder %s65, %s79
      %p81 = scmp.eq.s32.totalorder %s20, 0
      %p82 = por %p80, %p81
      %s84 = sadd.s32 %s83, 1
      %p87 = scmp.eq.s32.totalorder %s14, 1
      %p88 = scmp.ne.s32.totalorder %s83, %s85
      %p89 = scmp.eq.s32.totalorder %s14, 0
      %p90 = por %p88, %p89
      %p91 = scmp.ne.s32.totalorder %s83, %s85
      %p92 = scmp.eq.s32.totalorder %s19, 1
      %p93 = por %p91, %p92
      %p94 = scmp.ne.s32.totalorder %s85, %s86
      %p95 = scmp.eq.s32.totalorder %s19, 0
      %p96 = por %p94, %p95
      %p97 = scmp.ne.s32.totalorder %s85, %s86
      %p98 = scmp.eq.s32.totalorder %s20, 1
      %p99 = por %p97, %p98
      %p101 = scmp.ne.s32.totalorder %s86, %s100
      %p102 = scmp.eq.s32.totalorder %s20, 0
      %p103 = por %p101, %p102
      %s104 = ssub.s32 %s21, %s33
      %p105 = scmp.eq.s32.totalorder %s104, 0
      %s107 = sadd.s32 %s106, 1
      %s108 = scalar_select %p105, %s106, %s107
      %p111 = pneg %p105
      %p112 = scmp.eq.s32.totalorder %s14, 1
      %p113 = por %p111, %p112
      %p114 = scmp.ne.s32.totalorder %s106, %s109
      %p115 = scmp.eq.s32.totalorder %s14, 0
      %p116 = por %p114, %p115
      %p117 = scmp.ne.s32.totalorder %s106, %s109
      %p118 = scmp.eq.s32.totalorder %s19, 1
      %p119 = por %p117, %p118
      %p120 = scmp.ne.s32.totalorder %s109, %s110
      %p121 = scmp.eq.s32.totalorder %s19, 0
      %p122 = por %p120, %p121
      %p123 = scmp.ne.s32.totalorder %s109, %s110
      %p124 = scmp.eq.s32.totalorder %s20, 1
      %p125 = por %p123, %p124
      %p127 = scmp.ne.s32.totalorder %s110, %s126
      %p128 = scmp.eq.s32.totalorder %s20, 0
      %p129 = por %p127, %p128
      %p130 = scmp.le.s32.totalorder 1, %s14
      %p131 = scmp.lt.s32.totalorder %s14, 3
      %p132 = pnand %p130, %p131
      %p133 = pneg %p132
      // Predicated region
      $region9: #{tpu_custom_call.1} parent=5 // pred_check
        _
      $region10: #{tpu_custom_call.1} parent=5 // pred_check_branch
        %135 = sbr.rel (%p132) target = $region12
      $region11: #{tpu_custom_call.1} parent=5 // pred_region
        %s136 = ssub.s32 %s14, 1
        // Predicated region
        $region13: #{tpu_custom_call.1} parent=11 // pred_check
          %p137 = pneg %p75
        $region14: #{tpu_custom_call.1} parent=11 // pred_check_branch
          %139 = sbr.rel (%p137) target = $region16
        $region15: #{tpu_custom_call.1} parent=11 // pred_region
          %s141 = ssub.s32 2048, 2048
          %142 = vsyncadd [#allocation7], %s141
          %s143 = sshll.u32 [#allocation6], 4
          %s144 = int_to_ptr.vmem [resolvable:$true] %s143
          %149 = dma.hbm_to_vmem [thread:$0]  %s1, 2048, %s144, [#allocation7], 128, 128, 8
        $region16: #{tpu_custom_call.1} parent=11 // pred_fallthru
          _
        // Predicated region
        $region17: #{tpu_custom_call.1} parent=11 // pred_check
          %p150 = pneg %p96
        $region18: #{tpu_custom_call.1} parent=11 // pred_check_branch
          %152 = sbr.rel (%p150) target = $region20
        $region19: #{tpu_custom_call.1} parent=11 // pred_region
          %s154 = ssub.s32 16, 16
          %155 = vsyncadd [#allocation7], %s154
          %s157 = sshll.u32 [#allocation8], 4
          %s158 = int_to_ptr.vmem [resolvable:$true] %s157
          %160 = dma.hbm_to_vmem [thread:$0]  %s2, 16, %s158, [#allocation7]
        $region20: #{tpu_custom_call.1} parent=11 // pred_fallthru
          _
      $region12: #{tpu_custom_call.1} parent=5 // pred_fallthru
        _
      %p161 = scmp.lt.s32.totalorder %s14, 2
      // Predicated region
      $region21: #{tpu_custom_call.1} parent=5 // pred_check
        %p162 = pneg %p161
      $region22: #{tpu_custom_call.1} parent=5 // pred_check_branch
        %164 = sbr.rel (%p162) target = $region24
      $region23: #{tpu_custom_call.1} parent=5 // pred_region
        // Predicated region
        $region25: #{tpu_custom_call.1} parent=23 // pred_check
          %p165 = pneg %p48
        $region26: #{tpu_custom_call.1} parent=23 // pred_check_branch
          %167 = sbr.rel (%p165) target = $region28
        $region27: #{tpu_custom_call.1} parent=23 // pred_region
          #allocation11 [shape = 'u32[6]{0}', space=smem, size = 0x18, scoped, tag = 'DMA stride descriptor']
          %s168 = sand.u32 %s38, 1
          %s169 = scalar_lea.sflag [#allocation4], %s168
          %s170 = sand.u32 %s38, 1
          %s171 = smul.addr %s170, 2048
          %s172 = scalar_lea.vmem [#allocation3], %s171
          %s173 = smul.u32 8, %s21
          %s174 = smul.u32 32, %s22
          %s176 = ssub.s32 32768, 32768
          %177 = vsyncadd %s169, %s176
          %s178 = smul.addr %s173, 64
          %s179 = sadd.s32 %s174, %s178
          %s180 = smul.addr %s179, 128
          %s181 = scalar_lea.hbm %s0, %s180
          %s183 = sshll.u32 1, 14
          %s184 = sxor.u32 4294967295, %s183
          %s186 = sld [smem:[#allocation0]]
          %s187 = sadd.s32 2, %s186
          %s189 = sshll.u32 7, 26
          %s190 = sxor.u32 4294967295, %s189
          %s191 = sand.u32 0, %s190
          %s192 = sshll.u32 %s187, 26
          %s193 = sor.u32 %s191, %s192
          %s194 = sshll.u32 %s172, 4
          %s195 = int_to_ptr.vmem [resolvable:$true] %s194
          %201 = sst [smem:[#allocation11]] 8192
          %s202 = scalar_lea.smem [#allocation11], 1
          %203 = sst [smem:[%s202]] 4096
          %s204 = scalar_lea.smem [#allocation11], 2
          %205 = sst [smem:[%s204]] 32
          %s206 = scalar_lea.smem [#allocation11], 3
          %207 = sst [smem:[%s206]] 128
          %s208 = scalar_lea.smem [#allocation11], 4
          %209 = sst [smem:[%s208]] 128
          %s210 = scalar_lea.smem [#allocation11], 5
          %211 = sst [smem:[%s210]] 8
          %213 = dma.general %s181, 32768, %s195, %s169, [#allocation10], [#allocation11], %s193, 0
        $region28: #{tpu_custom_call.1} parent=23 // pred_fallthru
          _
      $region24: #{tpu_custom_call.1} parent=5 // pred_fallthru
        _
      %p214 = scmp.le.s32.totalorder 1, %s14
      %p215 = scmp.lt.s32.totalorder %s14, 3
      %p216 = pnand %p214, %p215
      %p217 = pneg %p216
      // Predicated region
      $region29: #{tpu_custom_call.1} parent=5 // pred_check
        _
      $region30: #{tpu_custom_call.1} parent=5 // pred_check_branch
        %219 = sbr.rel (%p216) target = $region32
      $region31: #{tpu_custom_call.1} parent=5 // pred_region
        %s220 = ssub.s32 %s14, 1
        %s221 = sand.u32 %s41, 1
        %s222 = scalar_lea.sflag [#allocation4], %s221
        %s223 = sand.u32 %s41, 1
        %s224 = smul.addr %s223, 2048
        %s225 = scalar_lea.vmem [#allocation3], %s224
        // Predicated region
        $region33: #{tpu_custom_call.1} parent=31 // pred_check
          %p226 = pneg %p54
        $region34: #{tpu_custom_call.1} parent=31 // pred_check_branch
          %228 = sbr.rel (%p226) target = $region36
        $region35: #{tpu_custom_call.1} parent=31 // pred_region
          %229 = dma.done %s222, 32768
        $region36: #{tpu_custom_call.1} parent=31 // pred_fallthru
          _
        // Predicated region
        $region37: #{tpu_custom_call.1} parent=31 // pred_check
          %p230 = pneg %p75
        $region38: #{tpu_custom_call.1} parent=31 // pred_check_branch
          %232 = sbr.rel (%p230) target = $region40
        $region39: #{tpu_custom_call.1} parent=31 // pred_region
          %233 = dma.done [#allocation7], 2048
        $region40: #{tpu_custom_call.1} parent=31 // pred_fallthru
          _
        // Predicated region
        $region41: #{tpu_custom_call.1} parent=31 // pred_check
          %p234 = pneg %p96
        $region42: #{tpu_custom_call.1} parent=31 // pred_check_branch
          %236 = sbr.rel (%p234) target = $region44
        $region43: #{tpu_custom_call.1} parent=31 // pred_region
          %237 = dma.done [#allocation7], 16
        $region44: #{tpu_custom_call.1} parent=31 // pred_fallthru
          _
        %s238 = sand.u32 %s41, 1
        %s239 = scalar_lea.sflag [#allocation4], %s238
        %s240 = sand.u32 %s41, 1
        %s241 = smul.addr %s240, 2048
        %s242 = scalar_lea.vmem [#allocation3], %s241
        %p243 = pneg %p54
        %p244 = pneg %p51
        %p245 = pneg %p75
        %p246 = pneg %p72
        %p247 = pneg %p96
        %p248 = pneg %p93
        %p249 = pneg %p122
        %p250 = pneg %p119
        %s251 = smul.u32 8, %s23
        %s252 = smul.u32 32, %s24
        %p253 = scmp.eq.s32.totalorder %s24, 0
        // Predicated region
        $region45: #{tpu_custom_call.1} parent=31 // pred_check
          %p254 = pneg %p253
        $region46: #{tpu_custom_call.1} parent=31 // pred_check_branch
          %256 = sbr.rel (%p254) target = $region48
        $region47: #{tpu_custom_call.1} parent=31 // pred_region
          %257 = vst [vmem:[#allocation2] sm:$0xff] -inf
        $region48: #{tpu_custom_call.1} parent=31 // pred_fallthru
          _
        %v258 = vld [vmem:[%s225] sm:$0xff]
        %v259 = vld [vmem:[%s225 + $0x8] sm:$0xff]
        %v260 = vld [vmem:[%s225 + $0x10] sm:$0xff]
        %v261 = vld [vmem:[%s225 + $0x18] sm:$0xff]
        %v262 = vld [vmem:[%s225 + $0x20] sm:$0xff]
        %v263 = vld [vmem:[%s225 + $0x28] sm:$0xff]
        %v264 = vld [vmem:[%s225 + $0x30] sm:$0xff]
        %v265 = vld [vmem:[%s225 + $0x38] sm:$0xff]
        %v266 = vld [vmem:[%s225 + $0x40] sm:$0xff]
        %v267 = vld [vmem:[%s225 + $0x48] sm:$0xff]
        %v268 = vld [vmem:[%s225 + $0x50] sm:$0xff]
        %v269 = vld [vmem:[%s225 + $0x58] sm:$0xff]
        %v270 = vld [vmem:[%s225 + $0x60] sm:$0xff]
        %v271 = vld [vmem:[%s225 + $0x68] sm:$0xff]
        %v272 = vld [vmem:[%s225 + $0x70] sm:$0xff]
        %v273 = vld [vmem:[%s225 + $0x78] sm:$0xff]
        %v274 = vld [vmem:[%s225 + $0x80] sm:$0xff]
        %v275 = vld [vmem:[%s225 + $0x88] sm:$0xff]
        %v276 = vld [vmem:[%s225 + $0x90] sm:$0xff]
        %v277 = vld [vmem:[%s225 + $0x98] sm:$0xff]
        %v278 = vld [vmem:[%s225 + $0xa0] sm:$0xff]
        %v279 = vld [vmem:[%s225 + $0xa8] sm:$0xff]
        %v280 = vld [vmem:[%s225 + $0xb0] sm:$0xff]
        %v281 = vld [vmem:[%s225 + $0xb8] sm:$0xff]
        %v282 = vld [vmem:[%s225 + $0xc0] sm:$0xff]
        %v283 = vld [vmem:[%s225 + $0xc8] sm:$0xff]
        %v284 = vld [vmem:[%s225 + $0xd0] sm:$0xff]
        %v285 = vld [vmem:[%s225 + $0xd8] sm:$0xff]
        %v286 = vld [vmem:[%s225 + $0xe0] sm:$0xff]
        %v287 = vld [vmem:[%s225 + $0xe8] sm:$0xff]
        %v288 = vld [vmem:[%s225 + $0xf0] sm:$0xff]
        %v289 = vld [vmem:[%s225 + $0xf8] sm:$0xff]
        %v290 = vld [vmem:[%s225 + $0x100] sm:$0xff]
        %v291 = vld [vmem:[%s225 + $0x108] sm:$0xff]
        %v292 = vld [vmem:[%s225 + $0x110] sm:$0xff]
        %v293 = vld [vmem:[%s225 + $0x118] sm:$0xff]
        %v294 = vld [vmem:[%s225 + $0x120] sm:$0xff]
        %v295 = vld [vmem:[%s225 + $0x128] sm:$0xff]
        %v296 = vld [vmem:[%s225 + $0x130] sm:$0xff]
        %v297 = vld [vmem:[%s225 + $0x138] sm:$0xff]
        %v298 = vld [vmem:[%s225 + $0x140] sm:$0xff]
        %v299 = vld [vmem:[%s225 + $0x148] sm:$0xff]
        %v300 = vld [vmem:[%s225 + $0x150] sm:$0xff]
        %v301 = vld [vmem:[%s225 + $0x158] sm:$0xff]
        %v302 = vld [vmem:[%s225 + $0x160] sm:$0xff]
        %v303 = vld [vmem:[%s225 + $0x168] sm:$0xff]
        %v304 = vld [vmem:[%s225 + $0x170] sm:$0xff]
        %v305 = vld [vmem:[%s225 + $0x178] sm:$0xff]
        %v306 = vld [vmem:[%s225 + $0x180] sm:$0xff]
        %v307 = vld [vmem:[%s225 + $0x188] sm:$0xff]
        %v308 = vld [vmem:[%s225 + $0x190] sm:$0xff]
        %v309 = vld [vmem:[%s225 + $0x198] sm:$0xff]
        %v310 = vld [vmem:[%s225 + $0x1a0] sm:$0xff]
        %v311 = vld [vmem:[%s225 + $0x1a8] sm:$0xff]
        %v312 = vld [vmem:[%s225 + $0x1b0] sm:$0xff]
        %v313 = vld [vmem:[%s225 + $0x1b8] sm:$0xff]
        %v314 = vld [vmem:[%s225 + $0x1c0] sm:$0xff]
        %v315 = vld [vmem:[%s225 + $0x1c8] sm:$0xff]
        %v316 = vld [vmem:[%s225 + $0x1d0] sm:$0xff]
        %v317 = vld [vmem:[%s225 + $0x1d8] sm:$0xff]
        %v318 = vld [vmem:[%s225 + $0x1e0] sm:$0xff]
        %v319 = vld [vmem:[%s225 + $0x1e8] sm:$0xff]
        %v320 = vld [vmem:[%s225 + $0x1f0] sm:$0xff]
        %v321 = vld [vmem:[%s225 + $0x1f8] sm:$0xff]
        %v322 = vld [vmem:[%s225 + $0x200] sm:$0xff]
        %v323 = vld [vmem:[%s225 + $0x208] sm:$0xff]
        %v324 = vld [vmem:[%s225 + $0x210] sm:$0xff]
        %v325 = vld [vmem:[%s225 + $0x218] sm:$0xff]
        %v326 = vld [vmem:[%s225 + $0x220] sm:$0xff]
        %v327 = vld [vmem:[%s225 + $0x228] sm:$0xff]
        %v328 = vld [vmem:[%s225 + $0x230] sm:$0xff]
        %v329 = vld [vmem:[%s225 + $0x238] sm:$0xff]
        %v330 = vld [vmem:[%s225 + $0x240] sm:$0xff]
        %v331 = vld [vmem:[%s225 + $0x248] sm:$0xff]
        %v332 = vld [vmem:[%s225 + $0x250] sm:$0xff]
        %v333 = vld [vmem:[%s225 + $0x258] sm:$0xff]
        %v334 = vld [vmem:[%s225 + $0x260] sm:$0xff]
        %v335 = vld [vmem:[%s225 + $0x268] sm:$0xff]
        %v336 = vld [vmem:[%s225 + $0x270] sm:$0xff]
        %v337 = vld [vmem:[%s225 + $0x278] sm:$0xff]
        %v338 = vld [vmem:[%s225 + $0x280] sm:$0xff]
        %v339 = vld [vmem:[%s225 + $0x288] sm:$0xff]
        %v340 = vld [vmem:[%s225 + $0x290] sm:$0xff]
        %v341 = vld [vmem:[%s225 + $0x298] sm:$0xff]
        %v342 = vld [vmem:[%s225 + $0x2a0] sm:$0xff]
        %v343 = vld [vmem:[%s225 + $0x2a8] sm:$0xff]
        %v344 = vld [vmem:[%s225 + $0x2b0] sm:$0xff]
        %v345 = vld [vmem:[%s225 + $0x2b8] sm:$0xff]
        %v346 = vld [vmem:[%s225 + $0x2c0] sm:$0xff]
        %v347 = vld [vmem:[%s225 + $0x2c8] sm:$0xff]
        %v348 = vld [vmem:[%s225 + $0x2d0] sm:$0xff]
        %v349 = vld [vmem:[%s225 + $0x2d8] sm:$0xff]
        %v350 = vld [vmem:[%s225 + $0x2e0] sm:$0xff]
        %v351 = vld [vmem:[%s225 + $0x2e8] sm:$0xff]
        %v352 = vld [vmem:[%s225 + $0x2f0] sm:$0xff]
        %v353 = vld [vmem:[%s225 + $0x2f8] sm:$0xff]
        %v354 = vld [vmem:[%s225 + $0x300] sm:$0xff]
        %v355 = vld [vmem:[%s225 + $0x308] sm:$0xff]
        %v356 = vld [vmem:[%s225 + $0x310] sm:$0xff]
        %v357 = vld [vmem:[%s225 + $0x318] sm:$0xff]
        %v358 = vld [vmem:[%s225 + $0x320] sm:$0xff]
        %v359 = vld [vmem:[%s225 + $0x328] sm:$0xff]
        %v360 = vld [vmem:[%s225 + $0x330] sm:$0xff]
        %v361 = vld [vmem:[%s225 + $0x338] sm:$0xff]
        %v362 = vld [vmem:[%s225 + $0x340] sm:$0xff]
        %v363 = vld [vmem:[%s225 + $0x348] sm:$0xff]
        %v364 = vld [vmem:[%s225 + $0x350] sm:$0xff]
        %v365 = vld [vmem:[%s225 + $0x358] sm:$0xff]
        %v366 = vld [vmem:[%s225 + $0x360] sm:$0xff]
        %v367 = vld [vmem:[%s225 + $0x368] sm:$0xff]
        %v368 = vld [vmem:[%s225 + $0x370] sm:$0xff]
        %v369 = vld [vmem:[%s225 + $0x378] sm:$0xff]
        %v370 = vld [vmem:[%s225 + $0x380] sm:$0xff]
        %v371 = vld [vmem:[%s225 + $0x388] sm:$0xff]
        %v372 = vld [vmem:[%s225 + $0x390] sm:$0xff]
        %v373 = vld [vmem:[%s225 + $0x398] sm:$0xff]
        %v374 = vld [vmem:[%s225 + $0x3a0] sm:$0xff]
        %v375 = vld [vmem:[%s225 + $0x3a8] sm:$0xff]
        %v376 = vld [vmem:[%s225 + $0x3b0] sm:$0xff]
        %v377 = vld [vmem:[%s225 + $0x3b8] sm:$0xff]
        %v378 = vld [vmem:[%s225 + $0x3c0] sm:$0xff]
        %v379 = vld [vmem:[%s225 + $0x3c8] sm:$0xff]
        %v380 = vld [vmem:[%s225 + $0x3d0] sm:$0xff]
        %v381 = vld [vmem:[%s225 + $0x3d8] sm:$0xff]
        %v382 = vld [vmem:[%s225 + $0x3e0] sm:$0xff]
        %v383 = vld [vmem:[%s225 + $0x3e8] sm:$0xff]
        %v384 = vld [vmem:[%s225 + $0x3f0] sm:$0xff]
        %v385 = vld [vmem:[%s225 + $0x3f8] sm:$0xff]
        %v386 = vld [vmem:[%s225 + $0x400] sm:$0xff]
        %v387 = vld [vmem:[%s225 + $0x408] sm:$0xff]
        %v388 = vld [vmem:[%s225 + $0x410] sm:$0xff]
        %v389 = vld [vmem:[%s225 + $0x418] sm:$0xff]
        %v390 = vld [vmem:[%s225 + $0x420] sm:$0xff]
        %v391 = vld [vmem:[%s225 + $0x428] sm:$0xff]
        %v392 = vld [vmem:[%s225 + $0x430] sm:$0xff]
        %v393 = vld [vmem:[%s225 + $0x438] sm:$0xff]
        %v394 = vld [vmem:[%s225 + $0x440] sm:$0xff]
        %v395 = vld [vmem:[%s225 + $0x448] sm:$0xff]
        %v396 = vld [vmem:[%s225 + $0x450] sm:$0xff]
        %v397 = vld [vmem:[%s225 + $0x458] sm:$0xff]
        %v398 = vld [vmem:[%s225 + $0x460] sm:$0xff]
        %v399 = vld [vmem:[%s225 + $0x468] sm:$0xff]
        %v400 = vld [vmem:[%s225 + $0x470] sm:$0xff]
        %v401 = vld [vmem:[%s225 + $0x478] sm:$0xff]
        %v402 = vld [vmem:[%s225 + $0x480] sm:$0xff]
        %v403 = vld [vmem:[%s225 + $0x488] sm:$0xff]
        %v404 = vld [vmem:[%s225 + $0x490] sm:$0xff]
        %v405 = vld [vmem:[%s225 + $0x498] sm:$0xff]
        %v406 = vld [vmem:[%s225 + $0x4a0] sm:$0xff]
        %v407 = vld [vmem:[%s225 + $0x4a8] sm:$0xff]
        %v408 = vld [vmem:[%s225 + $0x4b0] sm:$0xff]
        %v409 = vld [vmem:[%s225 + $0x4b8] sm:$0xff]
        %v410 = vld [vmem:[%s225 + $0x4c0] sm:$0xff]
        %v411 = vld [vmem:[%s225 + $0x4c8] sm:$0xff]
        %v412 = vld [vmem:[%s225 + $0x4d0] sm:$0xff]
        %v413 = vld [vmem:[%s225 + $0x4d8] sm:$0xff]
        %v414 = vld [vmem:[%s225 + $0x4e0] sm:$0xff]
        %v415 = vld [vmem:[%s225 + $0x4e8] sm:$0xff]
        %v416 = vld [vmem:[%s225 + $0x4f0] sm:$0xff]
        %v417 = vld [vmem:[%s225 + $0x4f8] sm:$0xff]
        %v418 = vld [vmem:[%s225 + $0x500] sm:$0xff]
        %v419 = vld [vmem:[%s225 + $0x508] sm:$0xff]
        %v420 = vld [vmem:[%s225 + $0x510] sm:$0xff]
        %v421 = vld [vmem:[%s225 + $0x518] sm:$0xff]
        %v422 = vld [vmem:[%s225 + $0x520] sm:$0xff]
        %v423 = vld [vmem:[%s225 + $0x528] sm:$0xff]
        %v424 = vld [vmem:[%s225 + $0x530] sm:$0xff]
        %v425 = vld [vmem:[%s225 + $0x538] sm:$0xff]
        %v426 = vld [vmem:[%s225 + $0x540] sm:$0xff]
        %v427 = vld [vmem:[%s225 + $0x548] sm:$0xff]
        %v428 = vld [vmem:[%s225 + $0x550] sm:$0xff]
        %v429 = vld [vmem:[%s225 + $0x558] sm:$0xff]
        %v430 = vld [vmem:[%s225 + $0x560] sm:$0xff]
        %v431 = vld [vmem:[%s225 + $0x568] sm:$0xff]
        %v432 = vld [vmem:[%s225 + $0x570] sm:$0xff]
        %v433 = vld [vmem:[%s225 + $0x578] sm:$0xff]
        %v434 = vld [vmem:[%s225 + $0x580] sm:$0xff]
        %v435 = vld [vmem:[%s225 + $0x588] sm:$0xff]
        %v436 = vld [vmem:[%s225 + $0x590] sm:$0xff]
        %v437 = vld [vmem:[%s225 + $0x598] sm:$0xff]
        %v438 = vld [vmem:[%s225 + $0x5a0] sm:$0xff]
        %v439 = vld [vmem:[%s225 + $0x5a8] sm:$0xff]
        %v440 = vld [vmem:[%s225 + $0x5b0] sm:$0xff]
        %v441 = vld [vmem:[%s225 + $0x5b8] sm:$0xff]
        %v442 = vld [vmem:[%s225 + $0x5c0] sm:$0xff]
        %v443 = vld [vmem:[%s225 + $0x5c8] sm:$0xff]
        %v444 = vld [vmem:[%s225 + $0x5d0] sm:$0xff]
        %v445 = vld [vmem:[%s225 + $0x5d8] sm:$0xff]
        %v446 = vld [vmem:[%s225 + $0x5e0] sm:$0xff]
        %v447 = vld [vmem:[%s225 + $0x5e8] sm:$0xff]
        %v448 = vld [vmem:[%s225 + $0x5f0] sm:$0xff]
        %v449 = vld [vmem:[%s225 + $0x5f8] sm:$0xff]
        %v450 = vld [vmem:[%s225 + $0x600] sm:$0xff]
        %v451 = vld [vmem:[%s225 + $0x608] sm:$0xff]
        %v452 = vld [vmem:[%s225 + $0x610] sm:$0xff]
        %v453 = vld [vmem:[%s225 + $0x618] sm:$0xff]
        %v454 = vld [vmem:[%s225 + $0x620] sm:$0xff]
        %v455 = vld [vmem:[%s225 + $0x628] sm:$0xff]
        %v456 = vld [vmem:[%s225 + $0x630] sm:$0xff]
        %v457 = vld [vmem:[%s225 + $0x638] sm:$0xff]
        %v458 = vld [vmem:[%s225 + $0x640] sm:$0xff]
        %v459 = vld [vmem:[%s225 + $0x648] sm:$0xff]
        %v460 = vld [vmem:[%s225 + $0x650] sm:$0xff]
        %v461 = vld [vmem:[%s225 + $0x658] sm:$0xff]
        %v462 = vld [vmem:[%s225 + $0x660] sm:$0xff]
        %v463 = vld [vmem:[%s225 + $0x668] sm:$0xff]
        %v464 = vld [vmem:[%s225 + $0x670] sm:$0xff]
        %v465 = vld [vmem:[%s225 + $0x678] sm:$0xff]
        %v466 = vld [vmem:[%s225 + $0x680] sm:$0xff]
        %v467 = vld [vmem:[%s225 + $0x688] sm:$0xff]
        %v468 = vld [vmem:[%s225 + $0x690] sm:$0xff]
        %v469 = vld [vmem:[%s225 + $0x698] sm:$0xff]
        %v470 = vld [vmem:[%s225 + $0x6a0] sm:$0xff]
        %v471 = vld [vmem:[%s225 + $0x6a8] sm:$0xff]
        %v472 = vld [vmem:[%s225 + $0x6b0] sm:$0xff]
        %v473 = vld [vmem:[%s225 + $0x6b8] sm:$0xff]
        %v474 = vld [vmem:[%s225 + $0x6c0] sm:$0xff]
        %v475 = vld [vmem:[%s225 + $0x6c8] sm:$0xff]
        %v476 = vld [vmem:[%s225 + $0x6d0] sm:$0xff]
        %v477 = vld [vmem:[%s225 + $0x6d8] sm:$0xff]
        %v478 = vld [vmem:[%s225 + $0x6e0] sm:$0xff]
        %v479 = vld [vmem:[%s225 + $0x6e8] sm:$0xff]
        %v480 = vld [vmem:[%s225 + $0x6f0] sm:$0xff]
        %v481 = vld [vmem:[%s225 + $0x6f8] sm:$0xff]
        %v482 = vld [vmem:[%s225 + $0x700] sm:$0xff]
        %v483 = vld [vmem:[%s225 + $0x708] sm:$0xff]
        %v484 = vld [vmem:[%s225 + $0x710] sm:$0xff]
        %v485 = vld [vmem:[%s225 + $0x718] sm:$0xff]
        %v486 = vld [vmem:[%s225 + $0x720] sm:$0xff]
        %v487 = vld [vmem:[%s225 + $0x728] sm:$0xff]
        %v488 = vld [vmem:[%s225 + $0x730] sm:$0xff]
        %v489 = vld [vmem:[%s225 + $0x738] sm:$0xff]
        %v490 = vld [vmem:[%s225 + $0x740] sm:$0xff]
        %v491 = vld [vmem:[%s225 + $0x748] sm:$0xff]
        %v492 = vld [vmem:[%s225 + $0x750] sm:$0xff]
        %v493 = vld [vmem:[%s225 + $0x758] sm:$0xff]
        %v494 = vld [vmem:[%s225 + $0x760] sm:$0xff]
        %v495 = vld [vmem:[%s225 + $0x768] sm:$0xff]
        %v496 = vld [vmem:[%s225 + $0x770] sm:$0xff]
        %v497 = vld [vmem:[%s225 + $0x778] sm:$0xff]
        %v498 = vld [vmem:[%s225 + $0x780] sm:$0xff]
        %v499 = vld [vmem:[%s225 + $0x788] sm:$0xff]
        %v500 = vld [vmem:[%s225 + $0x790] sm:$0xff]
        %v501 = vld [vmem:[%s225 + $0x798] sm:$0xff]
        %v502 = vld [vmem:[%s225 + $0x7a0] sm:$0xff]
        %v503 = vld [vmem:[%s225 + $0x7a8] sm:$0xff]
        %v504 = vld [vmem:[%s225 + $0x7b0] sm:$0xff]
        %v505 = vld [vmem:[%s225 + $0x7b8] sm:$0xff]
        %v506 = vld [vmem:[%s225 + $0x7c0] sm:$0xff]
        %v507 = vld [vmem:[%s225 + $0x7c8] sm:$0xff]
        %v508 = vld [vmem:[%s225 + $0x7d0] sm:$0xff]
        %v509 = vld [vmem:[%s225 + $0x7d8] sm:$0xff]
        %v510 = vld [vmem:[%s225 + $0x7e0] sm:$0xff]
        %v511 = vld [vmem:[%s225 + $0x7e8] sm:$0xff]
        %v512 = vld [vmem:[%s225 + $0x7f0] sm:$0xff]
        %v513 = vld [vmem:[%s225 + $0x7f8] sm:$0xff]
        %vm514 = vcmp.ne.f32.partialorder %v258, 0.0
        %vm515 = vcmp.ne.f32.partialorder %v259, 0.0
        %vm516 = vcmp.ne.f32.partialorder %v260, 0.0
        %vm517 = vcmp.ne.f32.partialorder %v261, 0.0
        %vm518 = vcmp.ne.f32.partialorder %v262, 0.0
        %vm519 = vcmp.ne.f32.partialorder %v263, 0.0
        %vm520 = vcmp.ne.f32.partialorder %v264, 0.0
        %vm521 = vcmp.ne.f32.partialorder %v265, 0.0
        %vm522 = vcmp.ne.f32.partialorder %v266, 0.0
        %vm523 = vcmp.ne.f32.partialorder %v267, 0.0
        %vm524 = vcmp.ne.f32.partialorder %v268, 0.0
        %vm525 = vcmp.ne.f32.partialorder %v269, 0.0
        %vm526 = vcmp.ne.f32.partialorder %v270, 0.0
        %vm527 = vcmp.ne.f32.partialorder %v271, 0.0
        %vm528 = vcmp.ne.f32.partialorder %v272, 0.0
        %vm529 = vcmp.ne.f32.partialorder %v273, 0.0
        %vm530 = vcmp.ne.f32.partialorder %v274, 0.0
        %vm531 = vcmp.ne.f32.partialorder %v275, 0.0
        %vm532 = vcmp.ne.f32.partialorder %v276, 0.0
        %vm533 = vcmp.ne.f32.partialorder %v277, 0.0
        %vm534 = vcmp.ne.f32.partialorder %v278, 0.0
        %vm535 = vcmp.ne.f32.partialorder %v279, 0.0
        %vm536 = vcmp.ne.f32.partialorder %v280, 0.0
        %vm537 = vcmp.ne.f32.partialorder %v281, 0.0
        %vm538 = vcmp.ne.f32.partialorder %v282, 0.0
        %vm539 = vcmp.ne.f32.partialorder %v283, 0.0
        %vm540 = vcmp.ne.f32.partialorder %v284, 0.0
        %vm541 = vcmp.ne.f32.partialorder %v285, 0.0
        %vm542 = vcmp.ne.f32.partialorder %v286, 0.0
        %vm543 = vcmp.ne.f32.partialorder %v287, 0.0
        %vm544 = vcmp.ne.f32.partialorder %v288, 0.0
        %vm545 = vcmp.ne.f32.partialorder %v289, 0.0
        %vm546 = vcmp.ne.f32.partialorder %v290, 0.0
        %vm547 = vcmp.ne.f32.partialorder %v291, 0.0
        %vm548 = vcmp.ne.f32.partialorder %v292, 0.0
        %vm549 = vcmp.ne.f32.partialorder %v293, 0.0
        %vm550 = vcmp.ne.f32.partialorder %v294, 0.0
        %vm551 = vcmp.ne.f32.partialorder %v295, 0.0
        %vm552 = vcmp.ne.f32.partialorder %v296, 0.0
        %vm553 = vcmp.ne.f32.partialorder %v297, 0.0
        %vm554 = vcmp.ne.f32.partialorder %v298, 0.0
        %vm555 = vcmp.ne.f32.partialorder %v299, 0.0
        %vm556 = vcmp.ne.f32.partialorder %v300, 0.0
        %vm557 = vcmp.ne.f32.partialorder %v301, 0.0
        %vm558 = vcmp.ne.f32.partialorder %v302, 0.0
        %vm559 = vcmp.ne.f32.partialorder %v303, 0.0
        %vm560 = vcmp.ne.f32.partialorder %v304, 0.0
        %vm561 = vcmp.ne.f32.partialorder %v305, 0.0
        %vm562 = vcmp.ne.f32.partialorder %v306, 0.0
        %vm563 = vcmp.ne.f32.partialorder %v307, 0.0
        %vm564 = vcmp.ne.f32.partialorder %v308, 0.0
        %vm565 = vcmp.ne.f32.partialorder %v309, 0.0
        %vm566 = vcmp.ne.f32.partialorder %v310, 0.0
        %vm567 = vcmp.ne.f32.partialorder %v311, 0.0
        %vm568 = vcmp.ne.f32.partialorder %v312, 0.0
        %vm569 = vcmp.ne.f32.partialorder %v313, 0.0
        %vm570 = vcmp.ne.f32.partialorder %v314, 0.0
        %vm571 = vcmp.ne.f32.partialorder %v315, 0.0
        %vm572 = vcmp.ne.f32.partialorder %v316, 0.0
        %vm573 = vcmp.ne.f32.partialorder %v317, 0.0
        %vm574 = vcmp.ne.f32.partialorder %v318, 0.0
        %vm575 = vcmp.ne.f32.partialorder %v319, 0.0
        %vm576 = vcmp.ne.f32.partialorder %v320, 0.0
        %vm577 = vcmp.ne.f32.partialorder %v321, 0.0
        %vm578 = vcmp.ne.f32.partialorder %v322, 0.0
        %vm579 = vcmp.ne.f32.partialorder %v323, 0.0
        %vm580 = vcmp.ne.f32.partialorder %v324, 0.0
        %vm581 = vcmp.ne.f32.partialorder %v325, 0.0
        %vm582 = vcmp.ne.f32.partialorder %v326, 0.0
        %vm583 = vcmp.ne.f32.partialorder %v327, 0.0
        %vm584 = vcmp.ne.f32.partialorder %v328, 0.0
        %vm585 = vcmp.ne.f32.partialorder %v329, 0.0
        %vm586 = vcmp.ne.f32.partialorder %v330, 0.0
        %vm587 = vcmp.ne.f32.partialorder %v331, 0.0
        %vm588 = vcmp.ne.f32.partialorder %v332, 0.0
        %vm589 = vcmp.ne.f32.partialorder %v333, 0.0
        %vm590 = vcmp.ne.f32.partialorder %v334, 0.0
        %vm591 = vcmp.ne.f32.partialorder %v335, 0.0
        %vm592 = vcmp.ne.f32.partialorder %v336, 0.0
        %vm593 = vcmp.ne.f32.partialorder %v337, 0.0
        %vm594 = vcmp.ne.f32.partialorder %v338, 0.0
        %vm595 = vcmp.ne.f32.partialorder %v339, 0.0
        %vm596 = vcmp.ne.f32.partialorder %v340, 0.0
        %vm597 = vcmp.ne.f32.partialorder %v341, 0.0
        %vm598 = vcmp.ne.f32.partialorder %v342, 0.0
        %vm599 = vcmp.ne.f32.partialorder %v343, 0.0
        %vm600 = vcmp.ne.f32.partialorder %v344, 0.0
        %vm601 = vcmp.ne.f32.partialorder %v345, 0.0
        %vm602 = vcmp.ne.f32.partialorder %v346, 0.0
        %vm603 = vcmp.ne.f32.partialorder %v347, 0.0
        %vm604 = vcmp.ne.f32.partialorder %v348, 0.0
        %vm605 = vcmp.ne.f32.partialorder %v349, 0.0
        %vm606 = vcmp.ne.f32.partialorder %v350, 0.0
        %vm607 = vcmp.ne.f32.partialorder %v351, 0.0
        %vm608 = vcmp.ne.f32.partialorder %v352, 0.0
        %vm609 = vcmp.ne.f32.partialorder %v353, 0.0
        %vm610 = vcmp.ne.f32.partialorder %v354, 0.0
        %vm611 = vcmp.ne.f32.partialorder %v355, 0.0
        %vm612 = vcmp.ne.f32.partialorder %v356, 0.0
        %vm613 = vcmp.ne.f32.partialorder %v357, 0.0
        %vm614 = vcmp.ne.f32.partialorder %v358, 0.0
        %vm615 = vcmp.ne.f32.partialorder %v359, 0.0
        %vm616 = vcmp.ne.f32.partialorder %v360, 0.0
        %vm617 = vcmp.ne.f32.partialorder %v361, 0.0
        %vm618 = vcmp.ne.f32.partialorder %v362, 0.0
        %vm619 = vcmp.ne.f32.partialorder %v363, 0.0
        %vm620 = vcmp.ne.f32.partialorder %v364, 0.0
        %vm621 = vcmp.ne.f32.partialorder %v365, 0.0
        %vm622 = vcmp.ne.f32.partialorder %v366, 0.0
        %vm623 = vcmp.ne.f32.partialorder %v367, 0.0
        %vm624 = vcmp.ne.f32.partialorder %v368, 0.0
        %vm625 = vcmp.ne.f32.partialorder %v369, 0.0
        %vm626 = vcmp.ne.f32.partialorder %v370, 0.0
        %vm627 = vcmp.ne.f32.partialorder %v371, 0.0
        %vm628 = vcmp.ne.f32.partialorder %v372, 0.0
        %vm629 = vcmp.ne.f32.partialorder %v373, 0.0
        %vm630 = vcmp.ne.f32.partialorder %v374, 0.0
        %vm631 = vcmp.ne.f32.partialorder %v375, 0.0
        %vm632 = vcmp.ne.f32.partialorder %v376, 0.0
        %vm633 = vcmp.ne.f32.partialorder %v377, 0.0
        %vm634 = vcmp.ne.f32.partialorder %v378, 0.0
        %vm635 = vcmp.ne.f32.partialorder %v379, 0.0
        %vm636 = vcmp.ne.f32.partialorder %v380, 0.0
        %vm637 = vcmp.ne.f32.partialorder %v381, 0.0
        %vm638 = vcmp.ne.f32.partialorder %v382, 0.0
        %vm639 = vcmp.ne.f32.partialorder %v383, 0.0
        %vm640 = vcmp.ne.f32.partialorder %v384, 0.0
        %vm641 = vcmp.ne.f32.partialorder %v385, 0.0
        %vm642 = vcmp.ne.f32.partialorder %v386, 0.0
        %vm643 = vcmp.ne.f32.partialorder %v387, 0.0
        %vm644 = vcmp.ne.f32.partialorder %v388, 0.0
        %vm645 = vcmp.ne.f32.partialorder %v389, 0.0
        %vm646 = vcmp.ne.f32.partialorder %v390, 0.0
        %vm647 = vcmp.ne.f32.partialorder %v391, 0.0
        %vm648 = vcmp.ne.f32.partialorder %v392, 0.0
        %vm649 = vcmp.ne.f32.partialorder %v393, 0.0
        %vm650 = vcmp.ne.f32.partialorder %v394, 0.0
        %vm651 = vcmp.ne.f32.partialorder %v395, 0.0
        %vm652 = vcmp.ne.f32.partialorder %v396, 0.0
        %vm653 = vcmp.ne.f32.partialorder %v397, 0.0
        %vm654 = vcmp.ne.f32.partialorder %v398, 0.0
        %vm655 = vcmp.ne.f32.partialorder %v399, 0.0
        %vm656 = vcmp.ne.f32.partialorder %v400, 0.0
        %vm657 = vcmp.ne.f32.partialorder %v401, 0.0
        %vm658 = vcmp.ne.f32.partialorder %v402, 0.0
        %vm659 = vcmp.ne.f32.partialorder %v403, 0.0
        %vm660 = vcmp.ne.f32.partialorder %v404, 0.0
        %vm661 = vcmp.ne.f32.partialorder %v405, 0.0
        %vm662 = vcmp.ne.f32.partialorder %v406, 0.0
        %vm663 = vcmp.ne.f32.partialorder %v407, 0.0
        %vm664 = vcmp.ne.f32.partialorder %v408, 0.0
        %vm665 = vcmp.ne.f32.partialorder %v409, 0.0
        %vm666 = vcmp.ne.f32.partialorder %v410, 0.0
        %vm667 = vcmp.ne.f32.partialorder %v411, 0.0
        %vm668 = vcmp.ne.f32.partialorder %v412, 0.0
        %vm669 = vcmp.ne.f32.partialorder %v413, 0.0
        %vm670 = vcmp.ne.f32.partialorder %v414, 0.0
        %vm671 = vcmp.ne.f32.partialorder %v415, 0.0
        %vm672 = vcmp.ne.f32.partialorder %v416, 0.0
        %vm673 = vcmp.ne.f32.partialorder %v417, 0.0
        %vm674 = vcmp.ne.f32.partialorder %v418, 0.0
        %vm675 = vcmp.ne.f32.partialorder %v419, 0.0
        %vm676 = vcmp.ne.f32.partialorder %v420, 0.0
        %vm677 = vcmp.ne.f32.partialorder %v421, 0.0
        %vm678 = vcmp.ne.f32.partialorder %v422, 0.0
        %vm679 = vcmp.ne.f32.partialorder %v423, 0.0
        %vm680 = vcmp.ne.f32.partialorder %v424, 0.0
        %vm681 = vcmp.ne.f32.partialorder %v425, 0.0
        %vm682 = vcmp.ne.f32.partialorder %v426, 0.0
        %vm683 = vcmp.ne.f32.partialorder %v427, 0.0
        %vm684 = vcmp.ne.f32.partialorder %v428, 0.0
        %vm685 = vcmp.ne.f32.partialorder %v429, 0.0
        %vm686 = vcmp.ne.f32.partialorder %v430, 0.0
        %vm687 = vcmp.ne.f32.partialorder %v431, 0.0
        %vm688 = vcmp.ne.f32.partialorder %v432, 0.0
        %vm689 = vcmp.ne.f32.partialorder %v433, 0.0
        %vm690 = vcmp.ne.f32.partialorder %v434, 0.0
        %vm691 = vcmp.ne.f32.partialorder %v435, 0.0
        %vm692 = vcmp.ne.f32.partialorder %v436, 0.0
        %vm693 = vcmp.ne.f32.partialorder %v437, 0.0
        %vm694 = vcmp.ne.f32.partialorder %v438, 0.0
        %vm695 = vcmp.ne.f32.partialorder %v439, 0.0
        %vm696 = vcmp.ne.f32.partialorder %v440, 0.0
        %vm697 = vcmp.ne.f32.partialorder %v441, 0.0
        %vm698 = vcmp.ne.f32.partialorder %v442, 0.0
        %vm699 = vcmp.ne.f32.partialorder %v443, 0.0
        %vm700 = vcmp.ne.f32.partialorder %v444, 0.0
        %vm701 = vcmp.ne.f32.partialorder %v445, 0.0
        %vm702 = vcmp.ne.f32.partialorder %v446, 0.0
        %vm703 = vcmp.ne.f32.partialorder %v447, 0.0
        %vm704 = vcmp.ne.f32.partialorder %v448, 0.0
        %vm705 = vcmp.ne.f32.partialorder %v449, 0.0
        %vm706 = vcmp.ne.f32.partialorder %v450, 0.0
        %vm707 = vcmp.ne.f32.partialorder %v451, 0.0
        %vm708 = vcmp.ne.f32.partialorder %v452, 0.0
        %vm709 = vcmp.ne.f32.partialorder %v453, 0.0
        %vm710 = vcmp.ne.f32.partialorder %v454, 0.0
        %vm711 = vcmp.ne.f32.partialorder %v455, 0.0
        %vm712 = vcmp.ne.f32.partialorder %v456, 0.0
        %vm713 = vcmp.ne.f32.partialorder %v457, 0.0
        %vm714 = vcmp.ne.f32.partialorder %v458, 0.0
        %vm715 = vcmp.ne.f32.partialorder %v459, 0.0
        %vm716 = vcmp.ne.f32.partialorder %v460, 0.0
        %vm717 = vcmp.ne.f32.partialorder %v461, 0.0
        %vm718 = vcmp.ne.f32.partialorder %v462, 0.0
        %vm719 = vcmp.ne.f32.partialorder %v463, 0.0
        %vm720 = vcmp.ne.f32.partialorder %v464, 0.0
        %vm721 = vcmp.ne.f32.partialorder %v465, 0.0
        %vm722 = vcmp.ne.f32.partialorder %v466, 0.0
        %vm723 = vcmp.ne.f32.partialorder %v467, 0.0
        %vm724 = vcmp.ne.f32.partialorder %v468, 0.0
        %vm725 = vcmp.ne.f32.partialorder %v469, 0.0
        %vm726 = vcmp.ne.f32.partialorder %v470, 0.0
        %vm727 = vcmp.ne.f32.partialorder %v471, 0.0
        %vm728 = vcmp.ne.f32.partialorder %v472, 0.0
        %vm729 = vcmp.ne.f32.partialorder %v473, 0.0
        %vm730 = vcmp.ne.f32.partialorder %v474, 0.0
        %vm731 = vcmp.ne.f32.partialorder %v475, 0.0
        %vm732 = vcmp.ne.f32.partialorder %v476, 0.0
        %vm733 = vcmp.ne.f32.partialorder %v477, 0.0
        %vm734 = vcmp.ne.f32.partialorder %v478, 0.0
        %vm735 = vcmp.ne.f32.partialorder %v479, 0.0
        %vm736 = vcmp.ne.f32.partialorder %v480, 0.0
        %vm737 = vcmp.ne.f32.partialorder %v481, 0.0
        %vm738 = vcmp.ne.f32.partialorder %v482, 0.0
        %vm739 = vcmp.ne.f32.partialorder %v483, 0.0
        %vm740 = vcmp.ne.f32.partialorder %v484, 0.0
        %vm741 = vcmp.ne.f32.partialorder %v485, 0.0
        %vm742 = vcmp.ne.f32.partialorder %v486, 0.0
        %vm743 = vcmp.ne.f32.partialorder %v487, 0.0
        %vm744 = vcmp.ne.f32.partialorder %v488, 0.0
        %vm745 = vcmp.ne.f32.partialorder %v489, 0.0
        %vm746 = vcmp.ne.f32.partialorder %v490, 0.0
        %vm747 = vcmp.ne.f32.partialorder %v491, 0.0
        %vm748 = vcmp.ne.f32.partialorder %v492, 0.0
        %vm749 = vcmp.ne.f32.partialorder %v493, 0.0
        %vm750 = vcmp.ne.f32.partialorder %v494, 0.0
        %vm751 = vcmp.ne.f32.partialorder %v495, 0.0
        %vm752 = vcmp.ne.f32.partialorder %v496, 0.0
        %vm753 = vcmp.ne.f32.partialorder %v497, 0.0
        %vm754 = vcmp.ne.f32.partialorder %v498, 0.0
        %vm755 = vcmp.ne.f32.partialorder %v499, 0.0
        %vm756 = vcmp.ne.f32.partialorder %v500, 0.0
        %vm757 = vcmp.ne.f32.partialorder %v501, 0.0
        %vm758 = vcmp.ne.f32.partialorder %v502, 0.0
        %vm759 = vcmp.ne.f32.partialorder %v503, 0.0
        %vm760 = vcmp.ne.f32.partialorder %v504, 0.0
        %vm761 = vcmp.ne.f32.partialorder %v505, 0.0
        %vm762 = vcmp.ne.f32.partialorder %v506, 0.0
        %vm763 = vcmp.ne.f32.partialorder %v507, 0.0
        %vm764 = vcmp.ne.f32.partialorder %v508, 0.0
        %vm765 = vcmp.ne.f32.partialorder %v509, 0.0
        %vm766 = vcmp.ne.f32.partialorder %v510, 0.0
        %vm767 = vcmp.ne.f32.partialorder %v511, 0.0
        %vm768 = vcmp.ne.f32.partialorder %v512, 0.0
        %vm769 = vcmp.ne.f32.partialorder %v513, 0.0
        %v770 = vsel %vm514, 1.0, 0.0
        %v771 = vsel %vm515, 1.0, 0.0
        %v772 = vsel %vm516, 1.0, 0.0
        %v773 = vsel %vm517, 1.0, 0.0
        %v774 = vsel %vm518, 1.0, 0.0
        %v775 = vsel %vm519, 1.0, 0.0
        %v776 = vsel %vm520, 1.0, 0.0
        %v777 = vsel %vm521, 1.0, 0.0
        %v778 = vsel %vm522, 1.0, 0.0
        %v779 = vsel %vm523, 1.0, 0.0
        %v780 = vsel %vm524, 1.0, 0.0
        %v781 = vsel %vm525, 1.0, 0.0
        %v782 = vsel %vm526, 1.0, 0.0
        %v783 = vsel %vm527, 1.0, 0.0
        %v784 = vsel %vm528, 1.0, 0.0
        %v785 = vsel %vm529, 1.0, 0.0
        %v786 = vsel %vm530, 1.0, 0.0
        %v787 = vsel %vm531, 1.0, 0.0
        %v788 = vsel %vm532, 1.0, 0.0
        %v789 = vsel %vm533, 1.0, 0.0
        %v790 = vsel %vm534, 1.0, 0.0
        %v791 = vsel %vm535, 1.0, 0.0
        %v792 = vsel %vm536, 1.0, 0.0
        %v793 = vsel %vm537, 1.0, 0.0
        %v794 = vsel %vm538, 1.0, 0.0
        %v795 = vsel %vm539, 1.0, 0.0
        %v796 = vsel %vm540, 1.0, 0.0
        %v797 = vsel %vm541, 1.0, 0.0
        %v798 = vsel %vm542, 1.0, 0.0
        %v799 = vsel %vm543, 1.0, 0.0
        %v800 = vsel %vm544, 1.0, 0.0
        %v801 = vsel %vm545, 1.0, 0.0
        %v802 = vsel %vm546, 1.0, 0.0
        %v803 = vsel %vm547, 1.0, 0.0
        %v804 = vsel %vm548, 1.0, 0.0
        %v805 = vsel %vm549, 1.0, 0.0
        %v806 = vsel %vm550, 1.0, 0.0
        %v807 = vsel %vm551, 1.0, 0.0
        %v808 = vsel %vm552, 1.0, 0.0
        %v809 = vsel %vm553, 1.0, 0.0
        %v810 = vsel %vm554, 1.0, 0.0
        %v811 = vsel %vm555, 1.0, 0.0
        %v812 = vsel %vm556, 1.0, 0.0
        %v813 = vsel %vm557, 1.0, 0.0
        %v814 = vsel %vm558, 1.0, 0.0
        %v815 = vsel %vm559, 1.0, 0.0
        %v816 = vsel %vm560, 1.0, 0.0
        %v817 = vsel %vm561, 1.0, 0.0
        %v818 = vsel %vm562, 1.0, 0.0
        %v819 = vsel %vm563, 1.0, 0.0
        %v820 = vsel %vm564, 1.0, 0.0
        %v821 = vsel %vm565, 1.0, 0.0
        %v822 = vsel %vm566, 1.0, 0.0
        %v823 = vsel %vm567, 1.0, 0.0
        %v824 = vsel %vm568, 1.0, 0.0
        %v825 = vsel %vm569, 1.0, 0.0
        %v826 = vsel %vm570, 1.0, 0.0
        %v827 = vsel %vm571, 1.0, 0.0
        %v828 = vsel %vm572, 1.0, 0.0
        %v829 = vsel %vm573, 1.0, 0.0
        %v830 = vsel %vm574, 1.0, 0.0
        %v831 = vsel %vm575, 1.0, 0.0
        %v832 = vsel %vm576, 1.0, 0.0
        %v833 = vsel %vm577, 1.0, 0.0
        %v834 = vsel %vm578, 1.0, 0.0
        %v835 = vsel %vm579, 1.0, 0.0
        %v836 = vsel %vm580, 1.0, 0.0
        %v837 = vsel %vm581, 1.0, 0.0
        %v838 = vsel %vm582, 1.0, 0.0
        %v839 = vsel %vm583, 1.0, 0.0
        %v840 = vsel %vm584, 1.0, 0.0
        %v841 = vsel %vm585, 1.0, 0.0
        %v842 = vsel %vm586, 1.0, 0.0
        %v843 = vsel %vm587, 1.0, 0.0
        %v844 = vsel %vm588, 1.0, 0.0
        %v845 = vsel %vm589, 1.0, 0.0
        %v846 = vsel %vm590, 1.0, 0.0
        %v847 = vsel %vm591, 1.0, 0.0
        %v848 = vsel %vm592, 1.0, 0.0
        %v849 = vsel %vm593, 1.0, 0.0
        %v850 = vsel %vm594, 1.0, 0.0
        %v851 = vsel %vm595, 1.0, 0.0
        %v852 = vsel %vm596, 1.0, 0.0
        %v853 = vsel %vm597, 1.0, 0.0
        %v854 = vsel %vm598, 1.0, 0.0
        %v855 = vsel %vm599, 1.0, 0.0
        %v856 = vsel %vm600, 1.0, 0.0
        %v857 = vsel %vm601, 1.0, 0.0
        %v858 = vsel %vm602, 1.0, 0.0
        %v859 = vsel %vm603, 1.0, 0.0
        %v860 = vsel %vm604, 1.0, 0.0
        %v861 = vsel %vm605, 1.0, 0.0
        %v862 = vsel %vm606, 1.0, 0.0
        %v863 = vsel %vm607, 1.0, 0.0
        %v864 = vsel %vm608, 1.0, 0.0
        %v865 = vsel %vm609, 1.0, 0.0
        %v866 = vsel %vm610, 1.0, 0.0
        %v867 = vsel %vm611, 1.0, 0.0
        %v868 = vsel %vm612, 1.0, 0.0
        %v869 = vsel %vm613, 1.0, 0.0
        %v870 = vsel %vm614, 1.0, 0.0
        %v871 = vsel %vm615, 1.0, 0.0
        %v872 = vsel %vm616, 1.0, 0.0
        %v873 = vsel %vm617, 1.0, 0.0
        %v874 = vsel %vm618, 1.0, 0.0
        %v875 = vsel %vm619, 1.0, 0.0
        %v876 = vsel %vm620, 1.0, 0.0
        %v877 = vsel %vm621, 1.0, 0.0
        %v878 = vsel %vm622, 1.0, 0.0
        %v879 = vsel %vm623, 1.0, 0.0
        %v880 = vsel %vm624, 1.0, 0.0
        %v881 = vsel %vm625, 1.0, 0.0
        %v882 = vsel %vm626, 1.0, 0.0
        %v883 = vsel %vm627, 1.0, 0.0
        %v884 = vsel %vm628, 1.0, 0.0
        %v885 = vsel %vm629, 1.0, 0.0
        %v886 = vsel %vm630, 1.0, 0.0
        %v887 = vsel %vm631, 1.0, 0.0
        %v888 = vsel %vm632, 1.0, 0.0
        %v889 = vsel %vm633, 1.0, 0.0
        %v890 = vsel %vm634, 1.0, 0.0
        %v891 = vsel %vm635, 1.0, 0.0
        %v892 = vsel %vm636, 1.0, 0.0
        %v893 = vsel %vm637, 1.0, 0.0
        %v894 = vsel %vm638, 1.0, 0.0
        %v895 = vsel %vm639, 1.0, 0.0
        %v896 = vsel %vm640, 1.0, 0.0
        %v897 = vsel %vm641, 1.0, 0.0
        %v898 = vsel %vm642, 1.0, 0.0
        %v899 = vsel %vm643, 1.0, 0.0
        %v900 = vsel %vm644, 1.0, 0.0
        %v901 = vsel %vm645, 1.0, 0.0
        %v902 = vsel %vm646, 1.0, 0.0
        %v903 = vsel %vm647, 1.0, 0.0
        %v904 = vsel %vm648, 1.0, 0.0
        %v905 = vsel %vm649, 1.0, 0.0
        %v906 = vsel %vm650, 1.0, 0.0
        %v907 = vsel %vm651, 1.0, 0.0
        %v908 = vsel %vm652, 1.0, 0.0
        %v909 = vsel %vm653, 1.0, 0.0
        %v910 = vsel %vm654, 1.0, 0.0
        %v911 = vsel %vm655, 1.0, 0.0
        %v912 = vsel %vm656, 1.0, 0.0
        %v913 = vsel %vm657, 1.0, 0.0
        %v914 = vsel %vm658, 1.0, 0.0
        %v915 = vsel %vm659, 1.0, 0.0
        %v916 = vsel %vm660, 1.0, 0.0
        %v917 = vsel %vm661, 1.0, 0.0
        %v918 = vsel %vm662, 1.0, 0.0
        %v919 = vsel %vm663, 1.0, 0.0
        %v920 = vsel %vm664, 1.0, 0.0
        %v921 = vsel %vm665, 1.0, 0.0
        %v922 = vsel %vm666, 1.0, 0.0
        %v923 = vsel %vm667, 1.0, 0.0
        %v924 = vsel %vm668, 1.0, 0.0
        %v925 = vsel %vm669, 1.0, 0.0
        %v926 = vsel %vm670, 1.0, 0.0
        %v927 = vsel %vm671, 1.0, 0.0
        %v928 = vsel %vm672, 1.0, 0.0
        %v929 = vsel %vm673, 1.0, 0.0
        %v930 = vsel %vm674, 1.0, 0.0
        %v931 = vsel %vm675, 1.0, 0.0
        %v932 = vsel %vm676, 1.0, 0.0
        %v933 = vsel %vm677, 1.0, 0.0
        %v934 = vsel %vm678, 1.0, 0.0
        %v935 = vsel %vm679, 1.0, 0.0
        %v936 = vsel %vm680, 1.0, 0.0
        %v937 = vsel %vm681, 1.0, 0.0
        %v938 = vsel %vm682, 1.0, 0.0
        %v939 = vsel %vm683, 1.0, 0.0
        %v940 = vsel %vm684, 1.0, 0.0
        %v941 = vsel %vm685, 1.0, 0.0
        %v942 = vsel %vm686, 1.0, 0.0
        %v943 = vsel %vm687, 1.0, 0.0
        %v944 = vsel %vm688, 1.0, 0.0
        %v945 = vsel %vm689, 1.0, 0.0
        %v946 = vsel %vm690, 1.0, 0.0
        %v947 = vsel %vm691, 1.0, 0.0
        %v948 = vsel %vm692, 1.0, 0.0
        %v949 = vsel %vm693, 1.0, 0.0
        %v950 = vsel %vm694, 1.0, 0.0
        %v951 = vsel %vm695, 1.0, 0.0
        %v952 = vsel %vm696, 1.0, 0.0
        %v953 = vsel %vm697, 1.0, 0.0
        %v954 = vsel %vm698, 1.0, 0.0
        %v955 = vsel %vm699, 1.0, 0.0
        %v956 = vsel %vm700, 1.0, 0.0
        %v957 = vsel %vm701, 1.0, 0.0
        %v958 = vsel %vm702, 1.0, 0.0
        %v959 = vsel %vm703, 1.0, 0.0
        %v960 = vsel %vm704, 1.0, 0.0
        %v961 = vsel %vm705, 1.0, 0.0
        %v962 = vsel %vm706, 1.0, 0.0
        %v963 = vsel %vm707, 1.0, 0.0
        %v964 = vsel %vm708, 1.0, 0.0
        %v965 = vsel %vm709, 1.0, 0.0
        %v966 = vsel %vm710, 1.0, 0.0
        %v967 = vsel %vm711, 1.0, 0.0
        %v968 = vsel %vm712, 1.0, 0.0
        %v969 = vsel %vm713, 1.0, 0.0
        %v970 = vsel %vm714, 1.0, 0.0
        %v971 = vsel %vm715, 1.0, 0.0
        %v972 = vsel %vm716, 1.0, 0.0
        %v973 = vsel %vm717, 1.0, 0.0
        %v974 = vsel %vm718, 1.0, 0.0
        %v975 = vsel %vm719, 1.0, 0.0
        %v976 = vsel %vm720, 1.0, 0.0
        %v977 = vsel %vm721, 1.0, 0.0
        %v978 = vsel %vm722, 1.0, 0.0
        %v979 = vsel %vm723, 1.0, 0.0
        %v980 = vsel %vm724, 1.0, 0.0
        %v981 = vsel %vm725, 1.0, 0.0
        %v982 = vsel %vm726, 1.0, 0.0
        %v983 = vsel %vm727, 1.0, 0.0
        %v984 = vsel %vm728, 1.0, 0.0
        %v985 = vsel %vm729, 1.0, 0.0
        %v986 = vsel %vm730, 1.0, 0.0
        %v987 = vsel %vm731, 1.0, 0.0
        %v988 = vsel %vm732, 1.0, 0.0
        %v989 = vsel %vm733, 1.0, 0.0
        %v990 = vsel %vm734, 1.0, 0.0
        %v991 = vsel %vm735, 1.0, 0.0
        %v992 = vsel %vm736, 1.0, 0.0
        %v993 = vsel %vm737, 1.0, 0.0
        %v994 = vsel %vm738, 1.0, 0.0
        %v995 = vsel %vm739, 1.0, 0.0
        %v996 = vsel %vm740, 1.0, 0.0
        %v997 = vsel %vm741, 1.0, 0.0
        %v998 = vsel %vm742, 1.0, 0.0
        %v999 = vsel %vm743, 1.0, 0.0
        %v1000 = vsel %vm744, 1.0, 0.0
        %v1001 = vsel %vm745, 1.0, 0.0
        %v1002 = vsel %vm746, 1.0, 0.0
        %v1003 = vsel %vm747, 1.0, 0.0
        %v1004 = vsel %vm748, 1.0, 0.0
        %v1005 = vsel %vm749, 1.0, 0.0
        %v1006 = vsel %vm750, 1.0, 0.0
        %v1007 = vsel %vm751, 1.0, 0.0
        %v1008 = vsel %vm752, 1.0, 0.0
        %v1009 = vsel %vm753, 1.0, 0.0
        %v1010 = vsel %vm754, 1.0, 0.0
        %v1011 = vsel %vm755, 1.0, 0.0
        %v1012 = vsel %vm756, 1.0, 0.0
        %v1013 = vsel %vm757, 1.0, 0.0
        %v1014 = vsel %vm758, 1.0, 0.0
        %v1015 = vsel %vm759, 1.0, 0.0
        %v1016 = vsel %vm760, 1.0, 0.0
        %v1017 = vsel %vm761, 1.0, 0.0
        %v1018 = vsel %vm762, 1.0, 0.0
        %v1019 = vsel %vm763, 1.0, 0.0
        %v1020 = vsel %vm764, 1.0, 0.0
        %v1021 = vsel %vm765, 1.0, 0.0
        %v1022 = vsel %vm766, 1.0, 0.0
        %v1023 = vsel %vm767, 1.0, 0.0
        %v1024 = vsel %vm768, 1.0, 0.0
        %v1025 = vsel %vm769, 1.0, 0.0
        %1026 = vmax.xlane.f32.xlu0 %v770
        %v1027 = vpop.xlane.xlu0 %1026
        %1028 = vmax.xlane.f32.xlu0 %v771
        %v1029 = vpop.xlane.xlu0 %1028
        %1030 = vmax.xlane.f32.xlu0 %v772
        %v1031 = vpop.xlane.xlu0 %1030
        %1032 = vmax.xlane.f32.xlu0 %v773
        %v1033 = vpop.xlane.xlu0 %1032
        %1034 = vmax.xlane.f32.xlu0 %v774
        %v1035 = vpop.xlane.xlu0 %1034
        %1036 = vmax.xlane.f32.xlu0 %v775
        %v1037 = vpop.xlane.xlu0 %1036
        %1038 = vmax.xlane.f32.xlu0 %v776
        %v1039 = vpop.xlane.xlu0 %1038
        %1040 = vmax.xlane.f32.xlu0 %v777
        %v1041 = vpop.xlane.xlu0 %1040
        %1042 = vmax.xlane.f32.xlu0 %v778
        %v1043 = vpop.xlane.xlu0 %1042
        %1044 = vmax.xlane.f32.xlu0 %v779
        %v1045 = vpop.xlane.xlu0 %1044
        %1046 = vmax.xlane.f32.xlu0 %v780
        %v1047 = vpop.xlane.xlu0 %1046
        %1048 = vmax.xlane.f32.xlu0 %v781
        %v1049 = vpop.xlane.xlu0 %1048
        %1050 = vmax.xlane.f32.xlu0 %v782
        %v1051 = vpop.xlane.xlu0 %1050
        %1052 = vmax.xlane.f32.xlu0 %v783
        %v1053 = vpop.xlane.xlu0 %1052
        %1054 = vmax.xlane.f32.xlu0 %v784
        %v1055 = vpop.xlane.xlu0 %1054
        %1056 = vmax.xlane.f32.xlu0 %v785
        %v1057 = vpop.xlane.xlu0 %1056
        %1058 = vmax.xlane.f32.xlu0 %v786
        %v1059 = vpop.xlane.xlu0 %1058
        %1060 = vmax.xlane.f32.xlu0 %v787
        %v1061 = vpop.xlane.xlu0 %1060
        %1062 = vmax.xlane.f32.xlu0 %v788
        %v1063 = vpop.xlane.xlu0 %1062
        %1064 = vmax.xlane.f32.xlu0 %v789
        %v1065 = vpop.xlane.xlu0 %1064
        %1066 = vmax.xlane.f32.xlu0 %v790
        %v1067 = vpop.xlane.xlu0 %1066
        %1068 = vmax.xlane.f32.xlu0 %v791
        %v1069 = vpop.xlane.xlu0 %1068
        %1070 = vmax.xlane.f32.xlu0 %v792
        %v1071 = vpop.xlane.xlu0 %1070
        %1072 = vmax.xlane.f32.xlu0 %v793
        %v1073 = vpop.xlane.xlu0 %1072
        %1074 = vmax.xlane.f32.xlu0 %v794
        %v1075 = vpop.xlane.xlu0 %1074
        %1076 = vmax.xlane.f32.xlu0 %v795
        %v1077 = vpop.xlane.xlu0 %1076
        %1078 = vmax.xlane.f32.xlu0 %v796
        %v1079 = vpop.xlane.xlu0 %1078
        %1080 = vmax.xlane.f32.xlu0 %v797
        %v1081 = vpop.xlane.xlu0 %1080
        %1082 = vmax.xlane.f32.xlu0 %v798
        %v1083 = vpop.xlane.xlu0 %1082
        %1084 = vmax.xlane.f32.xlu0 %v799
        %v1085 = vpop.xlane.xlu0 %1084
        %1086 = vmax.xlane.f32.xlu0 %v800
        %v1087 = vpop.xlane.xlu0 %1086
        %1088 = vmax.xlane.f32.xlu0 %v801
        %v1089 = vpop.xlane.xlu0 %1088
        %1090 = vmax.xlane.f32.xlu0 %v802
        %v1091 = vpop.xlane.xlu0 %1090
        %1092 = vmax.xlane.f32.xlu0 %v803
        %v1093 = vpop.xlane.xlu0 %1092
        %1094 = vmax.xlane.f32.xlu0 %v804
        %v1095 = vpop.xlane.xlu0 %1094
        %1096 = vmax.xlane.f32.xlu0 %v805
        %v1097 = vpop.xlane.xlu0 %1096
        %1098 = vmax.xlane.f32.xlu0 %v806
        %v1099 = vpop.xlane.xlu0 %1098
        %1100 = vmax.xlane.f32.xlu0 %v807
        %v1101 = vpop.xlane.xlu0 %1100
        %1102 = vmax.xlane.f32.xlu0 %v808
        %v1103 = vpop.xlane.xlu0 %1102
        %1104 = vmax.xlane.f32.xlu0 %v809
        %v1105 = vpop.xlane.xlu0 %1104
        %1106 = vmax.xlane.f32.xlu0 %v810
        %v1107 = vpop.xlane.xlu0 %1106
        %1108 = vmax.xlane.f32.xlu0 %v811
        %v1109 = vpop.xlane.xlu0 %1108
        %1110 = vmax.xlane.f32.xlu0 %v812
        %v1111 = vpop.xlane.xlu0 %1110
        %1112 = vmax.xlane.f32.xlu0 %v813
        %v1113 = vpop.xlane.xlu0 %1112
        %1114 = vmax.xlane.f32.xlu0 %v814
        %v1115 = vpop.xlane.xlu0 %1114
        %1116 = vmax.xlane.f32.xlu0 %v815
        %v1117 = vpop.xlane.xlu0 %1116
        %1118 = vmax.xlane.f32.xlu0 %v816
        %v1119 = vpop.xlane.xlu0 %1118
        %1120 = vmax.xlane.f32.xlu0 %v817
        %v1121 = vpop.xlane.xlu0 %1120
        %1122 = vmax.xlane.f32.xlu0 %v818
        %v1123 = vpop.xlane.xlu0 %1122
        %1124 = vmax.xlane.f32.xlu0 %v819
        %v1125 = vpop.xlane.xlu0 %1124
        %1126 = vmax.xlane.f32.xlu0 %v820
        %v1127 = vpop.xlane.xlu0 %1126
        %1128 = vmax.xlane.f32.xlu0 %v821
        %v1129 = vpop.xlane.xlu0 %1128
        %1130 = vmax.xlane.f32.xlu0 %v822
        %v1131 = vpop.xlane.xlu0 %1130
        %1132 = vmax.xlane.f32.xlu0 %v823
        %v1133 = vpop.xlane.xlu0 %1132
        %1134 = vmax.xlane.f32.xlu0 %v824
        %v1135 = vpop.xlane.xlu0 %1134
        %1136 = vmax.xlane.f32.xlu0 %v825
        %v1137 = vpop.xlane.xlu0 %1136
        %1138 = vmax.xlane.f32.xlu0 %v826
        %v1139 = vpop.xlane.xlu0 %1138
        %1140 = vmax.xlane.f32.xlu0 %v827
        %v1141 = vpop.xlane.xlu0 %1140
        %1142 = vmax.xlane.f32.xlu0 %v828
        %v1143 = vpop.xlane.xlu0 %1142
        %1144 = vmax.xlane.f32.xlu0 %v829
        %v1145 = vpop.xlane.xlu0 %1144
        %1146 = vmax.xlane.f32.xlu0 %v830
        %v1147 = vpop.xlane.xlu0 %1146
        %1148 = vmax.xlane.f32.xlu0 %v831
        %v1149 = vpop.xlane.xlu0 %1148
        %1150 = vmax.xlane.f32.xlu0 %v832
        %v1151 = vpop.xlane.xlu0 %1150
        %1152 = vmax.xlane.f32.xlu0 %v833
        %v1153 = vpop.xlane.xlu0 %1152
        %1154 = vmax.xlane.f32.xlu0 %v834
        %v1155 = vpop.xlane.xlu0 %1154
        %1156 = vmax.xlane.f32.xlu0 %v835
        %v1157 = vpop.xlane.xlu0 %1156
        %1158 = vmax.xlane.f32.xlu0 %v836
        %v1159 = vpop.xlane.xlu0 %1158
        %1160 = vmax.xlane.f32.xlu0 %v837
        %v1161 = vpop.xlane.xlu0 %1160
        %1162 = vmax.xlane.f32.xlu0 %v838
        %v1163 = vpop.xlane.xlu0 %1162
        %1164 = vmax.xlane.f32.xlu0 %v839
        %v1165 = vpop.xlane.xlu0 %1164
        %1166 = vmax.xlane.f32.xlu0 %v840
        %v1167 = vpop.xlane.xlu0 %1166
        %1168 = vmax.xlane.f32.xlu0 %v841
        %v1169 = vpop.xlane.xlu0 %1168
        %1170 = vmax.xlane.f32.xlu0 %v842
        %v1171 = vpop.xlane.xlu0 %1170
        %1172 = vmax.xlane.f32.xlu0 %v843
        %v1173 = vpop.xlane.xlu0 %1172
        %1174 = vmax.xlane.f32.xlu0 %v844
        %v1175 = vpop.xlane.xlu0 %1174
        %1176 = vmax.xlane.f32.xlu0 %v845
        %v1177 = vpop.xlane.xlu0 %1176
        %1178 = vmax.xlane.f32.xlu0 %v846
        %v1179 = vpop.xlane.xlu0 %1178
        %1180 = vmax.xlane.f32.xlu0 %v847
        %v1181 = vpop.xlane.xlu0 %1180
        %1182 = vmax.xlane.f32.xlu0 %v848
        %v1183 = vpop.xlane.xlu0 %1182
        %1184 = vmax.xlane.f32.xlu0 %v849
        %v1185 = vpop.xlane.xlu0 %1184
        %1186 = vmax.xlane.f32.xlu0 %v850
        %v1187 = vpop.xlane.xlu0 %1186
        %1188 = vmax.xlane.f32.xlu0 %v851
        %v1189 = vpop.xlane.xlu0 %1188
        %1190 = vmax.xlane.f32.xlu0 %v852
        %v1191 = vpop.xlane.xlu0 %1190
        %1192 = vmax.xlane.f32.xlu0 %v853
        %v1193 = vpop.xlane.xlu0 %1192
        %1194 = vmax.xlane.f32.xlu0 %v854
        %v1195 = vpop.xlane.xlu0 %1194
        %1196 = vmax.xlane.f32.xlu0 %v855
        %v1197 = vpop.xlane.xlu0 %1196
        %1198 = vmax.xlane.f32.xlu0 %v856
        %v1199 = vpop.xlane.xlu0 %1198
        %1200 = vmax.xlane.f32.xlu0 %v857
        %v1201 = vpop.xlane.xlu0 %1200
        %1202 = vmax.xlane.f32.xlu0 %v858
        %v1203 = vpop.xlane.xlu0 %1202
        %1204 = vmax.xlane.f32.xlu0 %v859
        %v1205 = vpop.xlane.xlu0 %1204
        %1206 = vmax.xlane.f32.xlu0 %v860
        %v1207 = vpop.xlane.xlu0 %1206
        %1208 = vmax.xlane.f32.xlu0 %v861
        %v1209 = vpop.xlane.xlu0 %1208
        %1210 = vmax.xlane.f32.xlu0 %v862
        %v1211 = vpop.xlane.xlu0 %1210
        %1212 = vmax.xlane.f32.xlu0 %v863
        %v1213 = vpop.xlane.xlu0 %1212
        %1214 = vmax.xlane.f32.xlu0 %v864
        %v1215 = vpop.xlane.xlu0 %1214
        %1216 = vmax.xlane.f32.xlu0 %v865
        %v1217 = vpop.xlane.xlu0 %1216
        %1218 = vmax.xlane.f32.xlu0 %v866
        %v1219 = vpop.xlane.xlu0 %1218
        %1220 = vmax.xlane.f32.xlu0 %v867
        %v1221 = vpop.xlane.xlu0 %1220
        %1222 = vmax.xlane.f32.xlu0 %v868
        %v1223 = vpop.xlane.xlu0 %1222
        %1224 = vmax.xlane.f32.xlu0 %v869
        %v1225 = vpop.xlane.xlu0 %1224
        %1226 = vmax.xlane.f32.xlu0 %v870
        %v1227 = vpop.xlane.xlu0 %1226
        %1228 = vmax.xlane.f32.xlu0 %v871
        %v1229 = vpop.xlane.xlu0 %1228
        %1230 = vmax.xlane.f32.xlu0 %v872
        %v1231 = vpop.xlane.xlu0 %1230
        %1232 = vmax.xlane.f32.xlu0 %v873
        %v1233 = vpop.xlane.xlu0 %1232
        %1234 = vmax.xlane.f32.xlu0 %v874
        %v1235 = vpop.xlane.xlu0 %1234
        %1236 = vmax.xlane.f32.xlu0 %v875
        %v1237 = vpop.xlane.xlu0 %1236
        %1238 = vmax.xlane.f32.xlu0 %v876
        %v1239 = vpop.xlane.xlu0 %1238
        %1240 = vmax.xlane.f32.xlu0 %v877
        %v1241 = vpop.xlane.xlu0 %1240
        %1242 = vmax.xlane.f32.xlu0 %v878
        %v1243 = vpop.xlane.xlu0 %1242
        %1244 = vmax.xlane.f32.xlu0 %v879
        %v1245 = vpop.xlane.xlu0 %1244
        %1246 = vmax.xlane.f32.xlu0 %v880
        %v1247 = vpop.xlane.xlu0 %1246
        %1248 = vmax.xlane.f32.xlu0 %v881
        %v1249 = vpop.xlane.xlu0 %1248
        %1250 = vmax.xlane.f32.xlu0 %v882
        %v1251 = vpop.xlane.xlu0 %1250
        %1252 = vmax.xlane.f32.xlu0 %v883
        %v1253 = vpop.xlane.xlu0 %1252
        %1254 = vmax.xlane.f32.xlu0 %v884
        %v1255 = vpop.xlane.xlu0 %1254
        %1256 = vmax.xlane.f32.xlu0 %v885
        %v1257 = vpop.xlane.xlu0 %1256
        %1258 = vmax.xlane.f32.xlu0 %v886
        %v1259 = vpop.xlane.xlu0 %1258
        %1260 = vmax.xlane.f32.xlu0 %v887
        %v1261 = vpop.xlane.xlu0 %1260
        %1262 = vmax.xlane.f32.xlu0 %v888
        %v1263 = vpop.xlane.xlu0 %1262
        %1264 = vmax.xlane.f32.xlu0 %v889
        %v1265 = vpop.xlane.xlu0 %1264
        %1266 = vmax.xlane.f32.xlu0 %v890
        %v1267 = vpop.xlane.xlu0 %1266
        %1268 = vmax.xlane.f32.xlu0 %v891
        %v1269 = vpop.xlane.xlu0 %1268
        %1270 = vmax.xlane.f32.xlu0 %v892
        %v1271 = vpop.xlane.xlu0 %1270
        %1272 = vmax.xlane.f32.xlu0 %v893
        %v1273 = vpop.xlane.xlu0 %1272
        %1274 = vmax.xlane.f32.xlu0 %v894
        %v1275 = vpop.xlane.xlu0 %1274
        %1276 = vmax.xlane.f32.xlu0 %v895
        %v1277 = vpop.xlane.xlu0 %1276
        %1278 = vmax.xlane.f32.xlu0 %v896
        %v1279 = vpop.xlane.xlu0 %1278
        %1280 = vmax.xlane.f32.xlu0 %v897
        %v1281 = vpop.xlane.xlu0 %1280
        %1282 = vmax.xlane.f32.xlu0 %v898
        %v1283 = vpop.xlane.xlu0 %1282
        %1284 = vmax.xlane.f32.xlu0 %v899
        %v1285 = vpop.xlane.xlu0 %1284
        %1286 = vmax.xlane.f32.xlu0 %v900
        %v1287 = vpop.xlane.xlu0 %1286
        %1288 = vmax.xlane.f32.xlu0 %v901
        %v1289 = vpop.xlane.xlu0 %1288
        %1290 = vmax.xlane.f32.xlu0 %v902
        %v1291 = vpop.xlane.xlu0 %1290
        %1292 = vmax.xlane.f32.xlu0 %v903
        %v1293 = vpop.xlane.xlu0 %1292
        %1294 = vmax.xlane.f32.xlu0 %v904
        %v1295 = vpop.xlane.xlu0 %1294
        %1296 = vmax.xlane.f32.xlu0 %v905
        %v1297 = vpop.xlane.xlu0 %1296
        %1298 = vmax.xlane.f32.xlu0 %v906
        %v1299 = vpop.xlane.xlu0 %1298
        %1300 = vmax.xlane.f32.xlu0 %v907
        %v1301 = vpop.xlane.xlu0 %1300
        %1302 = vmax.xlane.f32.xlu0 %v908
        %v1303 = vpop.xlane.xlu0 %1302
        %1304 = vmax.xlane.f32.xlu0 %v909
        %v1305 = vpop.xlane.xlu0 %1304
        %1306 = vmax.xlane.f32.xlu0 %v910
        %v1307 = vpop.xlane.xlu0 %1306
        %1308 = vmax.xlane.f32.xlu0 %v911
        %v1309 = vpop.xlane.xlu0 %1308
        %1310 = vmax.xlane.f32.xlu0 %v912
        %v1311 = vpop.xlane.xlu0 %1310
        %1312 = vmax.xlane.f32.xlu0 %v913
        %v1313 = vpop.xlane.xlu0 %1312
        %1314 = vmax.xlane.f32.xlu0 %v914
        %v1315 = vpop.xlane.xlu0 %1314
        %1316 = vmax.xlane.f32.xlu0 %v915
        %v1317 = vpop.xlane.xlu0 %1316
        %1318 = vmax.xlane.f32.xlu0 %v916
        %v1319 = vpop.xlane.xlu0 %1318
        %1320 = vmax.xlane.f32.xlu0 %v917
        %v1321 = vpop.xlane.xlu0 %1320
        %1322 = vmax.xlane.f32.xlu0 %v918
        %v1323 = vpop.xlane.xlu0 %1322
        %1324 = vmax.xlane.f32.xlu0 %v919
        %v1325 = vpop.xlane.xlu0 %1324
        %1326 = vmax.xlane.f32.xlu0 %v920
        %v1327 = vpop.xlane.xlu0 %1326
        %1328 = vmax.xlane.f32.xlu0 %v921
        %v1329 = vpop.xlane.xlu0 %1328
        %1330 = vmax.xlane.f32.xlu0 %v922
        %v1331 = vpop.xlane.xlu0 %1330
        %1332 = vmax.xlane.f32.xlu0 %v923
        %v1333 = vpop.xlane.xlu0 %1332
        %1334 = vmax.xlane.f32.xlu0 %v924
        %v1335 = vpop.xlane.xlu0 %1334
        %1336 = vmax.xlane.f32.xlu0 %v925
        %v1337 = vpop.xlane.xlu0 %1336
        %1338 = vmax.xlane.f32.xlu0 %v926
        %v1339 = vpop.xlane.xlu0 %1338
        %1340 = vmax.xlane.f32.xlu0 %v927
        %v1341 = vpop.xlane.xlu0 %1340
        %1342 = vmax.xlane.f32.xlu0 %v928
        %v1343 = vpop.xlane.xlu0 %1342
        %1344 = vmax.xlane.f32.xlu0 %v929
        %v1345 = vpop.xlane.xlu0 %1344
        %1346 = vmax.xlane.f32.xlu0 %v930
        %v1347 = vpop.xlane.xlu0 %1346
        %1348 = vmax.xlane.f32.xlu0 %v931
        %v1349 = vpop.xlane.xlu0 %1348
        %1350 = vmax.xlane.f32.xlu0 %v932
        %v1351 = vpop.xlane.xlu0 %1350
        %1352 = vmax.xlane.f32.xlu0 %v933
        %v1353 = vpop.xlane.xlu0 %1352
        %1354 = vmax.xlane.f32.xlu0 %v934
        %v1355 = vpop.xlane.xlu0 %1354
        %1356 = vmax.xlane.f32.xlu0 %v935
        %v1357 = vpop.xlane.xlu0 %1356
        %1358 = vmax.xlane.f32.xlu0 %v936
        %v1359 = vpop.xlane.xlu0 %1358
        %1360 = vmax.xlane.f32.xlu0 %v937
        %v1361 = vpop.xlane.xlu0 %1360
        %1362 = vmax.xlane.f32.xlu0 %v938
        %v1363 = vpop.xlane.xlu0 %1362
        %1364 = vmax.xlane.f32.xlu0 %v939
        %v1365 = vpop.xlane.xlu0 %1364
        %1366 = vmax.xlane.f32.xlu0 %v940
        %v1367 = vpop.xlane.xlu0 %1366
        %1368 = vmax.xlane.f32.xlu0 %v941
        %v1369 = vpop.xlane.xlu0 %1368
        %1370 = vmax.xlane.f32.xlu0 %v942
        %v1371 = vpop.xlane.xlu0 %1370
        %1372 = vmax.xlane.f32.xlu0 %v943
        %v1373 = vpop.xlane.xlu0 %1372
        %1374 = vmax.xlane.f32.xlu0 %v944
        %v1375 = vpop.xlane.xlu0 %1374
        %1376 = vmax.xlane.f32.xlu0 %v945
        %v1377 = vpop.xlane.xlu0 %1376
        %1378 = vmax.xlane.f32.xlu0 %v946
        %v1379 = vpop.xlane.xlu0 %1378
        %1380 = vmax.xlane.f32.xlu0 %v947
        %v1381 = vpop.xlane.xlu0 %1380
        %1382 = vmax.xlane.f32.xlu0 %v948
        %v1383 = vpop.xlane.xlu0 %1382
        %1384 = vmax.xlane.f32.xlu0 %v949
        %v1385 = vpop.xlane.xlu0 %1384
        %1386 = vmax.xlane.f32.xlu0 %v950
        %v1387 = vpop.xlane.xlu0 %1386
        %1388 = vmax.xlane.f32.xlu0 %v951
        %v1389 = vpop.xlane.xlu0 %1388
        %1390 = vmax.xlane.f32.xlu0 %v952
        %v1391 = vpop.xlane.xlu0 %1390
        %1392 = vmax.xlane.f32.xlu0 %v953
        %v1393 = vpop.xlane.xlu0 %1392
        %1394 = vmax.xlane.f32.xlu0 %v954
        %v1395 = vpop.xlane.xlu0 %1394
        %1396 = vmax.xlane.f32.xlu0 %v955
        %v1397 = vpop.xlane.xlu0 %1396
        %1398 = vmax.xlane.f32.xlu0 %v956
        %v1399 = vpop.xlane.xlu0 %1398
        %1400 = vmax.xlane.f32.xlu0 %v957
        %v1401 = vpop.xlane.xlu0 %1400
        %1402 = vmax.xlane.f32.xlu0 %v958
        %v1403 = vpop.xlane.xlu0 %1402
        %1404 = vmax.xlane.f32.xlu0 %v959
        %v1405 = vpop.xlane.xlu0 %1404
        %1406 = vmax.xlane.f32.xlu0 %v960
        %v1407 = vpop.xlane.xlu0 %1406
        %1408 = vmax.xlane.f32.xlu0 %v961
        %v1409 = vpop.xlane.xlu0 %1408
        %1410 = vmax.xlane.f32.xlu0 %v962
        %v1411 = vpop.xlane.xlu0 %1410
        %1412 = vmax.xlane.f32.xlu0 %v963
        %v1413 = vpop.xlane.xlu0 %1412
        %1414 = vmax.xlane.f32.xlu0 %v964
        %v1415 = vpop.xlane.xlu0 %1414
        %1416 = vmax.xlane.f32.xlu0 %v965
        %v1417 = vpop.xlane.xlu0 %1416
        %1418 = vmax.xlane.f32.xlu0 %v966
        %v1419 = vpop.xlane.xlu0 %1418
        %1420 = vmax.xlane.f32.xlu0 %v967
        %v1421 = vpop.xlane.xlu0 %1420
        %1422 = vmax.xlane.f32.xlu0 %v968
        %v1423 = vpop.xlane.xlu0 %1422
        %1424 = vmax.xlane.f32.xlu0 %v969
        %v1425 = vpop.xlane.xlu0 %1424
        %1426 = vmax.xlane.f32.xlu0 %v970
        %v1427 = vpop.xlane.xlu0 %1426
        %1428 = vmax.xlane.f32.xlu0 %v971
        %v1429 = vpop.xlane.xlu0 %1428
        %1430 = vmax.xlane.f32.xlu0 %v972
        %v1431 = vpop.xlane.xlu0 %1430
        %1432 = vmax.xlane.f32.xlu0 %v973
        %v1433 = vpop.xlane.xlu0 %1432
        %1434 = vmax.xlane.f32.xlu0 %v974
        %v1435 = vpop.xlane.xlu0 %1434
        %1436 = vmax.xlane.f32.xlu0 %v975
        %v1437 = vpop.xlane.xlu0 %1436
        %1438 = vmax.xlane.f32.xlu0 %v976
        %v1439 = vpop.xlane.xlu0 %1438
        %1440 = vmax.xlane.f32.xlu0 %v977
        %v1441 = vpop.xlane.xlu0 %1440
        %1442 = vmax.xlane.f32.xlu0 %v978
        %v1443 = vpop.xlane.xlu0 %1442
        %1444 = vmax.xlane.f32.xlu0 %v979
        %v1445 = vpop.xlane.xlu0 %1444
        %1446 = vmax.xlane.f32.xlu0 %v980
        %v1447 = vpop.xlane.xlu0 %1446
        %1448 = vmax.xlane.f32.xlu0 %v981
        %v1449 = vpop.xlane.xlu0 %1448
        %1450 = vmax.xlane.f32.xlu0 %v982
        %v1451 = vpop.xlane.xlu0 %1450
        %1452 = vmax.xlane.f32.xlu0 %v983
        %v1453 = vpop.xlane.xlu0 %1452
        %1454 = vmax.xlane.f32.xlu0 %v984
        %v1455 = vpop.xlane.xlu0 %1454
        %1456 = vmax.xlane.f32.xlu0 %v985
        %v1457 = vpop.xlane.xlu0 %1456
        %1458 = vmax.xlane.f32.xlu0 %v986
        %v1459 = vpop.xlane.xlu0 %1458
        %1460 = vmax.xlane.f32.xlu0 %v987
        %v1461 = vpop.xlane.xlu0 %1460
        %1462 = vmax.xlane.f32.xlu0 %v988
        %v1463 = vpop.xlane.xlu0 %1462
        %1464 = vmax.xlane.f32.xlu0 %v989
        %v1465 = vpop.xlane.xlu0 %1464
        %1466 = vmax.xlane.f32.xlu0 %v990
        %v1467 = vpop.xlane.xlu0 %1466
        %1468 = vmax.xlane.f32.xlu0 %v991
        %v1469 = vpop.xlane.xlu0 %1468
        %1470 = vmax.xlane.f32.xlu0 %v992
        %v1471 = vpop.xlane.xlu0 %1470
        %1472 = vmax.xlane.f32.xlu0 %v993
        %v1473 = vpop.xlane.xlu0 %1472
        %1474 = vmax.xlane.f32.xlu0 %v994
        %v1475 = vpop.xlane.xlu0 %1474
        %1476 = vmax.xlane.f32.xlu0 %v995
        %v1477 = vpop.xlane.xlu0 %1476
        %1478 = vmax.xlane.f32.xlu0 %v996
        %v1479 = vpop.xlane.xlu0 %1478
        %1480 = vmax.xlane.f32.xlu0 %v997
        %v1481 = vpop.xlane.xlu0 %1480
        %1482 = vmax.xlane.f32.xlu0 %v998
        %v1483 = vpop.xlane.xlu0 %1482
        %1484 = vmax.xlane.f32.xlu0 %v999
        %v1485 = vpop.xlane.xlu0 %1484
        %1486 = vmax.xlane.f32.xlu0 %v1000
        %v1487 = vpop.xlane.xlu0 %1486
        %1488 = vmax.xlane.f32.xlu0 %v1001
        %v1489 = vpop.xlane.xlu0 %1488
        %1490 = vmax.xlane.f32.xlu0 %v1002
        %v1491 = vpop.xlane.xlu0 %1490
        %1492 = vmax.xlane.f32.xlu0 %v1003
        %v1493 = vpop.xlane.xlu0 %1492
        %1494 = vmax.xlane.f32.xlu0 %v1004
        %v1495 = vpop.xlane.xlu0 %1494
        %1496 = vmax.xlane.f32.xlu0 %v1005
        %v1497 = vpop.xlane.xlu0 %1496
        %1498 = vmax.xlane.f32.xlu0 %v1006
        %v1499 = vpop.xlane.xlu0 %1498
        %1500 = vmax.xlane.f32.xlu0 %v1007
        %v1501 = vpop.xlane.xlu0 %1500
        %1502 = vmax.xlane.f32.xlu0 %v1008
        %v1503 = vpop.xlane.xlu0 %1502
        %1504 = vmax.xlane.f32.xlu0 %v1009
        %v1505 = vpop.xlane.xlu0 %1504
        %1506 = vmax.xlane.f32.xlu0 %v1010
        %v1507 = vpop.xlane.xlu0 %1506
        %1508 = vmax.xlane.f32.xlu0 %v1011
        %v1509 = vpop.xlane.xlu0 %1508
        %1510 = vmax.xlane.f32.xlu0 %v1012
        %v1511 = vpop.xlane.xlu0 %1510
        %1512 = vmax.xlane.f32.xlu0 %v1013
        %v1513 = vpop.xlane.xlu0 %1512
        %1514 = vmax.xlane.f32.xlu0 %v1014
        %v1515 = vpop.xlane.xlu0 %1514
        %1516 = vmax.xlane.f32.xlu0 %v1015
        %v1517 = vpop.xlane.xlu0 %1516
        %1518 = vmax.xlane.f32.xlu0 %v1016
        %v1519 = vpop.xlane.xlu0 %1518
        %1520 = vmax.xlane.f32.xlu0 %v1017
        %v1521 = vpop.xlane.xlu0 %1520
        %1522 = vmax.xlane.f32.xlu0 %v1018
        %v1523 = vpop.xlane.xlu0 %1522
        %1524 = vmax.xlane.f32.xlu0 %v1019
        %v1525 = vpop.xlane.xlu0 %1524
        %1526 = vmax.xlane.f32.xlu0 %v1020
        %v1527 = vpop.xlane.xlu0 %1526
        %1528 = vmax.xlane.f32.xlu0 %v1021
        %v1529 = vpop.xlane.xlu0 %1528
        %1530 = vmax.xlane.f32.xlu0 %v1022
        %v1531 = vpop.xlane.xlu0 %1530
        %1532 = vmax.xlane.f32.xlu0 %v1023
        %v1533 = vpop.xlane.xlu0 %1532
        %1534 = vmax.xlane.f32.xlu0 %v1024
        %v1535 = vpop.xlane.xlu0 %1534
        %1536 = vmax.xlane.f32.xlu0 %v1025
        %v1537 = vpop.xlane.xlu0 %1536
        %vm1538 = vcmp.gt.f32.partialorder %v1027, 0.0
        %vm1539 = vcmp.gt.f32.partialorder %v1029, 0.0
        %vm1540 = vcmp.gt.f32.partialorder %v1031, 0.0
        %vm1541 = vcmp.gt.f32.partialorder %v1033, 0.0
        %vm1542 = vcmp.gt.f32.partialorder %v1035, 0.0
        %vm1543 = vcmp.gt.f32.partialorder %v1037, 0.0
        %vm1544 = vcmp.gt.f32.partialorder %v1039, 0.0
        %vm1545 = vcmp.gt.f32.partialorder %v1041, 0.0
        %vm1546 = vcmp.gt.f32.partialorder %v1043, 0.0
        %vm1547 = vcmp.gt.f32.partialorder %v1045, 0.0
        %vm1548 = vcmp.gt.f32.partialorder %v1047, 0.0
        %vm1549 = vcmp.gt.f32.partialorder %v1049, 0.0
        %vm1550 = vcmp.gt.f32.partialorder %v1051, 0.0
        %vm1551 = vcmp.gt.f32.partialorder %v1053, 0.0
        %vm1552 = vcmp.gt.f32.partialorder %v1055, 0.0
        %vm1553 = vcmp.gt.f32.partialorder %v1057, 0.0
        %vm1554 = vcmp.gt.f32.partialorder %v1059, 0.0
        %vm1555 = vcmp.gt.f32.partialorder %v1061, 0.0
        %vm1556 = vcmp.gt.f32.partialorder %v1063, 0.0
        %vm1557 = vcmp.gt.f32.partialorder %v1065, 0.0
        %vm1558 = vcmp.gt.f32.partialorder %v1067, 0.0
        %vm1559 = vcmp.gt.f32.partialorder %v1069, 0.0
        %vm1560 = vcmp.gt.f32.partialorder %v1071, 0.0
        %vm1561 = vcmp.gt.f32.partialorder %v1073, 0.0
        %vm1562 = vcmp.gt.f32.partialorder %v1075, 0.0
        %vm1563 = vcmp.gt.f32.partialorder %v1077, 0.0
        %vm1564 = vcmp.gt.f32.partialorder %v1079, 0.0
        %vm1565 = vcmp.gt.f32.partialorder %v1081, 0.0
        %vm1566 = vcmp.gt.f32.partialorder %v1083, 0.0
        %vm1567 = vcmp.gt.f32.partialorder %v1085, 0.0
        %vm1568 = vcmp.gt.f32.partialorder %v1087, 0.0
        %vm1569 = vcmp.gt.f32.partialorder %v1089, 0.0
        %vm1570 = vcmp.gt.f32.partialorder %v1091, 0.0
        %vm1571 = vcmp.gt.f32.partialorder %v1093, 0.0
        %vm1572 = vcmp.gt.f32.partialorder %v1095, 0.0
        %vm1573 = vcmp.gt.f32.partialorder %v1097, 0.0
        %vm1574 = vcmp.gt.f32.partialorder %v1099, 0.0
        %vm1575 = vcmp.gt.f32.partialorder %v1101, 0.0
        %vm1576 = vcmp.gt.f32.partialorder %v1103, 0.0
        %vm1577 = vcmp.gt.f32.partialorder %v1105, 0.0
        %vm1578 = vcmp.gt.f32.partialorder %v1107, 0.0
        %vm1579 = vcmp.gt.f32.partialorder %v1109, 0.0
        %vm1580 = vcmp.gt.f32.partialorder %v1111, 0.0
        %vm1581 = vcmp.gt.f32.partialorder %v1113, 0.0
        %vm1582 = vcmp.gt.f32.partialorder %v1115, 0.0
        %vm1583 = vcmp.gt.f32.partialorder %v1117, 0.0
        %vm1584 = vcmp.gt.f32.partialorder %v1119, 0.0
        %vm1585 = vcmp.gt.f32.partialorder %v1121, 0.0
        %vm1586 = vcmp.gt.f32.partialorder %v1123, 0.0
        %vm1587 = vcmp.gt.f32.partialorder %v1125, 0.0
        %vm1588 = vcmp.gt.f32.partialorder %v1127, 0.0
        %vm1589 = vcmp.gt.f32.partialorder %v1129, 0.0
        %vm1590 = vcmp.gt.f32.partialorder %v1131, 0.0
        %vm1591 = vcmp.gt.f32.partialorder %v1133, 0.0
        %vm1592 = vcmp.gt.f32.partialorder %v1135, 0.0
        %vm1593 = vcmp.gt.f32.partialorder %v1137, 0.0
        %vm1594 = vcmp.gt.f32.partialorder %v1139, 0.0
        %vm1595 = vcmp.gt.f32.partialorder %v1141, 0.0
        %vm1596 = vcmp.gt.f32.partialorder %v1143, 0.0
        %vm1597 = vcmp.gt.f32.partialorder %v1145, 0.0
        %vm1598 = vcmp.gt.f32.partialorder %v1147, 0.0
        %vm1599 = vcmp.gt.f32.partialorder %v1149, 0.0
        %vm1600 = vcmp.gt.f32.partialorder %v1151, 0.0
        %vm1601 = vcmp.gt.f32.partialorder %v1153, 0.0
        %vm1602 = vcmp.gt.f32.partialorder %v1155, 0.0
        %vm1603 = vcmp.gt.f32.partialorder %v1157, 0.0
        %vm1604 = vcmp.gt.f32.partialorder %v1159, 0.0
        %vm1605 = vcmp.gt.f32.partialorder %v1161, 0.0
        %vm1606 = vcmp.gt.f32.partialorder %v1163, 0.0
        %vm1607 = vcmp.gt.f32.partialorder %v1165, 0.0
        %vm1608 = vcmp.gt.f32.partialorder %v1167, 0.0
        %vm1609 = vcmp.gt.f32.partialorder %v1169, 0.0
        %vm1610 = vcmp.gt.f32.partialorder %v1171, 0.0
        %vm1611 = vcmp.gt.f32.partialorder %v1173, 0.0
        %vm1612 = vcmp.gt.f32.partialorder %v1175, 0.0
        %vm1613 = vcmp.gt.f32.partialorder %v1177, 0.0
        %vm1614 = vcmp.gt.f32.partialorder %v1179, 0.0
        %vm1615 = vcmp.gt.f32.partialorder %v1181, 0.0
        %vm1616 = vcmp.gt.f32.partialorder %v1183, 0.0
        %vm1617 = vcmp.gt.f32.partialorder %v1185, 0.0
        %vm1618 = vcmp.gt.f32.partialorder %v1187, 0.0
        %vm1619 = vcmp.gt.f32.partialorder %v1189, 0.0
        %vm1620 = vcmp.gt.f32.partialorder %v1191, 0.0
        %vm1621 = vcmp.gt.f32.partialorder %v1193, 0.0
        %vm1622 = vcmp.gt.f32.partialorder %v1195, 0.0
        %vm1623 = vcmp.gt.f32.partialorder %v1197, 0.0
        %vm1624 = vcmp.gt.f32.partialorder %v1199, 0.0
        %vm1625 = vcmp.gt.f32.partialorder %v1201, 0.0
        %vm1626 = vcmp.gt.f32.partialorder %v1203, 0.0
        %vm1627 = vcmp.gt.f32.partialorder %v1205, 0.0
        %vm1628 = vcmp.gt.f32.partialorder %v1207, 0.0
        %vm1629 = vcmp.gt.f32.partialorder %v1209, 0.0
        %vm1630 = vcmp.gt.f32.partialorder %v1211, 0.0
        %vm1631 = vcmp.gt.f32.partialorder %v1213, 0.0
        %vm1632 = vcmp.gt.f32.partialorder %v1215, 0.0
        %vm1633 = vcmp.gt.f32.partialorder %v1217, 0.0
        %vm1634 = vcmp.gt.f32.partialorder %v1219, 0.0
        %vm1635 = vcmp.gt.f32.partialorder %v1221, 0.0
        %vm1636 = vcmp.gt.f32.partialorder %v1223, 0.0
        %vm1637 = vcmp.gt.f32.partialorder %v1225, 0.0
        %vm1638 = vcmp.gt.f32.partialorder %v1227, 0.0
        %vm1639 = vcmp.gt.f32.partialorder %v1229, 0.0
        %vm1640 = vcmp.gt.f32.partialorder %v1231, 0.0
        %vm1641 = vcmp.gt.f32.partialorder %v1233, 0.0
        %vm1642 = vcmp.gt.f32.partialorder %v1235, 0.0
        %vm1643 = vcmp.gt.f32.partialorder %v1237, 0.0
        %vm1644 = vcmp.gt.f32.partialorder %v1239, 0.0
        %vm1645 = vcmp.gt.f32.partialorder %v1241, 0.0
        %vm1646 = vcmp.gt.f32.partialorder %v1243, 0.0
        %vm1647 = vcmp.gt.f32.partialorder %v1245, 0.0
        %vm1648 = vcmp.gt.f32.partialorder %v1247, 0.0
        %vm1649 = vcmp.gt.f32.partialorder %v1249, 0.0
        %vm1650 = vcmp.gt.f32.partialorder %v1251, 0.0
        %vm1651 = vcmp.gt.f32.partialorder %v1253, 0.0
        %vm1652 = vcmp.gt.f32.partialorder %v1255, 0.0
        %vm1653 = vcmp.gt.f32.partialorder %v1257, 0.0
        %vm1654 = vcmp.gt.f32.partialorder %v1259, 0.0
        %vm1655 = vcmp.gt.f32.partialorder %v1261, 0.0
        %vm1656 = vcmp.gt.f32.partialorder %v1263, 0.0
        %vm1657 = vcmp.gt.f32.partialorder %v1265, 0.0
        %vm1658 = vcmp.gt.f32.partialorder %v1267, 0.0
        %vm1659 = vcmp.gt.f32.partialorder %v1269, 0.0
        %vm1660 = vcmp.gt.f32.partialorder %v1271, 0.0
        %vm1661 = vcmp.gt.f32.partialorder %v1273, 0.0
        %vm1662 = vcmp.gt.f32.partialorder %v1275, 0.0
        %vm1663 = vcmp.gt.f32.partialorder %v1277, 0.0
        %vm1664 = vcmp.gt.f32.partialorder %v1279, 0.0
        %vm1665 = vcmp.gt.f32.partialorder %v1281, 0.0
        %vm1666 = vcmp.gt.f32.partialorder %v1283, 0.0
        %vm1667 = vcmp.gt.f32.partialorder %v1285, 0.0
        %vm1668 = vcmp.gt.f32.partialorder %v1287, 0.0
        %vm1669 = vcmp.gt.f32.partialorder %v1289, 0.0
        %vm1670 = vcmp.gt.f32.partialorder %v1291, 0.0
        %vm1671 = vcmp.gt.f32.partialorder %v1293, 0.0
        %vm1672 = vcmp.gt.f32.partialorder %v1295, 0.0
        %vm1673 = vcmp.gt.f32.partialorder %v1297, 0.0
        %vm1674 = vcmp.gt.f32.partialorder %v1299, 0.0
        %vm1675 = vcmp.gt.f32.partialorder %v1301, 0.0
        %vm1676 = vcmp.gt.f32.partialorder %v1303, 0.0
        %vm1677 = vcmp.gt.f32.partialorder %v1305, 0.0
        %vm1678 = vcmp.gt.f32.partialorder %v1307, 0.0
        %vm1679 = vcmp.gt.f32.partialorder %v1309, 0.0
        %vm1680 = vcmp.gt.f32.partialorder %v1311, 0.0
        %vm1681 = vcmp.gt.f32.partialorder %v1313, 0.0
        %vm1682 = vcmp.gt.f32.partialorder %v1315, 0.0
        %vm1683 = vcmp.gt.f32.partialorder %v1317, 0.0
        %vm1684 = vcmp.gt.f32.partialorder %v1319, 0.0
        %vm1685 = vcmp.gt.f32.partialorder %v1321, 0.0
        %vm1686 = vcmp.gt.f32.partialorder %v1323, 0.0
        %vm1687 = vcmp.gt.f32.partialorder %v1325, 0.0
        %vm1688 = vcmp.gt.f32.partialorder %v1327, 0.0
        %vm1689 = vcmp.gt.f32.partialorder %v1329, 0.0
        %vm1690 = vcmp.gt.f32.partialorder %v1331, 0.0
        %vm1691 = vcmp.gt.f32.partialorder %v1333, 0.0
        %vm1692 = vcmp.gt.f32.partialorder %v1335, 0.0
        %vm1693 = vcmp.gt.f32.partialorder %v1337, 0.0
        %vm1694 = vcmp.gt.f32.partialorder %v1339, 0.0
        %vm1695 = vcmp.gt.f32.partialorder %v1341, 0.0
        %vm1696 = vcmp.gt.f32.partialorder %v1343, 0.0
        %vm1697 = vcmp.gt.f32.partialorder %v1345, 0.0
        %vm1698 = vcmp.gt.f32.partialorder %v1347, 0.0
        %vm1699 = vcmp.gt.f32.partialorder %v1349, 0.0
        %vm1700 = vcmp.gt.f32.partialorder %v1351, 0.0
        %vm1701 = vcmp.gt.f32.partialorder %v1353, 0.0
        %vm1702 = vcmp.gt.f32.partialorder %v1355, 0.0
        %vm1703 = vcmp.gt.f32.partialorder %v1357, 0.0
        %vm1704 = vcmp.gt.f32.partialorder %v1359, 0.0
        %vm1705 = vcmp.gt.f32.partialorder %v1361, 0.0
        %vm1706 = vcmp.gt.f32.partialorder %v1363, 0.0
        %vm1707 = vcmp.gt.f32.partialorder %v1365, 0.0
        %vm1708 = vcmp.gt.f32.partialorder %v1367, 0.0
        %vm1709 = vcmp.gt.f32.partialorder %v1369, 0.0
        %vm1710 = vcmp.gt.f32.partialorder %v1371, 0.0
        %vm1711 = vcmp.gt.f32.partialorder %v1373, 0.0
        %vm1712 = vcmp.gt.f32.partialorder %v1375, 0.0
        %vm1713 = vcmp.gt.f32.partialorder %v1377, 0.0
        %vm1714 = vcmp.gt.f32.partialorder %v1379, 0.0
        %vm1715 = vcmp.gt.f32.partialorder %v1381, 0.0
        %vm1716 = vcmp.gt.f32.partialorder %v1383, 0.0
        %vm1717 = vcmp.gt.f32.partialorder %v1385, 0.0
        %vm1718 = vcmp.gt.f32.partialorder %v1387, 0.0
        %vm1719 = vcmp.gt.f32.partialorder %v1389, 0.0
        %vm1720 = vcmp.gt.f32.partialorder %v1391, 0.0
        %vm1721 = vcmp.gt.f32.partialorder %v1393, 0.0
        %vm1722 = vcmp.gt.f32.partialorder %v1395, 0.0
        %vm1723 = vcmp.gt.f32.partialorder %v1397, 0.0
        %vm1724 = vcmp.gt.f32.partialorder %v1399, 0.0
        %vm1725 = vcmp.gt.f32.partialorder %v1401, 0.0
        %vm1726 = vcmp.gt.f32.partialorder %v1403, 0.0
        %vm1727 = vcmp.gt.f32.partialorder %v1405, 0.0
        %vm1728 = vcmp.gt.f32.partialorder %v1407, 0.0
        %vm1729 = vcmp.gt.f32.partialorder %v1409, 0.0
        %vm1730 = vcmp.gt.f32.partialorder %v1411, 0.0
        %vm1731 = vcmp.gt.f32.partialorder %v1413, 0.0
        %vm1732 = vcmp.gt.f32.partialorder %v1415, 0.0
        %vm1733 = vcmp.gt.f32.partialorder %v1417, 0.0
        %vm1734 = vcmp.gt.f32.partialorder %v1419, 0.0
        %vm1735 = vcmp.gt.f32.partialorder %v1421, 0.0
        %vm1736 = vcmp.gt.f32.partialorder %v1423, 0.0
        %vm1737 = vcmp.gt.f32.partialorder %v1425, 0.0
        %vm1738 = vcmp.gt.f32.partialorder %v1427, 0.0
        %vm1739 = vcmp.gt.f32.partialorder %v1429, 0.0
        %vm1740 = vcmp.gt.f32.partialorder %v1431, 0.0
        %vm1741 = vcmp.gt.f32.partialorder %v1433, 0.0
        %vm1742 = vcmp.gt.f32.partialorder %v1435, 0.0
        %vm1743 = vcmp.gt.f32.partialorder %v1437, 0.0
        %vm1744 = vcmp.gt.f32.partialorder %v1439, 0.0
        %vm1745 = vcmp.gt.f32.partialorder %v1441, 0.0
        %vm1746 = vcmp.gt.f32.partialorder %v1443, 0.0
        %vm1747 = vcmp.gt.f32.partialorder %v1445, 0.0
        %vm1748 = vcmp.gt.f32.partialorder %v1447, 0.0
        %vm1749 = vcmp.gt.f32.partialorder %v1449, 0.0
        %vm1750 = vcmp.gt.f32.partialorder %v1451, 0.0
        %vm1751 = vcmp.gt.f32.partialorder %v1453, 0.0
        %vm1752 = vcmp.gt.f32.partialorder %v1455, 0.0
        %vm1753 = vcmp.gt.f32.partialorder %v1457, 0.0
        %vm1754 = vcmp.gt.f32.partialorder %v1459, 0.0
        %vm1755 = vcmp.gt.f32.partialorder %v1461, 0.0
        %vm1756 = vcmp.gt.f32.partialorder %v1463, 0.0
        %vm1757 = vcmp.gt.f32.partialorder %v1465, 0.0
        %vm1758 = vcmp.gt.f32.partialorder %v1467, 0.0
        %vm1759 = vcmp.gt.f32.partialorder %v1469, 0.0
        %vm1760 = vcmp.gt.f32.partialorder %v1471, 0.0
        %vm1761 = vcmp.gt.f32.partialorder %v1473, 0.0
        %vm1762 = vcmp.gt.f32.partialorder %v1475, 0.0
        %vm1763 = vcmp.gt.f32.partialorder %v1477, 0.0
        %vm1764 = vcmp.gt.f32.partialorder %v1479, 0.0
        %vm1765 = vcmp.gt.f32.partialorder %v1481, 0.0
        %vm1766 = vcmp.gt.f32.partialorder %v1483, 0.0
        %vm1767 = vcmp.gt.f32.partialorder %v1485, 0.0
        %vm1768 = vcmp.gt.f32.partialorder %v1487, 0.0
        %vm1769 = vcmp.gt.f32.partialorder %v1489, 0.0
        %vm1770 = vcmp.gt.f32.partialorder %v1491, 0.0
        %vm1771 = vcmp.gt.f32.partialorder %v1493, 0.0
        %vm1772 = vcmp.gt.f32.partialorder %v1495, 0.0
        %vm1773 = vcmp.gt.f32.partialorder %v1497, 0.0
        %vm1774 = vcmp.gt.f32.partialorder %v1499, 0.0
        %vm1775 = vcmp.gt.f32.partialorder %v1501, 0.0
        %vm1776 = vcmp.gt.f32.partialorder %v1503, 0.0
        %vm1777 = vcmp.gt.f32.partialorder %v1505, 0.0
        %vm1778 = vcmp.gt.f32.partialorder %v1507, 0.0
        %vm1779 = vcmp.gt.f32.partialorder %v1509, 0.0
        %vm1780 = vcmp.gt.f32.partialorder %v1511, 0.0
        %vm1781 = vcmp.gt.f32.partialorder %v1513, 0.0
        %vm1782 = vcmp.gt.f32.partialorder %v1515, 0.0
        %vm1783 = vcmp.gt.f32.partialorder %v1517, 0.0
        %vm1784 = vcmp.gt.f32.partialorder %v1519, 0.0
        %vm1785 = vcmp.gt.f32.partialorder %v1521, 0.0
        %vm1786 = vcmp.gt.f32.partialorder %v1523, 0.0
        %vm1787 = vcmp.gt.f32.partialorder %v1525, 0.0
        %vm1788 = vcmp.gt.f32.partialorder %v1527, 0.0
        %vm1789 = vcmp.gt.f32.partialorder %v1529, 0.0
        %vm1790 = vcmp.gt.f32.partialorder %v1531, 0.0
        %vm1791 = vcmp.gt.f32.partialorder %v1533, 0.0
        %vm1792 = vcmp.gt.f32.partialorder %v1535, 0.0
        %vm1793 = vcmp.gt.f32.partialorder %v1537, 0.0
        %v1794 = vsel %vm1538, 1, 0
        %v1795 = vsel %vm1539, 1, 0
        %v1796 = vsel %vm1540, 1, 0
        %v1797 = vsel %vm1541, 1, 0
        %v1798 = vsel %vm1542, 1, 0
        %v1799 = vsel %vm1543, 1, 0
        %v1800 = vsel %vm1544, 1, 0
        %v1801 = vsel %vm1545, 1, 0
        %v1802 = vsel %vm1546, 1, 0
        %v1803 = vsel %vm1547, 1, 0
        %v1804 = vsel %vm1548, 1, 0
        %v1805 = vsel %vm1549, 1, 0
        %v1806 = vsel %vm1550, 1, 0
        %v1807 = vsel %vm1551, 1, 0
        %v1808 = vsel %vm1552, 1, 0
        %v1809 = vsel %vm1553, 1, 0
        %v1810 = vsel %vm1554, 1, 0
        %v1811 = vsel %vm1555, 1, 0
        %v1812 = vsel %vm1556, 1, 0
        %v1813 = vsel %vm1557, 1, 0
        %v1814 = vsel %vm1558, 1, 0
        %v1815 = vsel %vm1559, 1, 0
        %v1816 = vsel %vm1560, 1, 0
        %v1817 = vsel %vm1561, 1, 0
        %v1818 = vsel %vm1562, 1, 0
        %v1819 = vsel %vm1563, 1, 0
        %v1820 = vsel %vm1564, 1, 0
        %v1821 = vsel %vm1565, 1, 0
        %v1822 = vsel %vm1566, 1, 0
        %v1823 = vsel %vm1567, 1, 0
        %v1824 = vsel %vm1568, 1, 0
        %v1825 = vsel %vm1569, 1, 0
        %v1826 = vsel %vm1570, 1, 0
        %v1827 = vsel %vm1571, 1, 0
        %v1828 = vsel %vm1572, 1, 0
        %v1829 = vsel %vm1573, 1, 0
        %v1830 = vsel %vm1574, 1, 0
        %v1831 = vsel %vm1575, 1, 0
        %v1832 = vsel %vm1576, 1, 0
        %v1833 = vsel %vm1577, 1, 0
        %v1834 = vsel %vm1578, 1, 0
        %v1835 = vsel %vm1579, 1, 0
        %v1836 = vsel %vm1580, 1, 0
        %v1837 = vsel %vm1581, 1, 0
        %v1838 = vsel %vm1582, 1, 0
        %v1839 = vsel %vm1583, 1, 0
        %v1840 = vsel %vm1584, 1, 0
        %v1841 = vsel %vm1585, 1, 0
        %v1842 = vsel %vm1586, 1, 0
        %v1843 = vsel %vm1587, 1, 0
        %v1844 = vsel %vm1588, 1, 0
        %v1845 = vsel %vm1589, 1, 0
        %v1846 = vsel %vm1590, 1, 0
        %v1847 = vsel %vm1591, 1, 0
        %v1848 = vsel %vm1592, 1, 0
        %v1849 = vsel %vm1593, 1, 0
        %v1850 = vsel %vm1594, 1, 0
        %v1851 = vsel %vm1595, 1, 0
        %v1852 = vsel %vm1596, 1, 0
        %v1853 = vsel %vm1597, 1, 0
        %v1854 = vsel %vm1598, 1, 0
        %v1855 = vsel %vm1599, 1, 0
        %v1856 = vsel %vm1600, 1, 0
        %v1857 = vsel %vm1601, 1, 0
        %v1858 = vsel %vm1602, 1, 0
        %v1859 = vsel %vm1603, 1, 0
        %v1860 = vsel %vm1604, 1, 0
        %v1861 = vsel %vm1605, 1, 0
        %v1862 = vsel %vm1606, 1, 0
        %v1863 = vsel %vm1607, 1, 0
        %v1864 = vsel %vm1608, 1, 0
        %v1865 = vsel %vm1609, 1, 0
        %v1866 = vsel %vm1610, 1, 0
        %v1867 = vsel %vm1611, 1, 0
        %v1868 = vsel %vm1612, 1, 0
        %v1869 = vsel %vm1613, 1, 0
        %v1870 = vsel %vm1614, 1, 0
        %v1871 = vsel %vm1615, 1, 0
        %v1872 = vsel %vm1616, 1, 0
        %v1873 = vsel %vm1617, 1, 0
        %v1874 = vsel %vm1618, 1, 0
        %v1875 = vsel %vm1619, 1, 0
        %v1876 = vsel %vm1620, 1, 0
        %v1877 = vsel %vm1621, 1, 0
        %v1878 = vsel %vm1622, 1, 0
        %v1879 = vsel %vm1623, 1, 0
        %v1880 = vsel %vm1624, 1, 0
        %v1881 = vsel %vm1625, 1, 0
        %v1882 = vsel %vm1626, 1, 0
        %v1883 = vsel %vm1627, 1, 0
        %v1884 = vsel %vm1628, 1, 0
        %v1885 = vsel %vm1629, 1, 0
        %v1886 = vsel %vm1630, 1, 0
        %v1887 = vsel %vm1631, 1, 0
        %v1888 = vsel %vm1632, 1, 0
        %v1889 = vsel %vm1633, 1, 0
        %v1890 = vsel %vm1634, 1, 0
        %v1891 = vsel %vm1635, 1, 0
        %v1892 = vsel %vm1636, 1, 0
        %v1893 = vsel %vm1637, 1, 0
        %v1894 = vsel %vm1638, 1, 0
        %v1895 = vsel %vm1639, 1, 0
        %v1896 = vsel %vm1640, 1, 0
        %v1897 = vsel %vm1641, 1, 0
        %v1898 = vsel %vm1642, 1, 0
        %v1899 = vsel %vm1643, 1, 0
        %v1900 = vsel %vm1644, 1, 0
        %v1901 = vsel %vm1645, 1, 0
        %v1902 = vsel %vm1646, 1, 0
        %v1903 = vsel %vm1647, 1, 0
        %v1904 = vsel %vm1648, 1, 0
        %v1905 = vsel %vm1649, 1, 0
        %v1906 = vsel %vm1650, 1, 0
        %v1907 = vsel %vm1651, 1, 0
        %v1908 = vsel %vm1652, 1, 0
        %v1909 = vsel %vm1653, 1, 0
        %v1910 = vsel %vm1654, 1, 0
        %v1911 = vsel %vm1655, 1, 0
        %v1912 = vsel %vm1656, 1, 0
        %v1913 = vsel %vm1657, 1, 0
        %v1914 = vsel %vm1658, 1, 0
        %v1915 = vsel %vm1659, 1, 0
        %v1916 = vsel %vm1660, 1, 0
        %v1917 = vsel %vm1661, 1, 0
        %v1918 = vsel %vm1662, 1, 0
        %v1919 = vsel %vm1663, 1, 0
        %v1920 = vsel %vm1664, 1, 0
        %v1921 = vsel %vm1665, 1, 0
        %v1922 = vsel %vm1666, 1, 0
        %v1923 = vsel %vm1667, 1, 0
        %v1924 = vsel %vm1668, 1, 0
        %v1925 = vsel %vm1669, 1, 0
        %v1926 = vsel %vm1670, 1, 0
        %v1927 = vsel %vm1671, 1, 0
        %v1928 = vsel %vm1672, 1, 0
        %v1929 = vsel %vm1673, 1, 0
        %v1930 = vsel %vm1674, 1, 0
        %v1931 = vsel %vm1675, 1, 0
        %v1932 = vsel %vm1676, 1, 0
        %v1933 = vsel %vm1677, 1, 0
        %v1934 = vsel %vm1678, 1, 0
        %v1935 = vsel %vm1679, 1, 0
        %v1936 = vsel %vm1680, 1, 0
        %v1937 = vsel %vm1681, 1, 0
        %v1938 = vsel %vm1682, 1, 0
        %v1939 = vsel %vm1683, 1, 0
        %v1940 = vsel %vm1684, 1, 0
        %v1941 = vsel %vm1685, 1, 0
        %v1942 = vsel %vm1686, 1, 0
        %v1943 = vsel %vm1687, 1, 0
        %v1944 = vsel %vm1688, 1, 0
        %v1945 = vsel %vm1689, 1, 0
        %v1946 = vsel %vm1690, 1, 0
        %v1947 = vsel %vm1691, 1, 0
        %v1948 = vsel %vm1692, 1, 0
        %v1949 = vsel %vm1693, 1, 0
        %v1950 = vsel %vm1694, 1, 0
        %v1951 = vsel %vm1695, 1, 0
        %v1952 = vsel %vm1696, 1, 0
        %v1953 = vsel %vm1697, 1, 0
        %v1954 = vsel %vm1698, 1, 0
        %v1955 = vsel %vm1699, 1, 0
        %v1956 = vsel %vm1700, 1, 0
        %v1957 = vsel %vm1701, 1, 0
        %v1958 = vsel %vm1702, 1, 0
        %v1959 = vsel %vm1703, 1, 0
        %v1960 = vsel %vm1704, 1, 0
        %v1961 = vsel %vm1705, 1, 0
        %v1962 = vsel %vm1706, 1, 0
        %v1963 = vsel %vm1707, 1, 0
        %v1964 = vsel %vm1708, 1, 0
        %v1965 = vsel %vm1709, 1, 0
        %v1966 = vsel %vm1710, 1, 0
        %v1967 = vsel %vm1711, 1, 0
        %v1968 = vsel %vm1712, 1, 0
        %v1969 = vsel %vm1713, 1, 0
        %v1970 = vsel %vm1714, 1, 0
        %v1971 = vsel %vm1715, 1, 0
        %v1972 = vsel %vm1716, 1, 0
        %v1973 = vsel %vm1717, 1, 0
        %v1974 = vsel %vm1718, 1, 0
        %v1975 = vsel %vm1719, 1, 0
        %v1976 = vsel %vm1720, 1, 0
        %v1977 = vsel %vm1721, 1, 0
        %v1978 = vsel %vm1722, 1, 0
        %v1979 = vsel %vm1723, 1, 0
        %v1980 = vsel %vm1724, 1, 0
        %v1981 = vsel %vm1725, 1, 0
        %v1982 = vsel %vm1726, 1, 0
        %v1983 = vsel %vm1727, 1, 0
        %v1984 = vsel %vm1728, 1, 0
        %v1985 = vsel %vm1729, 1, 0
        %v1986 = vsel %vm1730, 1, 0
        %v1987 = vsel %vm1731, 1, 0
        %v1988 = vsel %vm1732, 1, 0
        %v1989 = vsel %vm1733, 1, 0
        %v1990 = vsel %vm1734, 1, 0
        %v1991 = vsel %vm1735, 1, 0
        %v1992 = vsel %vm1736, 1, 0
        %v1993 = vsel %vm1737, 1, 0
        %v1994 = vsel %vm1738, 1, 0
        %v1995 = vsel %vm1739, 1, 0
        %v1996 = vsel %vm1740, 1, 0
        %v1997 = vsel %vm1741, 1, 0
        %v1998 = vsel %vm1742, 1, 0
        %v1999 = vsel %vm1743, 1, 0
        %v2000 = vsel %vm1744, 1, 0
        %v2001 = vsel %vm1745, 1, 0
        %v2002 = vsel %vm1746, 1, 0
        %v2003 = vsel %vm1747, 1, 0
        %v2004 = vsel %vm1748, 1, 0
        %v2005 = vsel %vm1749, 1, 0
        %v2006 = vsel %vm1750, 1, 0
        %v2007 = vsel %vm1751, 1, 0
        %v2008 = vsel %vm1752, 1, 0
        %v2009 = vsel %vm1753, 1, 0
        %v2010 = vsel %vm1754, 1, 0
        %v2011 = vsel %vm1755, 1, 0
        %v2012 = vsel %vm1756, 1, 0
        %v2013 = vsel %vm1757, 1, 0
        %v2014 = vsel %vm1758, 1, 0
        %v2015 = vsel %vm1759, 1, 0
        %v2016 = vsel %vm1760, 1, 0
        %v2017 = vsel %vm1761, 1, 0
        %v2018 = vsel %vm1762, 1, 0
        %v2019 = vsel %vm1763, 1, 0
        %v2020 = vsel %vm1764, 1, 0
        %v2021 = vsel %vm1765, 1, 0
        %v2022 = vsel %vm1766, 1, 0
        %v2023 = vsel %vm1767, 1, 0
        %v2024 = vsel %vm1768, 1, 0
        %v2025 = vsel %vm1769, 1, 0
        %v2026 = vsel %vm1770, 1, 0
        %v2027 = vsel %vm1771, 1, 0
        %v2028 = vsel %vm1772, 1, 0
        %v2029 = vsel %vm1773, 1, 0
        %v2030 = vsel %vm1774, 1, 0
        %v2031 = vsel %vm1775, 1, 0
        %v2032 = vsel %vm1776, 1, 0
        %v2033 = vsel %vm1777, 1, 0
        %v2034 = vsel %vm1778, 1, 0
        %v2035 = vsel %vm1779, 1, 0
        %v2036 = vsel %vm1780, 1, 0
        %v2037 = vsel %vm1781, 1, 0
        %v2038 = vsel %vm1782, 1, 0
        %v2039 = vsel %vm1783, 1, 0
        %v2040 = vsel %vm1784, 1, 0
        %v2041 = vsel %vm1785, 1, 0
        %v2042 = vsel %vm1786, 1, 0
        %v2043 = vsel %vm1787, 1, 0
        %v2044 = vsel %vm1788, 1, 0
        %v2045 = vsel %vm1789, 1, 0
        %v2046 = vsel %vm1790, 1, 0
        %v2047 = vsel %vm1791, 1, 0
        %v2048 = vsel %vm1792, 1, 0
        %v2049 = vsel %vm1793, 1, 0
        %vm2050 = vcmp.eq.s32.totalorder %v1794, 1
        %vm2051 = vcmp.eq.s32.totalorder %v1795, 1
        %vm2052 = vcmp.eq.s32.totalorder %v1796, 1
        %vm2053 = vcmp.eq.s32.totalorder %v1797, 1
        %vm2054 = vcmp.eq.s32.totalorder %v1798, 1
        %vm2055 = vcmp.eq.s32.totalorder %v1799, 1
        %vm2056 = vcmp.eq.s32.totalorder %v1800, 1
        %vm2057 = vcmp.eq.s32.totalorder %v1801, 1
        %vm2058 = vcmp.eq.s32.totalorder %v1802, 1
        %vm2059 = vcmp.eq.s32.totalorder %v1803, 1
        %vm2060 = vcmp.eq.s32.totalorder %v1804, 1
        %vm2061 = vcmp.eq.s32.totalorder %v1805, 1
        %vm2062 = vcmp.eq.s32.totalorder %v1806, 1
        %vm2063 = vcmp.eq.s32.totalorder %v1807, 1
        %vm2064 = vcmp.eq.s32.totalorder %v1808, 1
        %vm2065 = vcmp.eq.s32.totalorder %v1809, 1
        %vm2066 = vcmp.eq.s32.totalorder %v1810, 1
        %vm2067 = vcmp.eq.s32.totalorder %v1811, 1
        %vm2068 = vcmp.eq.s32.totalorder %v1812, 1
        %vm2069 = vcmp.eq.s32.totalorder %v1813, 1
        %vm2070 = vcmp.eq.s32.totalorder %v1814, 1
        %vm2071 = vcmp.eq.s32.totalorder %v1815, 1
        %vm2072 = vcmp.eq.s32.totalorder %v1816, 1
        %vm2073 = vcmp.eq.s32.totalorder %v1817, 1
        %vm2074 = vcmp.eq.s32.totalorder %v1818, 1
        %vm2075 = vcmp.eq.s32.totalorder %v1819, 1
        %vm2076 = vcmp.eq.s32.totalorder %v1820, 1
        %vm2077 = vcmp.eq.s32.totalorder %v1821, 1
        %vm2078 = vcmp.eq.s32.totalorder %v1822, 1
        %vm2079 = vcmp.eq.s32.totalorder %v1823, 1
        %vm2080 = vcmp.eq.s32.totalorder %v1824, 1
        %vm2081 = vcmp.eq.s32.totalorder %v1825, 1
        %vm2082 = vcmp.eq.s32.totalorder %v1826, 1
        %vm2083 = vcmp.eq.s32.totalorder %v1827, 1
        %vm2084 = vcmp.eq.s32.totalorder %v1828, 1
        %vm2085 = vcmp.eq.s32.totalorder %v1829, 1
        %vm2086 = vcmp.eq.s32.totalorder %v1830, 1
        %vm2087 = vcmp.eq.s32.totalorder %v1831, 1
        %vm2088 = vcmp.eq.s32.totalorder %v1832, 1
        %vm2089 = vcmp.eq.s32.totalorder %v1833, 1
        %vm2090 = vcmp.eq.s32.totalorder %v1834, 1
        %vm2091 = vcmp.eq.s32.totalorder %v1835, 1
        %vm2092 = vcmp.eq.s32.totalorder %v1836, 1
        %vm2093 = vcmp.eq.s32.totalorder %v1837, 1
        %vm2094 = vcmp.eq.s32.totalorder %v1838, 1
        %vm2095 = vcmp.eq.s32.totalorder %v1839, 1
        %vm2096 = vcmp.eq.s32.totalorder %v1840, 1
        %vm2097 = vcmp.eq.s32.totalorder %v1841, 1
        %vm2098 = vcmp.eq.s32.totalorder %v1842, 1
        %vm2099 = vcmp.eq.s32.totalorder %v1843, 1
        %vm2100 = vcmp.eq.s32.totalorder %v1844, 1
        %vm2101 = vcmp.eq.s32.totalorder %v1845, 1
        %vm2102 = vcmp.eq.s32.totalorder %v1846, 1
        %vm2103 = vcmp.eq.s32.totalorder %v1847, 1
        %vm2104 = vcmp.eq.s32.totalorder %v1848, 1
        %vm2105 = vcmp.eq.s32.totalorder %v1849, 1
        %vm2106 = vcmp.eq.s32.totalorder %v1850, 1
        %vm2107 = vcmp.eq.s32.totalorder %v1851, 1
        %vm2108 = vcmp.eq.s32.totalorder %v1852, 1
        %vm2109 = vcmp.eq.s32.totalorder %v1853, 1
        %vm2110 = vcmp.eq.s32.totalorder %v1854, 1
        %vm2111 = vcmp.eq.s32.totalorder %v1855, 1
        %vm2112 = vcmp.eq.s32.totalorder %v1856, 1
        %vm2113 = vcmp.eq.s32.totalorder %v1857, 1
        %vm2114 = vcmp.eq.s32.totalorder %v1858, 1
        %vm2115 = vcmp.eq.s32.totalorder %v1859, 1
        %vm2116 = vcmp.eq.s32.totalorder %v1860, 1
        %vm2117 = vcmp.eq.s32.totalorder %v1861, 1
        %vm2118 = vcmp.eq.s32.totalorder %v1862, 1
        %vm2119 = vcmp.eq.s32.totalorder %v1863, 1
        %vm2120 = vcmp.eq.s32.totalorder %v1864, 1
        %vm2121 = vcmp.eq.s32.totalorder %v1865, 1
        %vm2122 = vcmp.eq.s32.totalorder %v1866, 1
        %vm2123 = vcmp.eq.s32.totalorder %v1867, 1
        %vm2124 = vcmp.eq.s32.totalorder %v1868, 1
        %vm2125 = vcmp.eq.s32.totalorder %v1869, 1
        %vm2126 = vcmp.eq.s32.totalorder %v1870, 1
        %vm2127 = vcmp.eq.s32.totalorder %v1871, 1
        %vm2128 = vcmp.eq.s32.totalorder %v1872, 1
        %vm2129 = vcmp.eq.s32.totalorder %v1873, 1
        %vm2130 = vcmp.eq.s32.totalorder %v1874, 1
        %vm2131 = vcmp.eq.s32.totalorder %v1875, 1
        %vm2132 = vcmp.eq.s32.totalorder %v1876, 1
        %vm2133 = vcmp.eq.s32.totalorder %v1877, 1
        %vm2134 = vcmp.eq.s32.totalorder %v1878, 1
        %vm2135 = vcmp.eq.s32.totalorder %v1879, 1
        %vm2136 = vcmp.eq.s32.totalorder %v1880, 1
        %vm2137 = vcmp.eq.s32.totalorder %v1881, 1
        %vm2138 = vcmp.eq.s32.totalorder %v1882, 1
        %vm2139 = vcmp.eq.s32.totalorder %v1883, 1
        %vm2140 = vcmp.eq.s32.totalorder %v1884, 1
        %vm2141 = vcmp.eq.s32.totalorder %v1885, 1
        %vm2142 = vcmp.eq.s32.totalorder %v1886, 1
        %vm2143 = vcmp.eq.s32.totalorder %v1887, 1
        %vm2144 = vcmp.eq.s32.totalorder %v1888, 1
        %vm2145 = vcmp.eq.s32.totalorder %v1889, 1
        %vm2146 = vcmp.eq.s32.totalorder %v1890, 1
        %vm2147 = vcmp.eq.s32.totalorder %v1891, 1
        %vm2148 = vcmp.eq.s32.totalorder %v1892, 1
        %vm2149 = vcmp.eq.s32.totalorder %v1893, 1
        %vm2150 = vcmp.eq.s32.totalorder %v1894, 1
        %vm2151 = vcmp.eq.s32.totalorder %v1895, 1
        %vm2152 = vcmp.eq.s32.totalorder %v1896, 1
        %vm2153 = vcmp.eq.s32.totalorder %v1897, 1
        %vm2154 = vcmp.eq.s32.totalorder %v1898, 1
        %vm2155 = vcmp.eq.s32.totalorder %v1899, 1
        %vm2156 = vcmp.eq.s32.totalorder %v1900, 1
        %vm2157 = vcmp.eq.s32.totalorder %v1901, 1
        %vm2158 = vcmp.eq.s32.totalorder %v1902, 1
        %vm2159 = vcmp.eq.s32.totalorder %v1903, 1
        %vm2160 = vcmp.eq.s32.totalorder %v1904, 1
        %vm2161 = vcmp.eq.s32.totalorder %v1905, 1
        %vm2162 = vcmp.eq.s32.totalorder %v1906, 1
        %vm2163 = vcmp.eq.s32.totalorder %v1907, 1
        %vm2164 = vcmp.eq.s32.totalorder %v1908, 1
        %vm2165 = vcmp.eq.s32.totalorder %v1909, 1
        %vm2166 = vcmp.eq.s32.totalorder %v1910, 1
        %vm2167 = vcmp.eq.s32.totalorder %v1911, 1
        %vm2168 = vcmp.eq.s32.totalorder %v1912, 1
        %vm2169 = vcmp.eq.s32.totalorder %v1913, 1
        %vm2170 = vcmp.eq.s32.totalorder %v1914, 1
        %vm2171 = vcmp.eq.s32.totalorder %v1915, 1
        %vm2172 = vcmp.eq.s32.totalorder %v1916, 1
        %vm2173 = vcmp.eq.s32.totalorder %v1917, 1
        %vm2174 = vcmp.eq.s32.totalorder %v1918, 1
        %vm2175 = vcmp.eq.s32.totalorder %v1919, 1
        %vm2176 = vcmp.eq.s32.totalorder %v1920, 1
        %vm2177 = vcmp.eq.s32.totalorder %v1921, 1
        %vm2178 = vcmp.eq.s32.totalorder %v1922, 1
        %vm2179 = vcmp.eq.s32.totalorder %v1923, 1
        %vm2180 = vcmp.eq.s32.totalorder %v1924, 1
        %vm2181 = vcmp.eq.s32.totalorder %v1925, 1
        %vm2182 = vcmp.eq.s32.totalorder %v1926, 1
        %vm2183 = vcmp.eq.s32.totalorder %v1927, 1
        %vm2184 = vcmp.eq.s32.totalorder %v1928, 1
        %vm2185 = vcmp.eq.s32.totalorder %v1929, 1
        %vm2186 = vcmp.eq.s32.totalorder %v1930, 1
        %vm2187 = vcmp.eq.s32.totalorder %v1931, 1
        %vm2188 = vcmp.eq.s32.totalorder %v1932, 1
        %vm2189 = vcmp.eq.s32.totalorder %v1933, 1
        %vm2190 = vcmp.eq.s32.totalorder %v1934, 1
        %vm2191 = vcmp.eq.s32.totalorder %v1935, 1
        %vm2192 = vcmp.eq.s32.totalorder %v1936, 1
        %vm2193 = vcmp.eq.s32.totalorder %v1937, 1
        %vm2194 = vcmp.eq.s32.totalorder %v1938, 1
        %vm2195 = vcmp.eq.s32.totalorder %v1939, 1
        %vm2196 = vcmp.eq.s32.totalorder %v1940, 1
        %vm2197 = vcmp.eq.s32.totalorder %v1941, 1
        %vm2198 = vcmp.eq.s32.totalorder %v1942, 1
        %vm2199 = vcmp.eq.s32.totalorder %v1943, 1
        %vm2200 = vcmp.eq.s32.totalorder %v1944, 1
        %vm2201 = vcmp.eq.s32.totalorder %v1945, 1
        %vm2202 = vcmp.eq.s32.totalorder %v1946, 1
        %vm2203 = vcmp.eq.s32.totalorder %v1947, 1
        %vm2204 = vcmp.eq.s32.totalorder %v1948, 1
        %vm2205 = vcmp.eq.s32.totalorder %v1949, 1
        %vm2206 = vcmp.eq.s32.totalorder %v1950, 1
        %vm2207 = vcmp.eq.s32.totalorder %v1951, 1
        %vm2208 = vcmp.eq.s32.totalorder %v1952, 1
        %vm2209 = vcmp.eq.s32.totalorder %v1953, 1
        %vm2210 = vcmp.eq.s32.totalorder %v1954, 1
        %vm2211 = vcmp.eq.s32.totalorder %v1955, 1
        %vm2212 = vcmp.eq.s32.totalorder %v1956, 1
        %vm2213 = vcmp.eq.s32.totalorder %v1957, 1
        %vm2214 = vcmp.eq.s32.totalorder %v1958, 1
        %vm2215 = vcmp.eq.s32.totalorder %v1959, 1
        %vm2216 = vcmp.eq.s32.totalorder %v1960, 1
        %vm2217 = vcmp.eq.s32.totalorder %v1961, 1
        %vm2218 = vcmp.eq.s32.totalorder %v1962, 1
        %vm2219 = vcmp.eq.s32.totalorder %v1963, 1
        %vm2220 = vcmp.eq.s32.totalorder %v1964, 1
        %vm2221 = vcmp.eq.s32.totalorder %v1965, 1
        %vm2222 = vcmp.eq.s32.totalorder %v1966, 1
        %vm2223 = vcmp.eq.s32.totalorder %v1967, 1
        %vm2224 = vcmp.eq.s32.totalorder %v1968, 1
        %vm2225 = vcmp.eq.s32.totalorder %v1969, 1
        %vm2226 = vcmp.eq.s32.totalorder %v1970, 1
        %vm2227 = vcmp.eq.s32.totalorder %v1971, 1
        %vm2228 = vcmp.eq.s32.totalorder %v1972, 1
        %vm2229 = vcmp.eq.s32.totalorder %v1973, 1
        %vm2230 = vcmp.eq.s32.totalorder %v1974, 1
        %vm2231 = vcmp.eq.s32.totalorder %v1975, 1
        %vm2232 = vcmp.eq.s32.totalorder %v1976, 1
        %vm2233 = vcmp.eq.s32.totalorder %v1977, 1
        %vm2234 = vcmp.eq.s32.totalorder %v1978, 1
        %vm2235 = vcmp.eq.s32.totalorder %v1979, 1
        %vm2236 = vcmp.eq.s32.totalorder %v1980, 1
        %vm2237 = vcmp.eq.s32.totalorder %v1981, 1
        %vm2238 = vcmp.eq.s32.totalorder %v1982, 1
        %vm2239 = vcmp.eq.s32.totalorder %v1983, 1
        %vm2240 = vcmp.eq.s32.totalorder %v1984, 1
        %vm2241 = vcmp.eq.s32.totalorder %v1985, 1
        %vm2242 = vcmp.eq.s32.totalorder %v1986, 1
        %vm2243 = vcmp.eq.s32.totalorder %v1987, 1
        %vm2244 = vcmp.eq.s32.totalorder %v1988, 1
        %vm2245 = vcmp.eq.s32.totalorder %v1989, 1
        %vm2246 = vcmp.eq.s32.totalorder %v1990, 1
        %vm2247 = vcmp.eq.s32.totalorder %v1991, 1
        %vm2248 = vcmp.eq.s32.totalorder %v1992, 1
        %vm2249 = vcmp.eq.s32.totalorder %v1993, 1
        %vm2250 = vcmp.eq.s32.totalorder %v1994, 1
        %vm2251 = vcmp.eq.s32.totalorder %v1995, 1
        %vm2252 = vcmp.eq.s32.totalorder %v1996, 1
        %vm2253 = vcmp.eq.s32.totalorder %v1997, 1
        %vm2254 = vcmp.eq.s32.totalorder %v1998, 1
        %vm2255 = vcmp.eq.s32.totalorder %v1999, 1
        %vm2256 = vcmp.eq.s32.totalorder %v2000, 1
        %vm2257 = vcmp.eq.s32.totalorder %v2001, 1
        %vm2258 = vcmp.eq.s32.totalorder %v2002, 1
        %vm2259 = vcmp.eq.s32.totalorder %v2003, 1
        %vm2260 = vcmp.eq.s32.totalorder %v2004, 1
        %vm2261 = vcmp.eq.s32.totalorder %v2005, 1
        %vm2262 = vcmp.eq.s32.totalorder %v2006, 1
        %vm2263 = vcmp.eq.s32.totalorder %v2007, 1
        %vm2264 = vcmp.eq.s32.totalorder %v2008, 1
        %vm2265 = vcmp.eq.s32.totalorder %v2009, 1
        %vm2266 = vcmp.eq.s32.totalorder %v2010, 1
        %vm2267 = vcmp.eq.s32.totalorder %v2011, 1
        %vm2268 = vcmp.eq.s32.totalorder %v2012, 1
        %vm2269 = vcmp.eq.s32.totalorder %v2013, 1
        %vm2270 = vcmp.eq.s32.totalorder %v2014, 1
        %vm2271 = vcmp.eq.s32.totalorder %v2015, 1
        %vm2272 = vcmp.eq.s32.totalorder %v2016, 1
        %vm2273 = vcmp.eq.s32.totalorder %v2017, 1
        %vm2274 = vcmp.eq.s32.totalorder %v2018, 1
        %vm2275 = vcmp.eq.s32.totalorder %v2019, 1
        %vm2276 = vcmp.eq.s32.totalorder %v2020, 1
        %vm2277 = vcmp.eq.s32.totalorder %v2021, 1
        %vm2278 = vcmp.eq.s32.totalorder %v2022, 1
        %vm2279 = vcmp.eq.s32.totalorder %v2023, 1
        %vm2280 = vcmp.eq.s32.totalorder %v2024, 1
        %vm2281 = vcmp.eq.s32.totalorder %v2025, 1
        %vm2282 = vcmp.eq.s32.totalorder %v2026, 1
        %vm2283 = vcmp.eq.s32.totalorder %v2027, 1
        %vm2284 = vcmp.eq.s32.totalorder %v2028, 1
        %vm2285 = vcmp.eq.s32.totalorder %v2029, 1
        %vm2286 = vcmp.eq.s32.totalorder %v2030, 1
        %vm2287 = vcmp.eq.s32.totalorder %v2031, 1
        %vm2288 = vcmp.eq.s32.totalorder %v2032, 1
        %vm2289 = vcmp.eq.s32.totalorder %v2033, 1
        %vm2290 = vcmp.eq.s32.totalorder %v2034, 1
        %vm2291 = vcmp.eq.s32.totalorder %v2035, 1
        %vm2292 = vcmp.eq.s32.totalorder %v2036, 1
        %vm2293 = vcmp.eq.s32.totalorder %v2037, 1
        %vm2294 = vcmp.eq.s32.totalorder %v2038, 1
        %vm2295 = vcmp.eq.s32.totalorder %v2039, 1
        %vm2296 = vcmp.eq.s32.totalorder %v2040, 1
        %vm2297 = vcmp.eq.s32.totalorder %v2041, 1
        %vm2298 = vcmp.eq.s32.totalorder %v2042, 1
        %vm2299 = vcmp.eq.s32.totalorder %v2043, 1
        %vm2300 = vcmp.eq.s32.totalorder %v2044, 1
        %vm2301 = vcmp.eq.s32.totalorder %v2045, 1
        %vm2302 = vcmp.eq.s32.totalorder %v2046, 1
        %vm2303 = vcmp.eq.s32.totalorder %v2047, 1
        %vm2304 = vcmp.eq.s32.totalorder %v2048, 1
        %vm2305 = vcmp.eq.s32.totalorder %v2049, 1
        %v2306 = vsel %vm2050, %v258, -inf
        %v2307 = vsel %vm2051, %v259, -inf
        %v2308 = vsel %vm2052, %v260, -inf
        %v2309 = vsel %vm2053, %v261, -inf
        %v2310 = vsel %vm2054, %v262, -inf
        %v2311 = vsel %vm2055, %v263, -inf
        %v2312 = vsel %vm2056, %v264, -inf
        %v2313 = vsel %vm2057, %v265, -inf
        %v2314 = vsel %vm2058, %v266, -inf
        %v2315 = vsel %vm2059, %v267, -inf
        %v2316 = vsel %vm2060, %v268, -inf
        %v2317 = vsel %vm2061, %v269, -inf
        %v2318 = vsel %vm2062, %v270, -inf
        %v2319 = vsel %vm2063, %v271, -inf
        %v2320 = vsel %vm2064, %v272, -inf
        %v2321 = vsel %vm2065, %v273, -inf
        %v2322 = vsel %vm2066, %v274, -inf
        %v2323 = vsel %vm2067, %v275, -inf
        %v2324 = vsel %vm2068, %v276, -inf
        %v2325 = vsel %vm2069, %v277, -inf
        %v2326 = vsel %vm2070, %v278, -inf
        %v2327 = vsel %vm2071, %v279, -inf
        %v2328 = vsel %vm2072, %v280, -inf
        %v2329 = vsel %vm2073, %v281, -inf
        %v2330 = vsel %vm2074, %v282, -inf
        %v2331 = vsel %vm2075, %v283, -inf
        %v2332 = vsel %vm2076, %v284, -inf
        %v2333 = vsel %vm2077, %v285, -inf
        %v2334 = vsel %vm2078, %v286, -inf
        %v2335 = vsel %vm2079, %v287, -inf
        %v2336 = vsel %vm2080, %v288, -inf
        %v2337 = vsel %vm2081, %v289, -inf
        %v2338 = vsel %vm2082, %v290, -inf
        %v2339 = vsel %vm2083, %v291, -inf
        %v2340 = vsel %vm2084, %v292, -inf
        %v2341 = vsel %vm2085, %v293, -inf
        %v2342 = vsel %vm2086, %v294, -inf
        %v2343 = vsel %vm2087, %v295, -inf
        %v2344 = vsel %vm2088, %v296, -inf
        %v2345 = vsel %vm2089, %v297, -inf
        %v2346 = vsel %vm2090, %v298, -inf
        %v2347 = vsel %vm2091, %v299, -inf
        %v2348 = vsel %vm2092, %v300, -inf
        %v2349 = vsel %vm2093, %v301, -inf
        %v2350 = vsel %vm2094, %v302, -inf
        %v2351 = vsel %vm2095, %v303, -inf
        %v2352 = vsel %vm2096, %v304, -inf
        %v2353 = vsel %vm2097, %v305, -inf
        %v2354 = vsel %vm2098, %v306, -inf
        %v2355 = vsel %vm2099, %v307, -inf
        %v2356 = vsel %vm2100, %v308, -inf
        %v2357 = vsel %vm2101, %v309, -inf
        %v2358 = vsel %vm2102, %v310, -inf
        %v2359 = vsel %vm2103, %v311, -inf
        %v2360 = vsel %vm2104, %v312, -inf
        %v2361 = vsel %vm2105, %v313, -inf
        %v2362 = vsel %vm2106, %v314, -inf
        %v2363 = vsel %vm2107, %v315, -inf
        %v2364 = vsel %vm2108, %v316, -inf
        %v2365 = vsel %vm2109, %v317, -inf
        %v2366 = vsel %vm2110, %v318, -inf
        %v2367 = vsel %vm2111, %v319, -inf
        %v2368 = vsel %vm2112, %v320, -inf
        %v2369 = vsel %vm2113, %v321, -inf
        %v2370 = vsel %vm2114, %v322, -inf
        %v2371 = vsel %vm2115, %v323, -inf
        %v2372 = vsel %vm2116, %v324, -inf
        %v2373 = vsel %vm2117, %v325, -inf
        %v2374 = vsel %vm2118, %v326, -inf
        %v2375 = vsel %vm2119, %v327, -inf
        %v2376 = vsel %vm2120, %v328, -inf
        %v2377 = vsel %vm2121, %v329, -inf
        %v2378 = vsel %vm2122, %v330, -inf
        %v2379 = vsel %vm2123, %v331, -inf
        %v2380 = vsel %vm2124, %v332, -inf
        %v2381 = vsel %vm2125, %v333, -inf
        %v2382 = vsel %vm2126, %v334, -inf
        %v2383 = vsel %vm2127, %v335, -inf
        %v2384 = vsel %vm2128, %v336, -inf
        %v2385 = vsel %vm2129, %v337, -inf
        %v2386 = vsel %vm2130, %v338, -inf
        %v2387 = vsel %vm2131, %v339, -inf
        %v2388 = vsel %vm2132, %v340, -inf
        %v2389 = vsel %vm2133, %v341, -inf
        %v2390 = vsel %vm2134, %v342, -inf
        %v2391 = vsel %vm2135, %v343, -inf
        %v2392 = vsel %vm2136, %v344, -inf
        %v2393 = vsel %vm2137, %v345, -inf
        %v2394 = vsel %vm2138, %v346, -inf
        %v2395 = vsel %vm2139, %v347, -inf
        %v2396 = vsel %vm2140, %v348, -inf
        %v2397 = vsel %vm2141, %v349, -inf
        %v2398 = vsel %vm2142, %v350, -inf
        %v2399 = vsel %vm2143, %v351, -inf
        %v2400 = vsel %vm2144, %v352, -inf
        %v2401 = vsel %vm2145, %v353, -inf
        %v2402 = vsel %vm2146, %v354, -inf
        %v2403 = vsel %vm2147, %v355, -inf
        %v2404 = vsel %vm2148, %v356, -inf
        %v2405 = vsel %vm2149, %v357, -inf
        %v2406 = vsel %vm2150, %v358, -inf
        %v2407 = vsel %vm2151, %v359, -inf
        %v2408 = vsel %vm2152, %v360, -inf
        %v2409 = vsel %vm2153, %v361, -inf
        %v2410 = vsel %vm2154, %v362, -inf
        %v2411 = vsel %vm2155, %v363, -inf
        %v2412 = vsel %vm2156, %v364, -inf
        %v2413 = vsel %vm2157, %v365, -inf
        %v2414 = vsel %vm2158, %v366, -inf
        %v2415 = vsel %vm2159, %v367, -inf
        %v2416 = vsel %vm2160, %v368, -inf
        %v2417 = vsel %vm2161, %v369, -inf
        %v2418 = vsel %vm2162, %v370, -inf
        %v2419 = vsel %vm2163, %v371, -inf
        %v2420 = vsel %vm2164, %v372, -inf
        %v2421 = vsel %vm2165, %v373, -inf
        %v2422 = vsel %vm2166, %v374, -inf
        %v2423 = vsel %vm2167, %v375, -inf
        %v2424 = vsel %vm2168, %v376, -inf
        %v2425 = vsel %vm2169, %v377, -inf
        %v2426 = vsel %vm2170, %v378, -inf
        %v2427 = vsel %vm2171, %v379, -inf
        %v2428 = vsel %vm2172, %v380, -inf
        %v2429 = vsel %vm2173, %v381, -inf
        %v2430 = vsel %vm2174, %v382, -inf
        %v2431 = vsel %vm2175, %v383, -inf
        %v2432 = vsel %vm2176, %v384, -inf
        %v2433 = vsel %vm2177, %v385, -inf
        %v2434 = vsel %vm2178, %v386, -inf
        %v2435 = vsel %vm2179, %v387, -inf
        %v2436 = vsel %vm2180, %v388, -inf
        %v2437 = vsel %vm2181, %v389, -inf
        %v2438 = vsel %vm2182, %v390, -inf
        %v2439 = vsel %vm2183, %v391, -inf
        %v2440 = vsel %vm2184, %v392, -inf
        %v2441 = vsel %vm2185, %v393, -inf
        %v2442 = vsel %vm2186, %v394, -inf
        %v2443 = vsel %vm2187, %v395, -inf
        %v2444 = vsel %vm2188, %v396, -inf
        %v2445 = vsel %vm2189, %v397, -inf
        %v2446 = vsel %vm2190, %v398, -inf
        %v2447 = vsel %vm2191, %v399, -inf
        %v2448 = vsel %vm2192, %v400, -inf
        %v2449 = vsel %vm2193, %v401, -inf
        %v2450 = vsel %vm2194, %v402, -inf
        %v2451 = vsel %vm2195, %v403, -inf
        %v2452 = vsel %vm2196, %v404, -inf
        %v2453 = vsel %vm2197, %v405, -inf
        %v2454 = vsel %vm2198, %v406, -inf
        %v2455 = vsel %vm2199, %v407, -inf
        %v2456 = vsel %vm2200, %v408, -inf
        %v2457 = vsel %vm2201, %v409, -inf
        %v2458 = vsel %vm2202, %v410, -inf
        %v2459 = vsel %vm2203, %v411, -inf
        %v2460 = vsel %vm2204, %v412, -inf
        %v2461 = vsel %vm2205, %v413, -inf
        %v2462 = vsel %vm2206, %v414, -inf
        %v2463 = vsel %vm2207, %v415, -inf
        %v2464 = vsel %vm2208, %v416, -inf
        %v2465 = vsel %vm2209, %v417, -inf
        %v2466 = vsel %vm2210, %v418, -inf
        %v2467 = vsel %vm2211, %v419, -inf
        %v2468 = vsel %vm2212, %v420, -inf
        %v2469 = vsel %vm2213, %v421, -inf
        %v2470 = vsel %vm2214, %v422, -inf
        %v2471 = vsel %vm2215, %v423, -inf
        %v2472 = vsel %vm2216, %v424, -inf
        %v2473 = vsel %vm2217, %v425, -inf
        %v2474 = vsel %vm2218, %v426, -inf
        %v2475 = vsel %vm2219, %v427, -inf
        %v2476 = vsel %vm2220, %v428, -inf
        %v2477 = vsel %vm2221, %v429, -inf
        %v2478 = vsel %vm2222, %v430, -inf
        %v2479 = vsel %vm2223, %v431, -inf
        %v2480 = vsel %vm2224, %v432, -inf
        %v2481 = vsel %vm2225, %v433, -inf
        %v2482 = vsel %vm2226, %v434, -inf
        %v2483 = vsel %vm2227, %v435, -inf
        %v2484 = vsel %vm2228, %v436, -inf
        %v2485 = vsel %vm2229, %v437, -inf
        %v2486 = vsel %vm2230, %v438, -inf
        %v2487 = vsel %vm2231, %v439, -inf
        %v2488 = vsel %vm2232, %v440, -inf
        %v2489 = vsel %vm2233, %v441, -inf
        %v2490 = vsel %vm2234, %v442, -inf
        %v2491 = vsel %vm2235, %v443, -inf
        %v2492 = vsel %vm2236, %v444, -inf
        %v2493 = vsel %vm2237, %v445, -inf
        %v2494 = vsel %vm2238, %v446, -inf
        %v2495 = vsel %vm2239, %v447, -inf
        %v2496 = vsel %vm2240, %v448, -inf
        %v2497 = vsel %vm2241, %v449, -inf
        %v2498 = vsel %vm2242, %v450, -inf
        %v2499 = vsel %vm2243, %v451, -inf
        %v2500 = vsel %vm2244, %v452, -inf
        %v2501 = vsel %vm2245, %v453, -inf
        %v2502 = vsel %vm2246, %v454, -inf
        %v2503 = vsel %vm2247, %v455, -inf
        %v2504 = vsel %vm2248, %v456, -inf
        %v2505 = vsel %vm2249, %v457, -inf
        %v2506 = vsel %vm2250, %v458, -inf
        %v2507 = vsel %vm2251, %v459, -inf
        %v2508 = vsel %vm2252, %v460, -inf
        %v2509 = vsel %vm2253, %v461, -inf
        %v2510 = vsel %vm2254, %v462, -inf
        %v2511 = vsel %vm2255, %v463, -inf
        %v2512 = vsel %vm2256, %v464, -inf
        %v2513 = vsel %vm2257, %v465, -inf
        %v2514 = vsel %vm2258, %v466, -inf
        %v2515 = vsel %vm2259, %v467, -inf
        %v2516 = vsel %vm2260, %v468, -inf
        %v2517 = vsel %vm2261, %v469, -inf
        %v2518 = vsel %vm2262, %v470, -inf
        %v2519 = vsel %vm2263, %v471, -inf
        %v2520 = vsel %vm2264, %v472, -inf
        %v2521 = vsel %vm2265, %v473, -inf
        %v2522 = vsel %vm2266, %v474, -inf
        %v2523 = vsel %vm2267, %v475, -inf
        %v2524 = vsel %vm2268, %v476, -inf
        %v2525 = vsel %vm2269, %v477, -inf
        %v2526 = vsel %vm2270, %v478, -inf
        %v2527 = vsel %vm2271, %v479, -inf
        %v2528 = vsel %vm2272, %v480, -inf
        %v2529 = vsel %vm2273, %v481, -inf
        %v2530 = vsel %vm2274, %v482, -inf
        %v2531 = vsel %vm2275, %v483, -inf
        %v2532 = vsel %vm2276, %v484, -inf
        %v2533 = vsel %vm2277, %v485, -inf
        %v2534 = vsel %vm2278, %v486, -inf
        %v2535 = vsel %vm2279, %v487, -inf
        %v2536 = vsel %vm2280, %v488, -inf
        %v2537 = vsel %vm2281, %v489, -inf
        %v2538 = vsel %vm2282, %v490, -inf
        %v2539 = vsel %vm2283, %v491, -inf
        %v2540 = vsel %vm2284, %v492, -inf
        %v2541 = vsel %vm2285, %v493, -inf
        %v2542 = vsel %vm2286, %v494, -inf
        %v2543 = vsel %vm2287, %v495, -inf
        %v2544 = vsel %vm2288, %v496, -inf
        %v2545 = vsel %vm2289, %v497, -inf
        %v2546 = vsel %vm2290, %v498, -inf
        %v2547 = vsel %vm2291, %v499, -inf
        %v2548 = vsel %vm2292, %v500, -inf
        %v2549 = vsel %vm2293, %v501, -inf
        %v2550 = vsel %vm2294, %v502, -inf
        %v2551 = vsel %vm2295, %v503, -inf
        %v2552 = vsel %vm2296, %v504, -inf
        %v2553 = vsel %vm2297, %v505, -inf
        %v2554 = vsel %vm2298, %v506, -inf
        %v2555 = vsel %vm2299, %v507, -inf
        %v2556 = vsel %vm2300, %v508, -inf
        %v2557 = vsel %vm2301, %v509, -inf
        %v2558 = vsel %vm2302, %v510, -inf
        %v2559 = vsel %vm2303, %v511, -inf
        %v2560 = vsel %vm2304, %v512, -inf
        %v2561 = vsel %vm2305, %v513, -inf
        %v2562 = vld [vmem:[#allocation2] sm:$0xff]
        %v2563 = vmax.f32 %v2306, %v2307
        %v2564 = vmax.f32 %v2563, %v2308
        %v2565 = vmax.f32 %v2564, %v2309
        %v2566 = vmax.f32 %v2565, %v2310
        %v2567 = vmax.f32 %v2566, %v2311
        %v2568 = vmax.f32 %v2567, %v2312
        %v2569 = vmax.f32 %v2568, %v2313
        %v2570 = vmax.f32 %v2569, %v2314
        %v2571 = vmax.f32 %v2570, %v2315
        %v2572 = vmax.f32 %v2571, %v2316
        %v2573 = vmax.f32 %v2572, %v2317
        %v2574 = vmax.f32 %v2573, %v2318
        %v2575 = vmax.f32 %v2574, %v2319
        %v2576 = vmax.f32 %v2575, %v2320
        %v2577 = vmax.f32 %v2576, %v2321
        %v2578 = vmax.f32 %v2577, %v2322
        %v2579 = vmax.f32 %v2578, %v2323
        %v2580 = vmax.f32 %v2579, %v2324
        %v2581 = vmax.f32 %v2580, %v2325
        %v2582 = vmax.f32 %v2581, %v2326
        %v2583 = vmax.f32 %v2582, %v2327
        %v2584 = vmax.f32 %v2583, %v2328
        %v2585 = vmax.f32 %v2584, %v2329
        %v2586 = vmax.f32 %v2585, %v2330
        %v2587 = vmax.f32 %v2586, %v2331
        %v2588 = vmax.f32 %v2587, %v2332
        %v2589 = vmax.f32 %v2588, %v2333
        %v2590 = vmax.f32 %v2589, %v2334
        %v2591 = vmax.f32 %v2590, %v2335
        %v2592 = vmax.f32 %v2591, %v2336
        %v2593 = vmax.f32 %v2592, %v2337
        %v2594 = vrot.slane %v2593, 4
        %v2595 = vmax.f32 %v2593, %v2594
        %v2596 = vrot.slane %v2595, 2
        %v2597 = vmax.f32 %v2595, %v2596
        %v2598 = vrot.slane %v2597, 1
        %v2599 = vmax.f32 %v2597, %v2598
        %v2600 = vmax.f32 %v2338, %v2339
        %v2601 = vmax.f32 %v2600, %v2340
        %v2602 = vmax.f32 %v2601, %v2341
        %v2603 = vmax.f32 %v2602, %v2342
        %v2604 = vmax.f32 %v2603, %v2343
        %v2605 = vmax.f32 %v2604, %v2344
        %v2606 = vmax.f32 %v2605, %v2345
        %v2607 = vmax.f32 %v2606, %v2346
        %v2608 = vmax.f32 %v2607, %v2347
        %v2609 = vmax.f32 %v2608, %v2348
        %v2610 = vmax.f32 %v2609, %v2349
        %v2611 = vmax.f32 %v2610, %v2350
        %v2612 = vmax.f32 %v2611, %v2351
        %v2613 = vmax.f32 %v2612, %v2352
        %v2614 = vmax.f32 %v2613, %v2353
        %v2615 = vmax.f32 %v2614, %v2354
        %v2616 = vmax.f32 %v2615, %v2355
        %v2617 = vmax.f32 %v2616, %v2356
        %v2618 = vmax.f32 %v2617, %v2357
        %v2619 = vmax.f32 %v2618, %v2358
        %v2620 = vmax.f32 %v2619, %v2359
        %v2621 = vmax.f32 %v2620, %v2360
        %v2622 = vmax.f32 %v2621, %v2361
        %v2623 = vmax.f32 %v2622, %v2362
        %v2624 = vmax.f32 %v2623, %v2363
        %v2625 = vmax.f32 %v2624, %v2364
        %v2626 = vmax.f32 %v2625, %v2365
        %v2627 = vmax.f32 %v2626, %v2366
        %v2628 = vmax.f32 %v2627, %v2367
        %v2629 = vmax.f32 %v2628, %v2368
        %v2630 = vmax.f32 %v2629, %v2369
        %v2631 = vrot.slane %v2630, 4
        %v2632 = vmax.f32 %v2630, %v2631
        %v2633 = vrot.slane %v2632, 2
        %v2634 = vmax.f32 %v2632, %v2633
        %v2635 = vrot.slane %v2634, 1
        %v2636 = vmax.f32 %v2634, %v2635
        %v2637 = vmax.f32 %v2370, %v2371
        %v2638 = vmax.f32 %v2637, %v2372
        %v2639 = vmax.f32 %v2638, %v2373
        %v2640 = vmax.f32 %v2639, %v2374
        %v2641 = vmax.f32 %v2640, %v2375
        %v2642 = vmax.f32 %v2641, %v2376
        %v2643 = vmax.f32 %v2642, %v2377
        %v2644 = vmax.f32 %v2643, %v2378
        %v2645 = vmax.f32 %v2644, %v2379
        %v2646 = vmax.f32 %v2645, %v2380
        %v2647 = vmax.f32 %v2646, %v2381
        %v2648 = vmax.f32 %v2647, %v2382
        %v2649 = vmax.f32 %v2648, %v2383
        %v2650 = vmax.f32 %v2649, %v2384
        %v2651 = vmax.f32 %v2650, %v2385
        %v2652 = vmax.f32 %v2651, %v2386
        %v2653 = vmax.f32 %v2652, %v2387
        %v2654 = vmax.f32 %v2653, %v2388
        %v2655 = vmax.f32 %v2654, %v2389
        %v2656 = vmax.f32 %v2655, %v2390
        %v2657 = vmax.f32 %v2656, %v2391
        %v2658 = vmax.f32 %v2657, %v2392
        %v2659 = vmax.f32 %v2658, %v2393
        %v2660 = vmax.f32 %v2659, %v2394
        %v2661 = vmax.f32 %v2660, %v2395
        %v2662 = vmax.f32 %v2661, %v2396
        %v2663 = vmax.f32 %v2662, %v2397
        %v2664 = vmax.f32 %v2663, %v2398
        %v2665 = vmax.f32 %v2664, %v2399
        %v2666 = vmax.f32 %v2665, %v2400
        %v2667 = vmax.f32 %v2666, %v2401
        %v2668 = vrot.slane %v2667, 4
        %v2669 = vmax.f32 %v2667, %v2668
        %v2670 = vrot.slane %v2669, 2
        %v2671 = vmax.f32 %v2669, %v2670
        %v2672 = vrot.slane %v2671, 1
        %v2673 = vmax.f32 %v2671, %v2672
        %v2674 = vmax.f32 %v2402, %v2403
        %v2675 = vmax.f32 %v2674, %v2404
        %v2676 = vmax.f32 %v2675, %v2405
        %v2677 = vmax.f32 %v2676, %v2406
        %v2678 = vmax.f32 %v2677, %v2407
        %v2679 = vmax.f32 %v2678, %v2408
        %v2680 = vmax.f32 %v2679, %v2409
        %v2681 = vmax.f32 %v2680, %v2410
        %v2682 = vmax.f32 %v2681, %v2411
        %v2683 = vmax.f32 %v2682, %v2412
        %v2684 = vmax.f32 %v2683, %v2413
        %v2685 = vmax.f32 %v2684, %v2414
        %v2686 = vmax.f32 %v2685, %v2415
        %v2687 = vmax.f32 %v2686, %v2416
        %v2688 = vmax.f32 %v2687, %v2417
        %v2689 = vmax.f32 %v2688, %v2418
        %v2690 = vmax.f32 %v2689, %v2419
        %v2691 = vmax.f32 %v2690, %v2420
        %v2692 = vmax.f32 %v2691, %v2421
        %v2693 = vmax.f32 %v2692, %v2422
        %v2694 = vmax.f32 %v2693, %v2423
        %v2695 = vmax.f32 %v2694, %v2424
        %v2696 = vmax.f32 %v2695, %v2425
        %v2697 = vmax.f32 %v2696, %v2426
        %v2698 = vmax.f32 %v2697, %v2427
        %v2699 = vmax.f32 %v2698, %v2428
        %v2700 = vmax.f32 %v2699, %v2429
        %v2701 = vmax.f32 %v2700, %v2430
        %v2702 = vmax.f32 %v2701, %v2431
        %v2703 = vmax.f32 %v2702, %v2432
        %v2704 = vmax.f32 %v2703, %v2433
        %v2705 = vrot.slane %v2704, 4
        %v2706 = vmax.f32 %v2704, %v2705
        %v2707 = vrot.slane %v2706, 2
        %v2708 = vmax.f32 %v2706, %v2707
        %v2709 = vrot.slane %v2708, 1
        %v2710 = vmax.f32 %v2708, %v2709
        %v2711 = vmax.f32 %v2434, %v2435
        %v2712 = vmax.f32 %v2711, %v2436
        %v2713 = vmax.f32 %v2712, %v2437
        %v2714 = vmax.f32 %v2713, %v2438
        %v2715 = vmax.f32 %v2714, %v2439
        %v2716 = vmax.f32 %v2715, %v2440
        %v2717 = vmax.f32 %v2716, %v2441
        %v2718 = vmax.f32 %v2717, %v2442
        %v2719 = vmax.f32 %v2718, %v2443
        %v2720 = vmax.f32 %v2719, %v2444
        %v2721 = vmax.f32 %v2720, %v2445
        %v2722 = vmax.f32 %v2721, %v2446
        %v2723 = vmax.f32 %v2722, %v2447
        %v2724 = vmax.f32 %v2723, %v2448
        %v2725 = vmax.f32 %v2724, %v2449
        %v2726 = vmax.f32 %v2725, %v2450
        %v2727 = vmax.f32 %v2726, %v2451
        %v2728 = vmax.f32 %v2727, %v2452
        %v2729 = vmax.f32 %v2728, %v2453
        %v2730 = vmax.f32 %v2729, %v2454
        %v2731 = vmax.f32 %v2730, %v2455
        %v2732 = vmax.f32 %v2731, %v2456
        %v2733 = vmax.f32 %v2732, %v2457
        %v2734 = vmax.f32 %v2733, %v2458
        %v2735 = vmax.f32 %v2734, %v2459
        %v2736 = vmax.f32 %v2735, %v2460
        %v2737 = vmax.f32 %v2736, %v2461
        %v2738 = vmax.f32 %v2737, %v2462
        %v2739 = vmax.f32 %v2738, %v2463
        %v2740 = vmax.f32 %v2739, %v2464
        %v2741 = vmax.f32 %v2740, %v2465
        %v2742 = vrot.slane %v2741, 4
        %v2743 = vmax.f32 %v2741, %v2742
        %v2744 = vrot.slane %v2743, 2
        %v2745 = vmax.f32 %v2743, %v2744
        %v2746 = vrot.slane %v2745, 1
        %v2747 = vmax.f32 %v2745, %v2746
        %v2748 = vmax.f32 %v2466, %v2467
        %v2749 = vmax.f32 %v2748, %v2468
        %v2750 = vmax.f32 %v2749, %v2469
        %v2751 = vmax.f32 %v2750, %v2470
        %v2752 = vmax.f32 %v2751, %v2471
        %v2753 = vmax.f32 %v2752, %v2472
        %v2754 = vmax.f32 %v2753, %v2473
        %v2755 = vmax.f32 %v2754, %v2474
        %v2756 = vmax.f32 %v2755, %v2475
        %v2757 = vmax.f32 %v2756, %v2476
        %v2758 = vmax.f32 %v2757, %v2477
        %v2759 = vmax.f32 %v2758, %v2478
        %v2760 = vmax.f32 %v2759, %v2479
        %v2761 = vmax.f32 %v2760, %v2480
        %v2762 = vmax.f32 %v2761, %v2481
        %v2763 = vmax.f32 %v2762, %v2482
        %v2764 = vmax.f32 %v2763, %v2483
        %v2765 = vmax.f32 %v2764, %v2484
        %v2766 = vmax.f32 %v2765, %v2485
        %v2767 = vmax.f32 %v2766, %v2486
        %v2768 = vmax.f32 %v2767, %v2487
        %v2769 = vmax.f32 %v2768, %v2488
        %v2770 = vmax.f32 %v2769, %v2489
        %v2771 = vmax.f32 %v2770, %v2490
        %v2772 = vmax.f32 %v2771, %v2491
        %v2773 = vmax.f32 %v2772, %v2492
        %v2774 = vmax.f32 %v2773, %v2493
        %v2775 = vmax.f32 %v2774, %v2494
        %v2776 = vmax.f32 %v2775, %v2495
        %v2777 = vmax.f32 %v2776, %v2496
        %v2778 = vmax.f32 %v2777, %v2497
        %v2779 = vrot.slane %v2778, 4
        %v2780 = vmax.f32 %v2778, %v2779
        %v2781 = vrot.slane %v2780, 2
        %v2782 = vmax.f32 %v2780, %v2781
        %v2783 = vrot.slane %v2782, 1
        %v2784 = vmax.f32 %v2782, %v2783
        %v2785 = vmax.f32 %v2498, %v2499
        %v2786 = vmax.f32 %v2785, %v2500
        %v2787 = vmax.f32 %v2786, %v2501
        %v2788 = vmax.f32 %v2787, %v2502
        %v2789 = vmax.f32 %v2788, %v2503
        %v2790 = vmax.f32 %v2789, %v2504
        %v2791 = vmax.f32 %v2790, %v2505
        %v2792 = vmax.f32 %v2791, %v2506
        %v2793 = vmax.f32 %v2792, %v2507
        %v2794 = vmax.f32 %v2793, %v2508
        %v2795 = vmax.f32 %v2794, %v2509
        %v2796 = vmax.f32 %v2795, %v2510
        %v2797 = vmax.f32 %v2796, %v2511
        %v2798 = vmax.f32 %v2797, %v2512
        %v2799 = vmax.f32 %v2798, %v2513
        %v2800 = vmax.f32 %v2799, %v2514
        %v2801 = vmax.f32 %v2800, %v2515
        %v2802 = vmax.f32 %v2801, %v2516
        %v2803 = vmax.f32 %v2802, %v2517
        %v2804 = vmax.f32 %v2803, %v2518
        %v2805 = vmax.f32 %v2804, %v2519
        %v2806 = vmax.f32 %v2805, %v2520
        %v2807 = vmax.f32 %v2806, %v2521
        %v2808 = vmax.f32 %v2807, %v2522
        %v2809 = vmax.f32 %v2808, %v2523
        %v2810 = vmax.f32 %v2809, %v2524
        %v2811 = vmax.f32 %v2810, %v2525
        %v2812 = vmax.f32 %v2811, %v2526
        %v2813 = vmax.f32 %v2812, %v2527
        %v2814 = vmax.f32 %v2813, %v2528
        %v2815 = vmax.f32 %v2814, %v2529
        %v2816 = vrot.slane %v2815, 4
        %v2817 = vmax.f32 %v2815, %v2816
        %v2818 = vrot.slane %v2817, 2
        %v2819 = vmax.f32 %v2817, %v2818
        %v2820 = vrot.slane %v2819, 1
        %v2821 = vmax.f32 %v2819, %v2820
        %v2822 = vmax.f32 %v2530, %v2531
        %v2823 = vmax.f32 %v2822, %v2532
        %v2824 = vmax.f32 %v2823, %v2533
        %v2825 = vmax.f32 %v2824, %v2534
        %v2826 = vmax.f32 %v2825, %v2535
        %v2827 = vmax.f32 %v2826, %v2536
        %v2828 = vmax.f32 %v2827, %v2537
        %v2829 = vmax.f32 %v2828, %v2538
        %v2830 = vmax.f32 %v2829, %v2539
        %v2831 = vmax.f32 %v2830, %v2540
        %v2832 = vmax.f32 %v2831, %v2541
        %v2833 = vmax.f32 %v2832, %v2542
        %v2834 = vmax.f32 %v2833, %v2543
        %v2835 = vmax.f32 %v2834, %v2544
        %v2836 = vmax.f32 %v2835, %v2545
        %v2837 = vmax.f32 %v2836, %v2546
        %v2838 = vmax.f32 %v2837, %v2547
        %v2839 = vmax.f32 %v2838, %v2548
        %v2840 = vmax.f32 %v2839, %v2549
        %v2841 = vmax.f32 %v2840, %v2550
        %v2842 = vmax.f32 %v2841, %v2551
        %v2843 = vmax.f32 %v2842, %v2552
        %v2844 = vmax.f32 %v2843, %v2553
        %v2845 = vmax.f32 %v2844, %v2554
        %v2846 = vmax.f32 %v2845, %v2555
        %v2847 = vmax.f32 %v2846, %v2556
        %v2848 = vmax.f32 %v2847, %v2557
        %v2849 = vmax.f32 %v2848, %v2558
        %v2850 = vmax.f32 %v2849, %v2559
        %v2851 = vmax.f32 %v2850, %v2560
        %v2852 = vmax.f32 %v2851, %v2561
        %v2853 = vrot.slane %v2852, 4
        %v2854 = vmax.f32 %v2852, %v2853
        %v2855 = vrot.slane %v2854, 2
        %v2856 = vmax.f32 %v2854, %v2855
        %v2857 = vrot.slane %v2856, 1
        %v2858 = vmax.f32 %v2856, %v2857
        %vm2867 = vcmask 1041409
        %v2868 = vsel %vm2867, %v2636, %v2599
        %vm2869 = vcmask 1042434
        %v2870 = vsel %vm2869, %v2673, %v2868
        %vm2871 = vcmask 1043459
        %v2872 = vsel %vm2871, %v2710, %v2870
        %vm2873 = vcmask 1044484
        %v2874 = vsel %vm2873, %v2747, %v2872
        %vm2875 = vcmask 1045509
        %v2876 = vsel %vm2875, %v2784, %v2874
        %vm2877 = vcmask 1046534
        %v2878 = vsel %vm2877, %v2821, %v2876
        %vm2879 = vcmask 1047559
        %v2880 = vsel %vm2879, %v2858, %v2878
        %v2882 = vmax.f32 %v2562, %v2880
        %2883 = vst [vmem:[#allocation2] sm:$0xff] %v2882
        %p2884 = scmp.eq.s32.totalorder %s24, 1
        // Predicated region
        $region49: #{tpu_custom_call.1} parent=31 // pred_check
          %p2885 = pneg %p2884
        $region50: #{tpu_custom_call.1} parent=31 // pred_check_branch
          %2887 = sbr.rel (%p2885) target = $region52
        $region51: #{tpu_custom_call.1} parent=31 // pred_region
          %v2888 = vld [vmem:[#allocation2] sm:$0xff]
          %v2889 = vlaneseq
          %v2890 = vand.u32 %v2889, 127
          %vm2891 = vcmp.lt.s32.totalorder %v2890, 2
          %v2892 = vsel %vm2891, %v2888, 0.0
          %v2893 = vld [vmem:[#allocation6] sm:$0xff]
          %v2894 = vld [vmem:[#allocation6 + $0x8] sm:$0xff]
          %v2895 = vld [vmem:[#allocation6 + $0x10] sm:$0xff]
          %v2896 = vld [vmem:[#allocation6 + $0x18] sm:$0xff]
          %v2897 = vld [vmem:[#allocation6 + $0x20] sm:$0xff]
          %v2898 = vld [vmem:[#allocation6 + $0x28] sm:$0xff]
          %v2899 = vld [vmem:[#allocation6 + $0x30] sm:$0xff]
          %v2900 = vld [vmem:[#allocation6 + $0x38] sm:$0xff]
          %v2901 = vld [vmem:[#allocation6 + $0x40] sm:$0xff]
          %v2902 = vld [vmem:[#allocation6 + $0x48] sm:$0xff]
          %v2903 = vld [vmem:[#allocation6 + $0x50] sm:$0xff]
          %v2904 = vld [vmem:[#allocation6 + $0x58] sm:$0xff]
          %v2905 = vld [vmem:[#allocation6 + $0x60] sm:$0xff]
          %v2906 = vld [vmem:[#allocation6 + $0x68] sm:$0xff]
          %v2907 = vld [vmem:[#allocation6 + $0x70] sm:$0xff]
          %v2908 = vld [vmem:[#allocation6 + $0x78] sm:$0xff]
          %v2909 = vld [vmem:[#allocation8] sm:$0x1]
          %v2911 = vlaneseq
          %v2912 = vshrl.u32 %v2911, 7
          %v2913 = vsub.s32 0, %v2912
          %v2914 = vrot.slane %v2909, %v2913
          %2916 = vmatprep.subr.mxu0 0.0
          %2917 = vmatpush1.msra.mxu0 %v2893
          %2918 = vmatprep.subr.mxu0 0.0
          %2919 = vmatpush1.msra.mxu0 %v2894
          %2920 = vmatprep.subr.mxu0 0.0
          %2921 = vmatpush1.msra.mxu0 %v2895
          %2922 = vmatprep.subr.mxu0 0.0
          %2923 = vmatpush1.msra.mxu0 %v2896
          %2924 = vmatprep.subr.mxu0 0.0
          %2925 = vmatpush1.msra.mxu0 %v2897
          %2926 = vmatprep.subr.mxu0 0.0
          %2927 = vmatpush1.msra.mxu0 %v2898
          %2928 = vmatprep.subr.mxu0 0.0
          %2929 = vmatpush1.msra.mxu0 %v2899
          %2930 = vmatprep.subr.mxu0 0.0
          %2931 = vmatpush1.msra.mxu0 %v2900
          %2932 = vmatprep.subr.mxu0 0.0
          %2933 = vmatpush1.msra.mxu0 %v2901
          %2934 = vmatprep.subr.mxu0 0.0
          %2935 = vmatpush1.msra.mxu0 %v2902
          %2936 = vmatprep.subr.mxu0 0.0
          %2937 = vmatpush1.msra.mxu0 %v2903
          %2938 = vmatprep.subr.mxu0 0.0
          %2939 = vmatpush1.msra.mxu0 %v2904
          %2940 = vmatprep.subr.mxu0 0.0
          %2941 = vmatpush1.msra.mxu0 %v2905
          %2942 = vmatprep.subr.mxu0 0.0
          %2943 = vmatpush1.msra.mxu0 %v2906
          %2944 = vmatprep.subr.mxu0 0.0
          %2945 = vmatpush1.msra.mxu0 %v2907
          %2946 = vmatprep.subr.mxu0 0.0
          %2947 = vmatpush1.msra.mxu0 %v2908
          %2948 = vmatprep.subr.mxu0 0.0
          %2949 = vmatpush1.msra.mxu0 0.0
          %2950 = vmatprep.subr.mxu0 0.0
          %2951 = vmatpush1.msra.mxu0 0.0
          %2952 = vmatprep.subr.mxu0 0.0
          %2953 = vmatpush1.msra.mxu0 0.0
          %2954 = vmatprep.subr.mxu0 0.0
          %2955 = vmatpush1.msra.mxu0 0.0
          %2956 = vmatprep.subr.mxu0 0.0
          %2957 = vmatpush1.msra.mxu0 0.0
          %2958 = vmatprep.subr.mxu0 0.0
          %2959 = vmatpush1.msra.mxu0 0.0
          %2960 = vmatprep.subr.mxu0 0.0
          %2961 = vmatpush1.msra.mxu0 0.0
          %2962 = vmatprep.subr.mxu0 0.0
          %2963 = vmatpush1.msra.mxu0 0.0
          %2964 = vmatprep.subr.mxu0 0.0
          %2965 = vmatpush1.msra.mxu0 0.0
          %2966 = vmatprep.subr.mxu0 0.0
          %2967 = vmatpush1.msra.mxu0 0.0
          %2968 = vmatprep.subr.mxu0 0.0
          %2969 = vmatpush1.msra.mxu0 0.0
          %2970 = vmatprep.subr.mxu0 0.0
          %2971 = vmatpush1.msra.mxu0 0.0
          %2972 = vmatprep.subr.mxu0 0.0
          %2973 = vmatpush1.msra.mxu0 0.0
          %2974 = vmatprep.subr.mxu0 0.0
          %2975 = vmatpush1.msra.mxu0 0.0
          %2976 = vmatprep.subr.mxu0 0.0
          %2977 = vmatpush1.msra.mxu0 0.0
          %2978 = vmatprep.subr.mxu0 0.0
          %2979 = vmatpush1.msra.mxu0 0.0
          %2980 = vmatprep.mubr.f32.mxu0 0.0
          %2981 = vmatmul.mubr.f32.gmra.mrb[0].mxu0 %v2892
          %v2982 = vpop.f32.mrb[0].mxu0
          %v2983 = vadd.f32 %v2914, %v2982
          %v2984 = vpop.f32.mrb[0].mxu0
          %2985 = vdwg.mxu0
          %2986 = vst [vmem:[#allocation9] sm:$0xff] %v2983
        $region52: #{tpu_custom_call.1} parent=31 // pred_fallthru
          _
        // Predicated region
        $region53: #{tpu_custom_call.1} parent=31 // pred_check
          %p2987 = pneg %p119
        $region54: #{tpu_custom_call.1} parent=31 // pred_check_branch
          %2989 = sbr.rel (%p2987) target = $region56
        $region55: #{tpu_custom_call.1} parent=31 // pred_region
          %s2991 = ssub.s32 128, 128
          %2992 = vsyncadd [#allocation5], %s2991
          %s2993 = smul.addr %s23, 128
          %s2994 = scalar_lea.hbm %s3, %s2993
          %s2996 = sshll.u32 [#allocation9], 4
          %s2997 = int_to_ptr.vmem [resolvable:$true] %s2996
          %2999 = dma.vmem_to_hbm [thread:$0]  %s2997, 128, %s2994, [#allocation5]
        $region56: #{tpu_custom_call.1} parent=31 // pred_fallthru
          _
        // Predicated region
        $region57: #{tpu_custom_call.1} parent=31 // pred_check
          %p3000 = pneg %p119
        $region58: #{tpu_custom_call.1} parent=31 // pred_check_branch
          %3002 = sbr.rel (%p3000) target = $region60
        $region59: #{tpu_custom_call.1} parent=31 // pred_region
          %3003 = dma.done [#allocation5], 128
        $region60: #{tpu_custom_call.1} parent=31 // pred_fallthru
          _
      $region32: #{tpu_custom_call.1} parent=5 // pred_fallthru
        _
      %p3004 = scmp.le.s32.totalorder 2, %s14
      // Predicated region
      $region61: #{tpu_custom_call.1} parent=5 // pred_check
        %p3005 = pneg %p3004
      $region62: #{tpu_custom_call.1} parent=5 // pred_check_branch
        %3007 = sbr.rel (%p3005) target = $region64
      $region63: #{tpu_custom_call.1} parent=5 // pred_region
        %s3008 = ssub.s32 %s14, 2
      $region64: #{tpu_custom_call.1} parent=5 // pred_fallthru
        _
    $region6: #{tpu_custom_call.1} parent=1 // loop_footer
      %s18 = sadd.s32 1, %s14
    $region7: #{tpu_custom_call.1} parent=1 // loop_footer_branch
      %13 = sbr.rel target = $region3
    $region8: #{tpu_custom_call.1} parent=1 // loop_exit
      _
    %3009 = vsyncpa [#allocation4], 1
    %s3010 = scalar_lea.sflag [#allocation4], 1
    %3011 = vsyncpa %s3010, 1
    %3012 = vsyncpa [#allocation7], 1
    %3013 = vsyncpa [#allocation5], 1
    %s3014 = scalar_lea.sflag [#allocation5], 1
    %3015 = vsyncpa %s3014, 1

</llo_original>
